<compile_context>
chip_gen: v6e
topology: v6e:2x2x1
jax: 0.10.0
libtpu: 0.0.40
codegen_flags: <defaults>
</compile_context>

<pallas_src>
import math
import functools

import jax
import jax.numpy as jnp
from jax.experimental import pallas as pl
from jax.experimental.pallas import tpu as pltpu

NEG_INF = -1e30  # additive mask value (avoids NaNs for fully-masked rows vs. float('-inf'))


def _round_up(x, m):
    return ((x + m - 1) // m) * m


# ----------------------------- tiled dense (matmul) with fused epilogues -----------------------------

def _dense_kernel(*refs, activation, log_softmax, has_residual):
    if has_residual:
        x_ref, w_ref, b_ref, r_ref, o_ref, acc_ref = refs
    else:
        x_ref, w_ref, b_ref, o_ref, acc_ref = refs
        r_ref = None
    k = pl.program_id(2)

    @pl.when(k == 0)
    def _():
        acc_ref[...] = jnp.zeros_like(acc_ref)

    acc_ref[...] += jnp.dot(x_ref[...], w_ref[...], preferred_element_type=jnp.float32)

    @pl.when(k == pl.num_programs(2) - 1)
    def _():
        y = acc_ref[...] + b_ref[...]
        if activation == "relu":
            y = jnp.maximum(y, 0.0)
        if r_ref is not None:
            y = y + r_ref[...]
        if log_softmax:
            m = jnp.max(y, axis=-1, keepdims=True)
            s = y - m
            y = s - jnp.log(jnp.sum(jnp.exp(s), axis=-1, keepdims=True))
        o_ref[...] = y


def pallas_dense(x2d, w, b, activation=None, residual=None, log_softmax=False):
    """y = x2d @ w + b with optional fused ReLU / residual-add / log_softmax epilogues.

    x2d: (M, K) f32, w: (K, N), b: (N,), residual: (M, N) or None. bf16 MXU operands, f32 accumulation.
    """
    M, K = x2d.shape
    N = w.shape[1]

    Np128 = _round_up(N, 128)
    fuse_lsm = log_softmax and Np128 <= 4096
    if log_softmax and not fuse_lsm:
        # vocab too large for single-tile fused softmax -> separate row-tiled log_softmax kernel
        y = pallas_dense(x2d, w, b, activation=activation, residual=residual)
        return pallas_log_softmax(y)

    # tile caps sized so bf16 double-buffered inputs + f32 acc stay well inside v7x's 64 MiB VMEM
    TM_MAX, TN_MAX, TK_MAX = 256, 512, 512

    Mp = _round_up(M, 8)
    tm = Mp if Mp <= TM_MAX else TM_MAX
    Mp = _round_up(Mp, tm)

    Kp = _round_up(K, 128)
    tk = Kp if Kp <= TK_MAX else TK_MAX
    Kp = _round_up(Kp, tk)

    if fuse_lsm:
        tn = Np = Np128                       # softmax reduction needs full N in one tile
    else:
        tn = Np128 if Np128 <= TN_MAX else TN_MAX
        Np = _round_up(Np128, tn)

    xp = jnp.pad(x2d.astype(jnp.bfloat16), ((0, Mp - M), (0, Kp - K)))
    wp = jnp.pad(w.astype(jnp.bfloat16), ((0, Kp - K), (0, Np - N)))
    # padded vocab columns get -inf bias so they vanish inside the fused log_softmax
    bp = jnp.pad(b.astype(jnp.float32), (0, Np - N),
                 constant_values=NEG_INF if fuse_lsm else 0.0).reshape(1, Np)

    in_specs = [
        pl.BlockSpec((tm, tk), lambda i, j, k: (i, k)),
        pl.BlockSpec((tk, tn), lambda i, j, k: (k, j)),
        pl.BlockSpec((1, tn), lambda i, j, k: (0, j)),
    ]
    args = [xp, wp, bp]
    has_residual = residual is not None
    if has_residual:
        rp = jnp.pad(residual.astype(jnp.float32), ((0, Mp - M), (0, Np - N)))
        in_specs.append(pl.BlockSpec((tm, tn), lambda i, j, k: (i, j)))
        args.append(rp)

    kern = functools.partial(_dense_kernel, activation=activation,
                             log_softmax=fuse_lsm, has_residual=has_residual)
    y = pl.pallas_call(
        kern,
        grid=(Mp // tm, Np // tn, Kp // tk),
        in_specs=in_specs,
        out_specs=pl.BlockSpec((tm, tn), lambda i, j, k: (i, j)),
        out_shape=jax.ShapeDtypeStruct((Mp, Np), jnp.float32),
        scratch_shapes=[pltpu.VMEM((tm, tn), jnp.float32)],
        compiler_params=pltpu.CompilerParams(
            dimension_semantics=("parallel", "parallel", "arbitrary")),
    )(*args)
    return y[:M, :N]


# ----------------------------- fused (residual +) LayerNorm -----------------------------

def _ln_kernel(*refs, has_residual, eps):
    if has_residual:
        x_ref, r_ref, g_ref, b_ref, o_ref = refs
    else:
        x_ref, g_ref, b_ref, o_ref = refs
        r_ref = None
    x = x_ref[...].astype(jnp.float32)
    if r_ref is not None:
        x = x + r_ref[...].astype(jnp.float32)
    mean = jnp.mean(x, axis=-1, keepdims=True)
    var = jnp.mean(jnp.square(x - mean), axis=-1, keepdims=True)
    o_ref[...] = (x - mean) * jax.lax.rsqrt(var + eps) * g_ref[...] + b_ref[...]


def pallas_layernorm(x, gamma, beta, residual=None, eps=1e-5):
    """LayerNorm over the last dim; if `residual` is given computes LN(x + residual) in one pass."""
    shp = x.shape
    D = shp[-1]
    x2 = x.reshape(-1, D).astype(jnp.float32)
    M = x2.shape[0]
    Mp = _round_up(M, 8)
    tm = Mp if Mp <= 1024 else 512
    Mp = _round_up(Mp, tm)

    x2p = jnp.pad(x2, ((0, Mp - M), (0, 0)))
    args = [x2p]
    in_specs = [pl.BlockSpec((tm, D), lambda i: (i, 0))]
    has_residual = residual is not None
    if has_residual:
        r2p = jnp.pad(residual.reshape(-1, D).astype(jnp.float32), ((0, Mp - M), (0, 0)))
        args.append(r2p)
        in_specs.append(pl.BlockSpec((tm, D), lambda i: (i, 0)))
    args += [gamma.reshape(1, D).astype(jnp.float32), beta.reshape(1, D).astype(jnp.float32)]
    in_specs += [pl.BlockSpec((1, D), lambda i: (0, 0)), pl.BlockSpec((1, D), lambda i: (0, 0))]

    kern = functools.partial(_ln_kernel, has_residual=has_residual, eps=eps)
    y = pl.pallas_call(
        kern,
        grid=(Mp // tm,),
        in_specs=in_specs,
        out_specs=pl.BlockSpec((tm, D), lambda i: (i, 0)),
        out_shape=jax.ShapeDtypeStruct((Mp, D), jnp.float32),
        compiler_params=pltpu.CompilerParams(dimension_semantics=("parallel",)),
    )(*args)
    return y[:M].reshape(shp)


# ----------------------------- standalone log_softmax (fallback for huge vocab) -----------------------------

def _lsm_kernel(x_ref, o_ref):
    x = x_ref[...]
    m = jnp.max(x, axis=-1, keepdims=True)
    s = x - m
    o_ref[...] = s - jnp.log(jnp.sum(jnp.exp(s), axis=-1, keepdims=True))


def pallas_log_softmax(x):
    shp = x.shape
    N = shp[-1]
    x2 = x.reshape(-1, N).astype(jnp.float32)
    M = x2.shape[0]
    Mp = _round_up(M, 8)
    tm = Mp if Mp <= 512 else 256
    Mp = _round_up(Mp, tm)
    x2p = jnp.pad(x2, ((0, Mp - M), (0, 0)))
    y = pl.pallas_call(
        _lsm_kernel,
        grid=(Mp // tm,),
        in_specs=[pl.BlockSpec((tm, N), lambda i: (i, 0))],
        out_specs=pl.BlockSpec((tm, N), lambda i: (i, 0)),
        out_shape=jax.ShapeDtypeStruct((Mp, N), jnp.float32),
        compiler_params=pltpu.CompilerParams(dimension_semantics=("parallel",)),
    )(x2p)
    return y[:M].reshape(shp)


# ----------------------------- attention (all heads per grid step, in-kernel masks) -----------------------------

def _attn_kernel(*refs, scale, causal, has_pad):
    if has_pad:
        q_ref, k_ref, v_ref, pad_ref, o_ref = refs
    else:
        q_ref, k_ref, v_ref, o_ref = refs
        pad_ref = None
    q = q_ref[...]                     # (H, Sq, dh) bf16
    k = k_ref[...]                     # (H, Sk, dh) bf16
    v = v_ref[...]                     # (H, Sk, dh) bf16

    # contract head dims directly (no explicit transpose); f32 accumulation on MXU
    s = jnp.einsum('hqd,hkd->hqk', q, k, preferred_element_type=jnp.float32) * scale
    H, Sq, Sk = s.shape

    if pad_ref is not None:
        s = s + pad_ref[...][None]     # (1, 1, Sk) additive key-padding bias
    if causal:
        row = jax.lax.broadcasted_iota(jnp.int32, (Sq, Sk), 0)
        col = jax.lax.broadcasted_iota(jnp.int32, (Sq, Sk), 1)
        s = jnp.where((col > row)[None], NEG_INF, s)

    m = jnp.max(s, axis=-1, keepdims=True)
    p = jnp.exp(s - m)
    l = jnp.sum(p, axis=-1, keepdims=True)
    o = jnp.einsum('hqk,hkd->hqd', p.astype(v.dtype), v, preferred_element_type=jnp.float32)
    o = o * pl.reciprocal(l, approx=True)                      # EUP reciprocal (free slot)
    dh = o.shape[-1]
    # merge heads -> lane-dense (Sq, H*dh) output slab
    o_ref[...] = jnp.concatenate([o[h] for h in range(H)], axis=-1)


def pallas_attention(q, k, v, pad_bias=None, causal=False):
    """q/k/v: (B, H, S, dh). pad_bias: optional (B, Sk) additive f32 bias (0 or NEG_INF).
    Returns (B, Sq, H*dh) with heads merged. One grid step per batch element (all heads batched).
    TODO(synk): switch to a flash-style online-softmax KV-tiled variant for long sequences."""
    B, H, Sq, dh = q.shape
    Sk = k.shape[2]
    D = H * dh
    has_pad = pad_bias is not None

    in_specs = [
        pl.BlockSpec((None, H, Sq, dh), lambda b: (b, 0, 0, 0)),
        pl.BlockSpec((None, H, Sk, dh), lambda b: (b, 0, 0, 0)),
        pl.BlockSpec((None, H, Sk, dh), lambda b: (b, 0, 0, 0)),
    ]
    args = [q.astype(jnp.bfloat16), k.astype(jnp.bfloat16), v.astype(jnp.bfloat16)]
    if has_pad:
        in_specs.append(pl.BlockSpec((None, 1, Sk), lambda b: (b, 0, 0)))
        args.append(pad_bias.reshape(B, 1, Sk).astype(jnp.float32))

    kern = functools.partial(_attn_kernel, scale=1.0 / math.sqrt(dh),
                             causal=causal, has_pad=has_pad)
    return pl.pallas_call(
        kern,
        grid=(B,),
        in_specs=in_specs,
        out_specs=pl.BlockSpec((None, Sq, D), lambda b: (b, 0, 0)),
        out_shape=jax.ShapeDtypeStruct((B, Sq, D), jnp.float32),
        compiler_params=pltpu.CompilerParams(dimension_semantics=("parallel",)),
    )(*args)


# ----------------------------- model pieces (glue + kernels) -----------------------------

def conv1d_k3_s2(x, w, b):
    """PyTorch-style Conv1d, kernel=3, stride=2, padding=0, via im2col + tiled Pallas matmul.
    x: (B, C_in, T), w: (C_out, C_in, 3), b: (C_out,) -> (B, C_out, L)."""
    B, C, T = x.shape
    L = (T - 3) // 2 + 1
    idx = 2 * jnp.arange(L)[:, None] + jnp.arange(3)[None, :]           # (L, 3)
    patches = x[:, :, idx]                                              # (B, C, L, 3)
    patches = patches.transpose(0, 2, 1, 3).reshape(B * L, C * 3)       # im2col (glue)
    wm = w.reshape(w.shape[0], C * 3).T                                 # (C*3, C_out)
    y = pallas_dense(patches, wm, b)
    return y.reshape(B, L, -1).transpose(0, 2, 1)


def mha_self(x, p, n_head, pad_bias=None, causal=False, residual=None):
    """Self-attention with fused QKV projection. Optional residual is fused into the output projection."""
    B, S, D = x.shape
    dh = D // n_head
    qkv = pallas_dense(x.reshape(-1, D), p['qkv_w'], p['qkv_b'])        # (B*S, 3D) — one matmul
    qkv = qkv.reshape(B, S, 3, n_head, dh).transpose(2, 0, 3, 1, 4)     # (3, B, H, S, dh)
    q, k, v = qkv[0], qkv[1], qkv[2]
    o = pallas_attention(q, k, v, pad_bias=pad_bias, causal=causal)     # (B, S, D)
    res2 = residual.reshape(-1, D) if residual is not None else None
    out = pallas_dense(o.reshape(-1, D), p['o_w'], p['o_b'], residual=res2)
    return out.reshape(B, S, D)


def mha_cross(x, mem, p, n_head, residual=None):
    """Cross-attention: Q from x, fused K/V projection from memory."""
    B, Sq, D = x.shape
    Sk = mem.shape[1]
    dh = D // n_head
    q = pallas_dense(x.reshape(-1, D), p['q_w'], p['q_b']).reshape(B, Sq, n_head, dh).transpose(0, 2, 1, 3)
    kv = pallas_dense(mem.reshape(-1, D), p['kv_w'], p['kv_b']).reshape(B, Sk, 2, n_head, dh)
    kv = kv.transpose(2, 0, 3, 1, 4)                                    # (2, B, H, Sk, dh)
    k, v = kv[0], kv[1]
    o = pallas_attention(q, k, v)                                       # no mask for cross-attn
    res2 = residual.reshape(-1, D) if residual is not None else None
    out = pallas_dense(o.reshape(-1, D), p['o_w'], p['o_b'], residual=res2)
    return out.reshape(B, Sq, D)


def encoder_forward(x, layers, n_head):
    """Standard post-norm encoder stack (src_pad_mask is None in the reference forward — no mask)."""
    B, S, D = x.shape
    for lp in layers:
        h = mha_self(x, lp['attn'], n_head)                             # unmasked self-attention
        x = pallas_layernorm(h, lp['ln1']['g'], lp['ln1']['b'], residual=x)   # LN(x + attn)
        f = pallas_dense(x.reshape(-1, D), lp['ff1']['w'], lp['ff1']['b'], activation='relu')
        f = pallas_dense(f, lp['ff2']['w'], lp['ff2']['b']).reshape(B, S, D)
        x = pallas_layernorm(f, lp['ln2']['g'], lp['ln2']['b'], residual=x)   # LN(x + ffn)
    return x


def decoder_forward(x, mem, layers, final_ln, n_head, pad_bias):
    """nn.TransformerDecoder with norm_first=True layers + final shared LayerNorm (eval: no dropout)."""
    B, S, D = x.shape
    for lp in layers:
        h = pallas_layernorm(x, lp['ln1']['g'], lp['ln1']['b'])
        x = mha_self(h, lp['self'], n_head, pad_bias=pad_bias, causal=True, residual=x)
        h = pallas_layernorm(x, lp['ln2']['g'], lp['ln2']['b'])
        x = mha_cross(h, mem, lp['cross'], n_head, residual=x)
        h = pallas_layernorm(x, lp['ln3']['g'], lp['ln3']['b'])
        f = pallas_dense(h.reshape(-1, D), lp['ff1']['w'], lp['ff1']['b'], activation='relu')
        x = pallas_dense(f, lp['ff2']['w'], lp['ff2']['b'], residual=x.reshape(-1, D)).reshape(B, S, D)
    return pallas_layernorm(x, final_ln['g'], final_ln['b'])


def make_pe(max_len, d_model):
    pos = jnp.arange(max_len, dtype=jnp.float32)[:, None]
    div = jnp.exp(jnp.arange(0, d_model, 2, dtype=jnp.float32) * (-math.log(10000.0) / d_model))
    pe = jnp.zeros((max_len, d_model), jnp.float32)
    pe = pe.at[:, 0::2].set(jnp.sin(pos * div))
    pe = pe.at[:, 1::2].set(jnp.cos(pos * div))
    return pe


def early_transformer_forward(params, src, trg, *, n_head, n_enc_exits, trg_pad_idx):
    # conv_subsample: two Conv1d(k=3, s=2, p=0), no activation (Conv1dSubampling)
    x = conv1d_k3_s2(src, params['conv1_w'], params['conv1_b'])
    x = conv1d_k3_s2(x, params['conv2_w'], params['conv2_b'])            # (B, D, L)
    src_e = x.transpose(0, 2, 1)                                         # permute(0,2,1) -> (B, L, D)
    L = src_e.shape[1]
    src_e = src_e + params['pe'][:L][None]                               # positional_encoder_1 (eval)

    B, S = trg.shape
    D = params['emb'].shape[1]
    t = params['emb'][trg]                                               # embedding gather (glue)
    t = t + params['pe'][:S][None]                                       # positional_encoder_2

    # target key-padding bias only; the causal mask is built inside the attention kernel
    pad_bias = jnp.where(trg == trg_pad_idx, NEG_INF, 0.0).astype(jnp.float32)   # (B, S)

    enc = src_e
    outputs, enc_outs = [], []
    for e in range(n_enc_exits):
        enc = encoder_forward(enc, params['encoders'][e], n_head)
        dec = decoder_forward(t, enc, params['decoders'][e], params['final_ln'], n_head, pad_bias)
        out = pallas_dense(dec.reshape(-1, D), params['linears_2'][e]['w'], params['linears_2'][e]['b'],
                           log_softmax=True).reshape(B, S, -1)           # fused vocab proj + log_softmax
        outputs.append(out)
        eo = pallas_dense(enc.reshape(-1, D), params['linears_1'][e]['w'], params['linears_1'][e]['b'],
                          log_softmax=True).reshape(B, L, -1)
        enc_outs.append(eo)

    return jnp.stack(outputs, axis=0), jnp.stack(enc_outs, axis=0)


# ----------------------------- deterministic parameter init -----------------------------

def _dense_init(key, fan_in, fan_out):
    w = jax.random.normal(key, (fan_in, fan_out), jnp.float32) * 0.02
    return {'w': w, 'b': jnp.zeros((fan_out,), jnp.float32)}


def _ln_init(d):
    return {'g': jnp.ones((d,), jnp.float32), 'b': jnp.zeros((d,), jnp.float32)}


def _mha_self_init(key, d):
    ks = jax.random.split(key, 2)
    return {'qkv_w': jax.random.normal(ks[0], (d, 3 * d), jnp.float32) * 0.02,
            'qkv_b': jnp.zeros((3 * d,), jnp.float32),
            'o_w': jax.random.normal(ks[1], (d, d), jnp.float32) * 0.02,
            'o_b': jnp.zeros((d,), jnp.float32)}


def _mha_cross_init(key, d):
    ks = jax.random.split(key, 3)
    return {'q_w': jax.random.normal(ks[0], (d, d), jnp.float32) * 0.02,
            'q_b': jnp.zeros((d,), jnp.float32),
            'kv_w': jax.random.normal(ks[1], (d, 2 * d), jnp.float32) * 0.02,
            'kv_b': jnp.zeros((2 * d,), jnp.float32),
            'o_w': jax.random.normal(ks[2], (d, d), jnp.float32) * 0.02,
            'o_b': jnp.zeros((d,), jnp.float32)}


def _enc_layer_init(key, d, ffn):
    ks = jax.random.split(key, 3)
    return {'attn': _mha_self_init(ks[0], d), 'ln1': _ln_init(d),
            'ff1': _dense_init(ks[1], d, ffn), 'ff2': _dense_init(ks[2], ffn, d),
            'ln2': _ln_init(d)}


def _dec_layer_init(key, d, ffn):
    ks = jax.random.split(key, 4)
    return {'self': _mha_self_init(ks[0], d), 'cross': _mha_cross_init(ks[1], d),
            'ln1': _ln_init(d), 'ln2': _ln_init(d), 'ln3': _ln_init(d),
            'ff1': _dense_init(ks[2], d, ffn), 'ff2': _dense_init(ks[3], ffn, d)}


def init_params(key, *, features_length, d_model, n_head, d_ff, n_enc_layers,
                n_dec_layers, n_enc_exits, dec_voc_size, max_len):
    ks = iter(jax.random.split(key, 64))
    params = {
        'conv1_w': jax.random.normal(next(ks), (d_model, features_length, 3), jnp.float32) * 0.02,
        'conv1_b': jnp.zeros((d_model,), jnp.float32),
        'conv2_w': jax.random.normal(next(ks), (d_model, d_model, 3), jnp.float32) * 0.02,
        'conv2_b': jnp.zeros((d_model,), jnp.float32),
        'emb': jax.random.normal(next(ks), (dec_voc_size, d_model), jnp.float32) * 0.02,
        'pe': make_pe(max_len, d_model),
        'final_ln': _ln_init(d_model),  # shared self.layer_norm across all decoders
        'linears_1': [_dense_init(next(ks), d_model, dec_voc_size) for _ in range(n_enc_exits)],
        'linears_2': [_dense_init(next(ks), d_model, dec_voc_size) for _ in range(n_enc_exits)],
        'encoders': [[_enc_layer_init(next(ks), d_model, d_ff) for _ in range(n_enc_layers)]
                     for _ in range(n_enc_exits)],
        'decoders': [[_dec_layer_init(next(ks), d_model, d_ff) for _ in range(n_dec_layers)]
                     for _ in range(n_enc_exits)],
    }
    return params


# ----------------------------- main -----------------------------

if __name__ == "__main__":
    # small config consistent with the module's constructor
    B = 2
    features_length = 8
    T_src = 16            # after two k=3,s=2 convs: 16 -> 7 -> 3
    S_trg = 8
    d_model = 32
    n_head = 4
    d_ff = 64
    n_enc_layers = 1
    n_dec_layers = 1
    n_enc_exits = 2
    dec_voc_size = 40
    max_len = 64
    trg_pad_idx = 0

    key = jax.random.PRNGKey(0)
    k_params, k_src, k_trg = jax.random.split(key, 3)

    params = init_params(k_params, features_length=features_length, d_model=d_model,
                         n_head=n_head, d_ff=d_ff, n_enc_layers=n_enc_layers,
                         n_dec_layers=n_dec_layers, n_enc_exits=n_enc_exits,
                         dec_voc_size=dec_voc_size, max_len=max_len)

    src = jax.random.normal(k_src, (B, features_length, T_src), jnp.float32)   # NCW like PyTorch Conv1d
    trg = jax.random.randint(k_trg, (B, S_trg), 1, dec_voc_size).astype(jnp.int32)
    trg = trg.at[1, 6:].set(trg_pad_idx)   # some trailing padding in batch 1

    fwd = jax.jit(functools.partial(early_transformer_forward, n_head=n_head,
                                    n_enc_exits=n_enc_exits, trg_pad_idx=trg_pad_idx))
    output, enc_out = fwd(params, src, trg)
    output = jax.block_until_ready(output)
    enc_out = jax.block_until_ready(enc_out)

    assert output.shape == (n_enc_exits, B, S_trg, dec_voc_size), output.shape
    assert enc_out.shape == (n_enc_exits, B, 3, dec_voc_size), enc_out.shape
    assert bool(jnp.all(jnp.isfinite(output))) and bool(jnp.all(jnp.isfinite(enc_out)))
    # fused log_softmax sanity: probabilities over the (unpadded) vocab must sum to ~1
    lse = jnp.log(jnp.sum(jnp.exp(output), axis=-1))
    assert bool(jnp.max(jnp.abs(lse)) < 1e-2), float(jnp.max(jnp.abs(lse)))
    print("KERNEL_OK")
</pallas_src>

<mosaic_0001>
module attributes {stable_mosaic.version = 11 : i64} {
  func.func @_ln_kernel(%arg0: i32, %arg1: memref<16x32xf32, #tpu.memory_space<vmem>>, %arg2: memref<1x32xf32, #tpu.memory_space<vmem>>, %arg3: memref<1x32xf32, #tpu.memory_space<vmem>>, %arg4: memref<16x32xf32, #tpu.memory_space<vmem>>) attributes {dimension_semantics = [#tpu.dimension_semantics<parallel>], iteration_bounds = array<i64: 1>, scalar_prefetch = 0 : i64, scratch_operands = 0 : i64, tpu.core_type = #tpu.core_type<tc>, window_params = [{transform_indices = @transform_0, window_bounds = array<i64: 16, 32>}, {pipeline_mode = #tpu.pipeline_mode<synchronous>, transform_indices = @transform_1, window_bounds = array<i64: 1, 32>}, {pipeline_mode = #tpu.pipeline_mode<synchronous>, transform_indices = @transform_2, window_bounds = array<i64: 1, 32>}, {transform_indices = @transform_3, window_bounds = array<i64: 16, 32>}]} {
    %c0 = arith.constant 0 : index
    %c0_0 = arith.constant 0 : index
    %0 = vector.load %arg1[%c0, %c0_0] : memref<16x32xf32, #tpu.memory_space<vmem>>, vector<16x32xf32>
    %cst = arith.constant dense<0.000000e+00> : vector<16xf32>
    %1 = vector.multi_reduction <add>, %0, %cst [1] : vector<16x32xf32> to vector<16xf32>
    %2 = vector.shape_cast %1 : vector<16xf32> to vector<16x1xf32>
    %cst_1 = arith.constant 3.200000e+01 : f32
    %3 = vector.broadcast %cst_1 : f32 to vector<16x1xf32>
    %4 = arith.divf %2, %3 : vector<16x1xf32>
    %5 = vector.broadcast %4 : vector<16x1xf32> to vector<16x32xf32>
    %6 = arith.subf %0, %5 : vector<16x32xf32>
    %7 = arith.mulf %6, %6 : vector<16x32xf32>
    %cst_2 = arith.constant dense<0.000000e+00> : vector<16xf32>
    %8 = vector.multi_reduction <add>, %7, %cst_2 [1] : vector<16x32xf32> to vector<16xf32>
    %9 = vector.shape_cast %8 : vector<16xf32> to vector<16x1xf32>
    %cst_3 = arith.constant 3.200000e+01 : f32
    %10 = vector.broadcast %cst_3 : f32 to vector<16x1xf32>
    %11 = arith.divf %9, %10 : vector<16x1xf32>
    %12 = vector.broadcast %4 : vector<16x1xf32> to vector<16x32xf32>
    %13 = arith.subf %0, %12 : vector<16x32xf32>
    %cst_4 = arith.constant 9.99999974E-6 : f32
    %14 = vector.broadcast %cst_4 : f32 to vector<16x1xf32>
    %15 = arith.addf %11, %14 : vector<16x1xf32>
    %16 = math.rsqrt %15 : vector<16x1xf32>
    %17 = vector.broadcast %16 : vector<16x1xf32> to vector<16x32xf32>
    %18 = arith.mulf %13, %17 : vector<16x32xf32>
    %c0_5 = arith.constant 0 : index
    %c0_6 = arith.constant 0 : index
    %19 = vector.load %arg2[%c0_5, %c0_6] : memref<1x32xf32, #tpu.memory_space<vmem>>, vector<1x32xf32>
    %20 = vector.broadcast %19 : vector<1x32xf32> to vector<16x32xf32>
    %21 = arith.mulf %18, %20 : vector<16x32xf32>
    %c0_7 = arith.constant 0 : index
    %c0_8 = arith.constant 0 : index
    %22 = vector.load %arg3[%c0_7, %c0_8] : memref<1x32xf32, #tpu.memory_space<vmem>>, vector<1x32xf32>
    %23 = vector.broadcast %22 : vector<1x32xf32> to vector<16x32xf32>
    %24 = arith.addf %21, %23 : vector<16x32xf32>
    %c0_9 = arith.constant 0 : index
    %c0_10 = arith.constant 0 : index
    %25 = vector.load %arg4[%c0_9, %c0_10] : memref<16x32xf32, #tpu.memory_space<vmem>>, vector<16x32xf32>
    tpu.vector_store %arg4[%c0_9, %c0_10], %24 {strides = array<i32>} : memref<16x32xf32, #tpu.memory_space<vmem>>, vector<16x32xf32>,
    return
  }
  func.func @transform_0(%arg0: i32) -> (i32, i32) {
    %c0_i32 = arith.constant 0 : i32
    %c0_i32_0 = arith.constant 0 : i32
    return %arg0, %c0_i32 : i32, i32
  }
  func.func @transform_1(%arg0: i32) -> (i32, i32) {
    %c0_i32 = arith.constant 0 : i32
    %c0_i32_0 = arith.constant 0 : i32
    %c0_i32_1 = arith.constant 0 : i32
    return %c0_i32, %c0_i32_0 : i32, i32
  }
  func.func @transform_2(%arg0: i32) -> (i32, i32) {
    %c0_i32 = arith.constant 0 : i32
    %c0_i32_0 = arith.constant 0 : i32
    %c0_i32_1 = arith.constant 0 : i32
    return %c0_i32, %c0_i32_0 : i32, i32
  }
  func.func @transform_3(%arg0: i32) -> (i32, i32) {
    %c0_i32 = arith.constant 0 : i32
    %c0_i32_0 = arith.constant 0 : i32
    return %arg0, %c0_i32 : i32, i32
  }
}

module attributes {stable_mosaic.version = 11 : i64} {
  func.func @_dense_kernel(%arg0: i32, %arg1: i32, %arg2: i32, %arg3: memref<16x128xbf16, #tpu.memory_space<vmem>>, %arg4: memref<128x128xbf16, #tpu.memory_space<vmem>>, %arg5: memref<1x128xf32, #tpu.memory_space<vmem>>, %arg6: memref<16x128xf32, #tpu.memory_space<vmem>>, %arg7: memref<16x128xf32, #tpu.memory_space<vmem>>) attributes {dimension_semantics = [#tpu.dimension_semantics<parallel>, #tpu.dimension_semantics<parallel>, #tpu.dimension_semantics<arbitrary>], iteration_bounds = array<i64: 1, 1, 1>, scalar_prefetch = 0 : i64, scratch_operands = 1 : i64, tpu.core_type = #tpu.core_type<tc>, window_params = [{transform_indices = @transform_0, window_bounds = array<i64: 16, 128>}, {transform_indices = @transform_1, window_bounds = array<i64: 128, 128>}, {transform_indices = @transform_2, window_bounds = array<i64: 1, 128>}, {transform_indices = @transform_3, window_bounds = array<i64: 16, 128>}]} {
    %c0_i32 = arith.constant 0 : i32
    %0 = arith.cmpi eq, %arg2, %c0_i32 : i32
    %1 = arith.extui %0 : i1 to i32
    %c0_i32_0 = arith.constant 0 : i32
    %2 = arith.cmpi ne, %1, %c0_i32_0 : i32
    scf.if %2 {
      %cst_10 = arith.constant 0.000000e+00 : f32
      %12 = vector.broadcast %cst_10 : f32 to vector<16x128xf32>
      %c0_11 = arith.constant 0 : index
      %c0_12 = arith.constant 0 : index
      %13 = vector.load %arg7[%c0_11, %c0_12] : memref<16x128xf32, #tpu.memory_space<vmem>>, vector<16x128xf32>
      tpu.vector_store %arg7[%c0_11, %c0_12], %12 {strides = array<i32>} : memref<16x128xf32, #tpu.memory_space<vmem>>, vector<16x128xf32>,
    } else {
    }
    %c0 = arith.constant 0 : index
    %c0_1 = arith.constant 0 : index
    %3 = vector.load %arg7[%c0, %c0_1] : memref<16x128xf32, #tpu.memory_space<vmem>>, vector<16x128xf32>
    %c0_2 = arith.constant 0 : index
    %c0_3 = arith.constant 0 : index
    %4 = vector.load %arg3[%c0_2, %c0_3] : memref<16x128xbf16, #tpu.memory_space<vmem>>, vector<16x128xbf16>
    %c0_4 = arith.constant 0 : index
    %c0_5 = arith.constant 0 : index
    %5 = vector.load %arg4[%c0_4, %c0_5] : memref<128x128xbf16, #tpu.memory_space<vmem>>, vector<128x128xbf16>
    %cst = arith.constant dense<0.000000e+00> : vector<16x128xf32>
    %6 = tpu.matmul %4, %5, %cst {dimension_numbers = #tpu.dot_dimension_numbers<[1], [0], [0], [1], [0, 0, 1, 1], [], []>} : vector<16x128xbf16>, vector<128x128xbf16>, vector<16x128xf32> -> vector<16x128xf32>
    %7 = arith.addf %3, %6 : vector<16x128xf32>
    %c0_6 = arith.constant 0 : index
    %c0_7 = arith.constant 0 : index
    %8 = vector.load %arg7[%c0_6, %c0_7] : memref<16x128xf32, #tpu.memory_space<vmem>>, vector<16x128xf32>
    tpu.vector_store %arg7[%c0_6, %c0_7], %7 {strides = array<i32>} : memref<16x128xf32, #tpu.memory_space<vmem>>, vector<16x128xf32>,
    %c0_i32_8 = arith.constant 0 : i32
    %9 = arith.cmpi eq, %arg2, %c0_i32_8 : i32
    %10 = arith.extui %9 : i1 to i32
    %c0_i32_9 = arith.constant 0 : i32
    %11 = arith.cmpi ne, %10, %c0_i32_9 : i32
    scf.if %11 {
      %c0_10 = arith.constant 0 : index
      %c0_11 = arith.constant 0 : index
      %12 = vector.load %arg7[%c0_10, %c0_11] : memref<16x128xf32, #tpu.memory_space<vmem>>, vector<16x128xf32>
      %c0_12 = arith.constant 0 : index
      %c0_13 = arith.constant 0 : index
      %13 = vector.load %arg5[%c0_12, %c0_13] : memref<1x128xf32, #tpu.memory_space<vmem>>, vector<1x128xf32>
      %14 = vector.broadcast %13 : vector<1x128xf32> to vector<16x128xf32>
      %15 = arith.addf %12, %14 : vector<16x128xf32>
      %c0_14 = arith.constant 0 : index
      %c0_15 = arith.constant 0 : index
      %16 = vector.load %arg6[%c0_14, %c0_15] : memref<16x128xf32, #tpu.memory_space<vmem>>, vector<16x128xf32>
      tpu.vector_store %arg6[%c0_14, %c0_15], %15 {strides = array<i32>} : memref<16x128xf32, #tpu.memory_space<vmem>>, vector<16x128xf32>,
    } else {
    }
    return
  }
  func.func @transform_0(%arg0: i32, %arg1: i32, %arg2: i32) -> (i32, i32) {
    %c0_i32 = arith.constant 0 : i32
    return %arg0, %arg2 : i32, i32
  }
  func.func @transform_1(%arg0: i32, %arg1: i32, %arg2: i32) -> (i32, i32) {
    %c0_i32 = arith.constant 0 : i32
    return %arg2, %arg1 : i32, i32
  }
  func.func @transform_2(%arg0: i32, %arg1: i32, %arg2: i32) -> (i32, i32) {
    %c0_i32 = arith.constant 0 : i32
    %c0_i32_0 = arith.constant 0 : i32
    return %c0_i32, %arg1 : i32, i32
  }
  func.func @transform_3(%arg0: i32, %arg1: i32, %arg2: i32) -> (i32, i32) {
    %c0_i32 = arith.constant 0 : i32
    return %arg0, %arg1 : i32, i32
  }
}

module attributes {stable_mosaic.version = 11 : i64} {
  func.func @_attn_kernel(%arg0: i32, %arg1: memref<1x4x8x8xbf16, #tpu.memory_space<vmem>>, %arg2: memref<1x4x8x8xbf16, #tpu.memory_space<vmem>>, %arg3: memref<1x4x8x8xbf16, #tpu.memory_space<vmem>>, %arg4: memref<1x1x8xf32, #tpu.memory_space<vmem>>, %arg5: memref<1x8x32xf32, #tpu.memory_space<vmem>>) attributes {dimension_semantics = [#tpu.dimension_semantics<parallel>], iteration_bounds = array<i64: 2>, scalar_prefetch = 0 : i64, scratch_operands = 0 : i64, tpu.core_type = #tpu.core_type<tc>, window_params = [{transform_indices = @transform_0, window_bounds = array<i64: 1, 4, 8, 8>}, {transform_indices = @transform_1, window_bounds = array<i64: 1, 4, 8, 8>}, {transform_indices = @transform_2, window_bounds = array<i64: 1, 4, 8, 8>}, {transform_indices = @transform_3, window_bounds = array<i64: 1, 1, 8>}, {transform_indices = @transform_4, window_bounds = array<i64: 1, 8, 32>}]} {
    %c0 = arith.constant 0 : index
    %c0_0 = arith.constant 0 : index
    %c0_1 = arith.constant 0 : index
    %c0_2 = arith.constant 0 : index
    %0 = vector.load %arg1[%c0, %c0_0, %c0_1, %c0_2] : memref<1x4x8x8xbf16, #tpu.memory_space<vmem>>, vector<1x4x8x8xbf16>
    %1 = vector.shape_cast %0 : vector<1x4x8x8xbf16> to vector<4x8x8xbf16>
    %c0_3 = arith.constant 0 : index
    %c0_4 = arith.constant 0 : index
    %c0_5 = arith.constant 0 : index
    %c0_6 = arith.constant 0 : index
    %2 = vector.load %arg2[%c0_3, %c0_4, %c0_5, %c0_6] : memref<1x4x8x8xbf16, #tpu.memory_space<vmem>>, vector<1x4x8x8xbf16>
    %3 = vector.shape_cast %2 : vector<1x4x8x8xbf16> to vector<4x8x8xbf16>
    %c0_7 = arith.constant 0 : index
    %c0_8 = arith.constant 0 : index
    %c0_9 = arith.constant 0 : index
    %c0_10 = arith.constant 0 : index
    %4 = vector.load %arg3[%c0_7, %c0_8, %c0_9, %c0_10] : memref<1x4x8x8xbf16, #tpu.memory_space<vmem>>, vector<1x4x8x8xbf16>
    %5 = vector.shape_cast %4 : vector<1x4x8x8xbf16> to vector<4x8x8xbf16>
    "tpu.trace_start"() <{level = 10 : i32, message = "hqd,hkd->hqk"}> : () -> ()
    %cst = arith.constant dense<0.000000e+00> : vector<4x8x8xf32>
    %6 = tpu.matmul %1, %3, %cst {dimension_numbers = #tpu.dot_dimension_numbers<[2], [2], [1], [1], [0, 0, 0, 1, 1, 1], [0], [0]>} : vector<4x8x8xbf16>, vector<4x8x8xbf16>, vector<4x8x8xf32> -> vector<4x8x8xf32>
    "tpu.trace_stop"() : () -> ()
    %cst_11 = arith.constant 0.353553385 : f32
    %7 = vector.broadcast %cst_11 : f32 to vector<4x8x8xf32>
    %8 = arith.mulf %6, %7 : vector<4x8x8xf32>
    %c0_12 = arith.constant 0 : index
    %c0_13 = arith.constant 0 : index
    %c0_14 = arith.constant 0 : index
    %9 = vector.load %arg4[%c0_12, %c0_13, %c0_14] : memref<1x1x8xf32, #tpu.memory_space<vmem>>, vector<1x1x8xf32>
    %10 = vector.shape_cast %9 : vector<1x1x8xf32> to vector<1x8xf32>
    %11 = vector.shape_cast %10 : vector<1x8xf32> to vector<1x1x8xf32>
    %12 = vector.broadcast %11 : vector<1x1x8xf32> to vector<4x8x8xf32>
    %13 = arith.addf %8, %12 : vector<4x8x8xf32>
    %14 = tpu.iota {dimensions = array<i32: 0>} : vector<8x8xi32>
    %15 = tpu.iota {dimensions = array<i32: 1>} : vector<8x8xi32>
    %16 = arith.cmpi sgt, %15, %14 : vector<8x8xi32>
    %17 = vector.shape_cast %16 : vector<8x8xi1> to vector<1x8x8xi1>
    %cst_15 = arith.constant -1.000000e+30 : f32
    %18 = vector.shape_cast %17 : vector<1x8x8xi1> to vector<1x8x8xi1>
    %19 = vector.broadcast %18 : vector<1x8x8xi1> to vector<4x8x8xi1>
    %20 = vector.broadcast %cst_15 : f32 to vector<4x8x8xf32>
    %21 = arith.select %19, %20, %13 : vector<4x8x8xi1>, vector<4x8x8xf32>
    %cst_16 = arith.constant dense<0xFF800000> : vector<4x8xf32>
    %22 = vector.multi_reduction <maximumf>, %21, %cst_16 [2] : vector<4x8x8xf32> to vector<4x8xf32>
    %23 = vector.shape_cast %22 : vector<4x8xf32> to vector<4x8x1xf32>
    %24 = vector.broadcast %23 : vector<4x8x1xf32> to vector<4x8x8xf32>
    %25 = arith.subf %21, %24 : vector<4x8x8xf32>
    %26 = math.exp %25 : vector<4x8x8xf32>
    %cst_17 = arith.constant dense<0.000000e+00> : vector<4x8xf32>
    %27 = vector.multi_reduction <add>, %26, %cst_17 [2] : vector<4x8x8xf32> to vector<4x8xf32>
    %28 = vector.shape_cast %27 : vector<4x8xf32> to vector<4x8x1xf32>
    %29 = arith.truncf %26 : vector<4x8x8xf32> to vector<4x8x8xbf16>
    "tpu.trace_start"() <{level = 10 : i32, message = "hqk,hkd->hqd"}> : () -> ()
    %cst_18 = arith.constant dense<0.000000e+00> : vector<4x8x8xf32>
    %30 = tpu.matmul %29, %5, %cst_18 {dimension_numbers = #tpu.dot_dimension_numbers<[2], [1], [1], [2], [0, 0, 0, 1, 1, 2], [0], [0]>} : vector<4x8x8xbf16>, vector<4x8x8xbf16>, vector<4x8x8xf32> -> vector<4x8x8xf32>
    "tpu.trace_stop"() : () -> ()
    %31 = tpu.reciprocal %28 {approx = true} : vector<4x8x1xf32> -> vector<4x8x1xf32>
    %32 = vector.broadcast %31 : vector<4x8x1xf32> to vector<4x8x8xf32>
    %33 = arith.mulf %30, %32 : vector<4x8x8xf32>
    %34 = vector.extract_strided_slice %33 {offsets = [0, 0, 0], sizes = [1, 8, 8], strides = [1, 1, 1]} : vector<4x8x8xf32> to vector<1x8x8xf32>
    %35 = vector.shape_cast %34 : vector<1x8x8xf32> to vector<8x8xf32>
    %36 = vector.extract_strided_slice %33 {offsets = [1, 0, 0], sizes = [1, 8, 8], strides = [1, 1, 1]} : vector<4x8x8xf32> to vector<1x8x8xf32>
    %37 = vector.shape_cast %36 : vector<1x8x8xf32> to vector<8x8xf32>
    %38 = vector.extract_strided_slice %33 {offsets = [2, 0, 0], sizes = [1, 8, 8], strides = [1, 1, 1]} : vector<4x8x8xf32> to vector<1x8x8xf32>
    %39 = vector.shape_cast %38 : vector<1x8x8xf32> to vector<8x8xf32>
    %40 = vector.extract_strided_slice %33 {offsets = [3, 0, 0], sizes = [1, 8, 8], strides = [1, 1, 1]} : vector<4x8x8xf32> to vector<1x8x8xf32>
    %41 = vector.shape_cast %40 : vector<1x8x8xf32> to vector<8x8xf32>
    %42 = tpu.concatenate %35, %37, %39, %41 in 1 : vector<8x8xf32>, vector<8x8xf32>, vector<8x8xf32>, vector<8x8xf32> -> vector<8x32xf32>
    %c0_19 = arith.constant 0 : index
    %c0_20 = arith.constant 0 : index
    %c0_21 = arith.constant 0 : index
    %43 = vector.load %arg5[%c0_19, %c0_20, %c0_21] : memref<1x8x32xf32, #tpu.memory_space<vmem>>, vector<1x8x32xf32>
    %44 = vector.shape_cast %43 : vector<1x8x32xf32> to vector<8x32xf32>
    %45 = vector.shape_cast %42 : vector<8x32xf32> to vector<1x8x32xf32>
    tpu.vector_store %arg5[%c0_19, %c0_20, %c0_21], %45 {strides = array<i32>} : memref<1x8x32xf32, #tpu.memory_space<vmem>>, vector<1x8x32xf32>,
    return
  }
  func.func @transform_0(%arg0: i32) -> (i32, i32, i32, i32) {
    %c0_i32 = arith.constant 0 : i32
    %c0_i32_0 = arith.constant 0 : i32
    %c0_i32_1 = arith.constant 0 : i32
    %c0_i32_2 = arith.constant 0 : i32
    return %arg0, %c0_i32, %c0_i32_0, %c0_i32_1 : i32, i32, i32, i32
  }
  func.func @transform_1(%arg0: i32) -> (i32, i32, i32, i32) {
    %c0_i32 = arith.constant 0 : i32
    %c0_i32_0 = arith.constant 0 : i32
    %c0_i32_1 = arith.constant 0 : i32
    %c0_i32_2 = arith.constant 0 : i32
    return %arg0, %c0_i32, %c0_i32_0, %c0_i32_1 : i32, i32, i32, i32
  }
  func.func @transform_2(%arg0: i32) -> (i32, i32, i32, i32) {
    %c0_i32 = arith.constant 0 : i32
    %c0_i32_0 = arith.constant 0 : i32
    %c0_i32_1 = arith.constant 0 : i32
    %c0_i32_2 = arith.constant 0 : i32
    return %arg0, %c0_i32, %c0_i32_0, %c0_i32_1 : i32, i32, i32, i32
  }
  func.func @transform_3(%arg0: i32) -> (i32, i32, i32) {
    %c0_i32 = arith.constant 0 : i32
    %c0_i32_0 = arith.constant 0 : i32
    %c0_i32_1 = arith.constant 0 : i32
    return %arg0, %c0_i32, %c0_i32_0 : i32, i32, i32
  }
  func.func @transform_4(%arg0: i32) -> (i32, i32, i32) {
    %c0_i32 = arith.constant 0 : i32
    %c0_i32_0 = arith.constant 0 : i32
    %c0_i32_1 = arith.constant 0 : i32
    return %arg0, %c0_i32, %c0_i32_0 : i32, i32, i32
  }
}

module attributes {stable_mosaic.version = 11 : i64} {
  func.func @_dense_kernel(%arg0: i32, %arg1: i32, %arg2: i32, %arg3: memref<16x128xbf16, #tpu.memory_space<vmem>>, %arg4: memref<128x128xbf16, #tpu.memory_space<vmem>>, %arg5: memref<1x128xf32, #tpu.memory_space<vmem>>, %arg6: memref<16x128xf32, #tpu.memory_space<vmem>>, %arg7: memref<16x128xf32, #tpu.memory_space<vmem>>, %arg8: memref<16x128xf32, #tpu.memory_space<vmem>>) attributes {dimension_semantics = [#tpu.dimension_semantics<parallel>, #tpu.dimension_semantics<parallel>, #tpu.dimension_semantics<arbitrary>], iteration_bounds = array<i64: 1, 1, 1>, scalar_prefetch = 0 : i64, scratch_operands = 1 : i64, tpu.core_type = #tpu.core_type<tc>, window_params = [{transform_indices = @transform_0, window_bounds = array<i64: 16, 128>}, {transform_indices = @transform_1, window_bounds = array<i64: 128, 128>}, {transform_indices = @transform_2, window_bounds = array<i64: 1, 128>}, {transform_indices = @transform_3, window_bounds = array<i64: 16, 128>}, {transform_indices = @transform_4, window_bounds = array<i64: 16, 128>}]} {
    %c0_i32 = arith.constant 0 : i32
    %0 = arith.cmpi eq, %arg2, %c0_i32 : i32
    %1 = arith.extui %0 : i1 to i32
    %c0_i32_0 = arith.constant 0 : i32
    %2 = arith.cmpi ne, %1, %c0_i32_0 : i32
    scf.if %2 {
      %cst_10 = arith.constant 0.000000e+00 : f32
      %12 = vector.broadcast %cst_10 : f32 to vector<16x128xf32>
      %c0_11 = arith.constant 0 : index
      %c0_12 = arith.constant 0 : index
      %13 = vector.load %arg8[%c0_11, %c0_12] : memref<16x128xf32, #tpu.memory_space<vmem>>, vector<16x128xf32>
      tpu.vector_store %arg8[%c0_11, %c0_12], %12 {strides = array<i32>} : memref<16x128xf32, #tpu.memory_space<vmem>>, vector<16x128xf32>,
    } else {
    }
    %c0 = arith.constant 0 : index
    %c0_1 = arith.constant 0 : index
    %3 = vector.load %arg8[%c0, %c0_1] : memref<16x128xf32, #tpu.memory_space<vmem>>, vector<16x128xf32>
    %c0_2 = arith.constant 0 : index
    %c0_3 = arith.constant 0 : index
    %4 = vector.load %arg3[%c0_2, %c0_3] : memref<16x128xbf16, #tpu.memory_space<vmem>>, vector<16x128xbf16>
    %c0_4 = arith.constant 0 : index
    %c0_5 = arith.constant 0 : index
    %5 = vector.load %arg4[%c0_4, %c0_5] : memref<128x128xbf16, #tpu.memory_space<vmem>>, vector<128x128xbf16>
    %cst = arith.constant dense<0.000000e+00> : vector<16x128xf32>
    %6 = tpu.matmul %4, %5, %cst {dimension_numbers = #tpu.dot_dimension_numbers<[1], [0], [0], [1], [0, 0, 1, 1], [], []>} : vector<16x128xbf16>, vector<128x128xbf16>, vector<16x128xf32> -> vector<16x128xf32>
    %7 = arith.addf %3, %6 : vector<16x128xf32>
    %c0_6 = arith.constant 0 : index
    %c0_7 = arith.constant 0 : index
    %8 = vector.load %arg8[%c0_6, %c0_7] : memref<16x128xf32, #tpu.memory_space<vmem>>, vector<16x128xf32>
    tpu.vector_store %arg8[%c0_6, %c0_7], %7 {strides = array<i32>} : memref<16x128xf32, #tpu.memory_space<vmem>>, vector<16x128xf32>,
    %c0_i32_8 = arith.constant 0 : i32
    %9 = arith.cmpi eq, %arg2, %c0_i32_8 : i32
    %10 = arith.extui %9 : i1 to i32
    %c0_i32_9 = arith.constant 0 : i32
    %11 = arith.cmpi ne, %10, %c0_i32_9 : i32
    scf.if %11 {
      %c0_10 = arith.constant 0 : index
      %c0_11 = arith.constant 0 : index
      %12 = vector.load %arg8[%c0_10, %c0_11] : memref<16x128xf32, #tpu.memory_space<vmem>>, vector<16x128xf32>
      %c0_12 = arith.constant 0 : index
      %c0_13 = arith.constant 0 : index
      %13 = vector.load %arg5[%c0_12, %c0_13] : memref<1x128xf32, #tpu.memory_space<vmem>>, vector<1x128xf32>
      %14 = vector.broadcast %13 : vector<1x128xf32> to vector<16x128xf32>
      %15 = arith.addf %12, %14 : vector<16x128xf32>
      %c0_14 = arith.constant 0 : index
      %c0_15 = arith.constant 0 : index
      %16 = vector.load %arg6[%c0_14, %c0_15] : memref<16x128xf32, #tpu.memory_space<vmem>>, vector<16x128xf32>
      %17 = arith.addf %15, %16 : vector<16x128xf32>
      %c0_16 = arith.constant 0 : index
      %c0_17 = arith.constant 0 : index
      %18 = vector.load %arg7[%c0_16, %c0_17] : memref<16x128xf32, #tpu.memory_space<vmem>>, vector<16x128xf32>
      tpu.vector_store %arg7[%c0_16, %c0_17], %17 {strides = array<i32>} : memref<16x128xf32, #tpu.memory_space<vmem>>, vector<16x128xf32>,
    } else {
    }
    return
  }
  func.func @transform_0(%arg0: i32, %arg1: i32, %arg2: i32) -> (i32, i32) {
    %c0_i32 = arith.constant 0 : i32
    return %arg0, %arg2 : i32, i32
  }
  func.func @transform_1(%arg0: i32, %arg1: i32, %arg2: i32) -> (i32, i32) {
    %c0_i32 = arith.constant 0 : i32
    return %arg2, %arg1 : i32, i32
  }
  func.func @transform_2(%arg0: i32, %arg1: i32, %arg2: i32) -> (i32, i32) {
    %c0_i32 = arith.constant 0 : i32
    %c0_i32_0 = arith.constant 0 : i32
    return %c0_i32, %arg1 : i32, i32
  }
  func.func @transform_3(%arg0: i32, %arg1: i32, %arg2: i32) -> (i32, i32) {
    %c0_i32 = arith.constant 0 : i32
    return %arg0, %arg1 : i32, i32
  }
  func.func @transform_4(%arg0: i32, %arg1: i32, %arg2: i32) -> (i32, i32) {
    %c0_i32 = arith.constant 0 : i32
    return %arg0, %arg1 : i32, i32
  }
}

module attributes {stable_mosaic.version = 11 : i64} {
  func.func @_dense_kernel(%arg0: i32, %arg1: i32, %arg2: i32, %arg3: memref<8x128xbf16, #tpu.memory_space<vmem>>, %arg4: memref<128x128xbf16, #tpu.memory_space<vmem>>, %arg5: memref<1x128xf32, #tpu.memory_space<vmem>>, %arg6: memref<8x128xf32, #tpu.memory_space<vmem>>, %arg7: memref<8x128xf32, #tpu.memory_space<vmem>>) attributes {dimension_semantics = [#tpu.dimension_semantics<parallel>, #tpu.dimension_semantics<parallel>, #tpu.dimension_semantics<arbitrary>], iteration_bounds = array<i64: 1, 1, 1>, scalar_prefetch = 0 : i64, scratch_operands = 1 : i64, tpu.core_type = #tpu.core_type<tc>, window_params = [{transform_indices = @transform_0, window_bounds = array<i64: 8, 128>}, {transform_indices = @transform_1, window_bounds = array<i64: 128, 128>}, {transform_indices = @transform_2, window_bounds = array<i64: 1, 128>}, {transform_indices = @transform_3, window_bounds = array<i64: 8, 128>}]} {
    %c0_i32 = arith.constant 0 : i32
    %0 = arith.cmpi eq, %arg2, %c0_i32 : i32
    %1 = arith.extui %0 : i1 to i32
    %c0_i32_0 = arith.constant 0 : i32
    %2 = arith.cmpi ne, %1, %c0_i32_0 : i32
    scf.if %2 {
      %cst_10 = arith.constant 0.000000e+00 : f32
      %12 = vector.broadcast %cst_10 : f32 to vector<8x128xf32>
      %c0_11 = arith.constant 0 : index
      %c0_12 = arith.constant 0 : index
      %13 = vector.load %arg7[%c0_11, %c0_12] : memref<8x128xf32, #tpu.memory_space<vmem>>, vector<8x128xf32>
      tpu.vector_store %arg7[%c0_11, %c0_12], %12 {strides = array<i32>} : memref<8x128xf32, #tpu.memory_space<vmem>>, vector<8x128xf32>,
    } else {
    }
    %c0 = arith.constant 0 : index
    %c0_1 = arith.constant 0 : index
    %3 = vector.load %arg7[%c0, %c0_1] : memref<8x128xf32, #tpu.memory_space<vmem>>, vector<8x128xf32>
    %c0_2 = arith.constant 0 : index
    %c0_3 = arith.constant 0 : index
    %4 = vector.load %arg3[%c0_2, %c0_3] : memref<8x128xbf16, #tpu.memory_space<vmem>>, vector<8x128xbf16>
    %c0_4 = arith.constant 0 : index
    %c0_5 = arith.constant 0 : index
    %5 = vector.load %arg4[%c0_4, %c0_5] : memref<128x128xbf16, #tpu.memory_space<vmem>>, vector<128x128xbf16>
    %cst = arith.constant dense<0.000000e+00> : vector<8x128xf32>
    %6 = tpu.matmul %4, %5, %cst {dimension_numbers = #tpu.dot_dimension_numbers<[1], [0], [0], [1], [0, 0, 1, 1], [], []>} : vector<8x128xbf16>, vector<128x128xbf16>, vector<8x128xf32> -> vector<8x128xf32>
    %7 = arith.addf %3, %6 : vector<8x128xf32>
    %c0_6 = arith.constant 0 : index
    %c0_7 = arith.constant 0 : index
    %8 = vector.load %arg7[%c0_6, %c0_7] : memref<8x128xf32, #tpu.memory_space<vmem>>, vector<8x128xf32>
    tpu.vector_store %arg7[%c0_6, %c0_7], %7 {strides = array<i32>} : memref<8x128xf32, #tpu.memory_space<vmem>>, vector<8x128xf32>,
    %c0_i32_8 = arith.constant 0 : i32
    %9 = arith.cmpi eq, %arg2, %c0_i32_8 : i32
    %10 = arith.extui %9 : i1 to i32
    %c0_i32_9 = arith.constant 0 : i32
    %11 = arith.cmpi ne, %10, %c0_i32_9 : i32
    scf.if %11 {
      %c0_10 = arith.constant 0 : index
      %c0_11 = arith.constant 0 : index
      %12 = vector.load %arg7[%c0_10, %c0_11] : memref<8x128xf32, #tpu.memory_space<vmem>>, vector<8x128xf32>
      %c0_12 = arith.constant 0 : index
      %c0_13 = arith.constant 0 : index
      %13 = vector.load %arg5[%c0_12, %c0_13] : memref<1x128xf32, #tpu.memory_space<vmem>>, vector<1x128xf32>
      %14 = vector.broadcast %13 : vector<1x128xf32> to vector<8x128xf32>
      %15 = arith.addf %12, %14 : vector<8x128xf32>
      %c0_14 = arith.constant 0 : index
      %c0_15 = arith.constant 0 : index
      %16 = vector.load %arg6[%c0_14, %c0_15] : memref<8x128xf32, #tpu.memory_space<vmem>>, vector<8x128xf32>
      tpu.vector_store %arg6[%c0_14, %c0_15], %15 {strides = array<i32>} : memref<8x128xf32, #tpu.memory_space<vmem>>, vector<8x128xf32>,
    } else {
    }
    return
  }
  func.func @transform_0(%arg0: i32, %arg1: i32, %arg2: i32) -> (i32, i32) {
    %c0_i32 = arith.constant 0 : i32
    return %arg0, %arg2 : i32, i32
  }
  func.func @transform_1(%arg0: i32, %arg1: i32, %arg2: i32) -> (i32, i32) {
    %c0_i32 = arith.constant 0 : i32
    return %arg2, %arg1 : i32, i32
  }
  func.func @transform_2(%arg0: i32, %arg1: i32, %arg2: i32) -> (i32, i32) {
    %c0_i32 = arith.constant 0 : i32
    %c0_i32_0 = arith.constant 0 : i32
    return %c0_i32, %arg1 : i32, i32
  }
  func.func @transform_3(%arg0: i32, %arg1: i32, %arg2: i32) -> (i32, i32) {
    %c0_i32 = arith.constant 0 : i32
    return %arg0, %arg1 : i32, i32
  }
}

module attributes {stable_mosaic.version = 11 : i64} {
  func.func @_attn_kernel(%arg0: i32, %arg1: memref<1x4x3x8xbf16, #tpu.memory_space<vmem>>, %arg2: memref<1x4x3x8xbf16, #tpu.memory_space<vmem>>, %arg3: memref<1x4x3x8xbf16, #tpu.memory_space<vmem>>, %arg4: memref<1x3x32xf32, #tpu.memory_space<vmem>>) attributes {dimension_semantics = [#tpu.dimension_semantics<parallel>], iteration_bounds = array<i64: 2>, scalar_prefetch = 0 : i64, scratch_operands = 0 : i64, tpu.core_type = #tpu.core_type<tc>, window_params = [{transform_indices = @transform_0, window_bounds = array<i64: 1, 4, 3, 8>}, {transform_indices = @transform_1, window_bounds = array<i64: 1, 4, 3, 8>}, {transform_indices = @transform_2, window_bounds = array<i64: 1, 4, 3, 8>}, {transform_indices = @transform_3, window_bounds = array<i64: 1, 3, 32>}]} {
    %c0 = arith.constant 0 : index
    %c0_0 = arith.constant 0 : index
    %c0_1 = arith.constant 0 : index
    %c0_2 = arith.constant 0 : index
    %0 = vector.load %arg1[%c0, %c0_0, %c0_1, %c0_2] : memref<1x4x3x8xbf16, #tpu.memory_space<vmem>>, vector<1x4x3x8xbf16>
    %1 = vector.shape_cast %0 : vector<1x4x3x8xbf16> to vector<4x3x8xbf16>
    %c0_3 = arith.constant 0 : index
    %c0_4 = arith.constant 0 : index
    %c0_5 = arith.constant 0 : index
    %c0_6 = arith.constant 0 : index
    %2 = vector.load %arg2[%c0_3, %c0_4, %c0_5, %c0_6] : memref<1x4x3x8xbf16, #tpu.memory_space<vmem>>, vector<1x4x3x8xbf16>
    %3 = vector.shape_cast %2 : vector<1x4x3x8xbf16> to vector<4x3x8xbf16>
    %c0_7 = arith.constant 0 : index
    %c0_8 = arith.constant 0 : index
    %c0_9 = arith.constant 0 : index
    %c0_10 = arith.constant 0 : index
    %4 = vector.load %arg3[%c0_7, %c0_8, %c0_9, %c0_10] : memref<1x4x3x8xbf16, #tpu.memory_space<vmem>>, vector<1x4x3x8xbf16>
    %5 = vector.shape_cast %4 : vector<1x4x3x8xbf16> to vector<4x3x8xbf16>
    "tpu.trace_start"() <{level = 10 : i32, message = "hqd,hkd->hqk"}> : () -> ()
    %cst = arith.constant dense<0.000000e+00> : vector<4x3x3xf32>
    %6 = tpu.matmul %1, %3, %cst {dimension_numbers = #tpu.dot_dimension_numbers<[2], [2], [1], [1], [0, 0, 0, 1, 1, 1], [0], [0]>} : vector<4x3x8xbf16>, vector<4x3x8xbf16>, vector<4x3x3xf32> -> vector<4x3x3xf32>
    "tpu.trace_stop"() : () -> ()
    %cst_11 = arith.constant 0.353553385 : f32
    %7 = vector.broadcast %cst_11 : f32 to vector<4x3x3xf32>
    %8 = arith.mulf %6, %7 : vector<4x3x3xf32>
    %cst_12 = arith.constant dense<0xFF800000> : vector<4x3xf32>
    %9 = vector.multi_reduction <maximumf>, %8, %cst_12 [2] : vector<4x3x3xf32> to vector<4x3xf32>
    %10 = vector.shape_cast %9 : vector<4x3xf32> to vector<4x3x1xf32>
    %11 = vector.broadcast %10 : vector<4x3x1xf32> to vector<4x3x3xf32>
    %12 = arith.subf %8, %11 : vector<4x3x3xf32>
    %13 = math.exp %12 : vector<4x3x3xf32>
    %cst_13 = arith.constant dense<0.000000e+00> : vector<4x3xf32>
    %14 = vector.multi_reduction <add>, %13, %cst_13 [2] : vector<4x3x3xf32> to vector<4x3xf32>
    %15 = vector.shape_cast %14 : vector<4x3xf32> to vector<4x3x1xf32>
    %16 = arith.truncf %13 : vector<4x3x3xf32> to vector<4x3x3xbf16>
    "tpu.trace_start"() <{level = 10 : i32, message = "hqk,hkd->hqd"}> : () -> ()
    %cst_14 = arith.constant dense<0.000000e+00> : vector<4x3x8xf32>
    %17 = tpu.matmul %16, %5, %cst_14 {dimension_numbers = #tpu.dot_dimension_numbers<[2], [1], [1], [2], [0, 0, 0, 1, 1, 2], [0], [0]>} : vector<4x3x3xbf16>, vector<4x3x8xbf16>, vector<4x3x8xf32> -> vector<4x3x8xf32>
    "tpu.trace_stop"() : () -> ()
    %18 = tpu.reciprocal %15 {approx = true} : vector<4x3x1xf32> -> vector<4x3x1xf32>
    %19 = vector.broadcast %18 : vector<4x3x1xf32> to vector<4x3x8xf32>
    %20 = arith.mulf %17, %19 : vector<4x3x8xf32>
    %21 = vector.extract_strided_slice %20 {offsets = [0, 0, 0], sizes = [1, 3, 8], strides = [1, 1, 1]} : vector<4x3x8xf32> to vector<1x3x8xf32>
    %22 = vector.shape_cast %21 : vector<1x3x8xf32> to vector<3x8xf32>
    %23 = vector.extract_strided_slice %20 {offsets = [1, 0, 0], sizes = [1, 3, 8], strides = [1, 1, 1]} : vector<4x3x8xf32> to vector<1x3x8xf32>
    %24 = vector.shape_cast %23 : vector<1x3x8xf32> to vector<3x8xf32>
    %25 = vector.extract_strided_slice %20 {offsets = [2, 0, 0], sizes = [1, 3, 8], strides = [1, 1, 1]} : vector<4x3x8xf32> to vector<1x3x8xf32>
    %26 = vector.shape_cast %25 : vector<1x3x8xf32> to vector<3x8xf32>
    %27 = vector.extract_strided_slice %20 {offsets = [3, 0, 0], sizes = [1, 3, 8], strides = [1, 1, 1]} : vector<4x3x8xf32> to vector<1x3x8xf32>
    %28 = vector.shape_cast %27 : vector<1x3x8xf32> to vector<3x8xf32>
    %29 = tpu.concatenate %22, %24, %26, %28 in 1 : vector<3x8xf32>, vector<3x8xf32>, vector<3x8xf32>, vector<3x8xf32> -> vector<3x32xf32>
    %c0_15 = arith.constant 0 : index
    %c0_16 = arith.constant 0 : index
    %c0_17 = arith.constant 0 : index
    %30 = vector.load %arg4[%c0_15, %c0_16, %c0_17] : memref<1x3x32xf32, #tpu.memory_space<vmem>>, vector<1x3x32xf32>
    %31 = vector.shape_cast %30 : vector<1x3x32xf32> to vector<3x32xf32>
    %32 = vector.shape_cast %29 : vector<3x32xf32> to vector<1x3x32xf32>
    tpu.vector_store %arg4[%c0_15, %c0_16, %c0_17], %32 {strides = array<i32>} : memref<1x3x32xf32, #tpu.memory_space<vmem>>, vector<1x3x32xf32>,
    return
  }
  func.func @transform_0(%arg0: i32) -> (i32, i32, i32, i32) {
    %c0_i32 = arith.constant 0 : i32
    %c0_i32_0 = arith.constant 0 : i32
    %c0_i32_1 = arith.constant 0 : i32
    %c0_i32_2 = arith.constant 0 : i32
    return %arg0, %c0_i32, %c0_i32_0, %c0_i32_1 : i32, i32, i32, i32
  }
  func.func @transform_1(%arg0: i32) -> (i32, i32, i32, i32) {
    %c0_i32 = arith.constant 0 : i32
    %c0_i32_0 = arith.constant 0 : i32
    %c0_i32_1 = arith.constant 0 : i32
    %c0_i32_2 = arith.constant 0 : i32
    return %arg0, %c0_i32, %c0_i32_0, %c0_i32_1 : i32, i32, i32, i32
  }
  func.func @transform_2(%arg0: i32) -> (i32, i32, i32, i32) {
    %c0_i32 = arith.constant 0 : i32
    %c0_i32_0 = arith.constant 0 : i32
    %c0_i32_1 = arith.constant 0 : i32
    %c0_i32_2 = arith.constant 0 : i32
    return %arg0, %c0_i32, %c0_i32_0, %c0_i32_1 : i32, i32, i32, i32
  }
  func.func @transform_3(%arg0: i32) -> (i32, i32, i32) {
    %c0_i32 = arith.constant 0 : i32
    %c0_i32_0 = arith.constant 0 : i32
    %c0_i32_1 = arith.constant 0 : i32
    return %arg0, %c0_i32, %c0_i32_0 : i32, i32, i32
  }
}

module attributes {stable_mosaic.version = 11 : i64} {
  func.func @_ln_kernel(%arg0: i32, %arg1: memref<8x32xf32, #tpu.memory_space<vmem>>, %arg2: memref<8x32xf32, #tpu.memory_space<vmem>>, %arg3: memref<1x32xf32, #tpu.memory_space<vmem>>, %arg4: memref<1x32xf32, #tpu.memory_space<vmem>>, %arg5: memref<8x32xf32, #tpu.memory_space<vmem>>) attributes {dimension_semantics = [#tpu.dimension_semantics<parallel>], iteration_bounds = array<i64: 1>, scalar_prefetch = 0 : i64, scratch_operands = 0 : i64, tpu.core_type = #tpu.core_type<tc>, window_params = [{transform_indices = @transform_0, window_bounds = array<i64: 8, 32>}, {transform_indices = @transform_1, window_bounds = array<i64: 8, 32>}, {pipeline_mode = #tpu.pipeline_mode<synchronous>, transform_indices = @transform_2, window_bounds = array<i64: 1, 32>}, {pipeline_mode = #tpu.pipeline_mode<synchronous>, transform_indices = @transform_3, window_bounds = array<i64: 1, 32>}, {transform_indices = @transform_4, window_bounds = array<i64: 8, 32>}]} {
    %c0 = arith.constant 0 : index
    %c0_0 = arith.constant 0 : index
    %0 = vector.load %arg1[%c0, %c0_0] : memref<8x32xf32, #tpu.memory_space<vmem>>, vector<8x32xf32>
    %c0_1 = arith.constant 0 : index
    %c0_2 = arith.constant 0 : index
    %1 = vector.load %arg2[%c0_1, %c0_2] : memref<8x32xf32, #tpu.memory_space<vmem>>, vector<8x32xf32>
    %2 = arith.addf %0, %1 : vector<8x32xf32>
    %cst = arith.constant dense<0.000000e+00> : vector<8xf32>
    %3 = vector.multi_reduction <add>, %2, %cst [1] : vector<8x32xf32> to vector<8xf32>
    %4 = vector.shape_cast %3 : vector<8xf32> to vector<8x1xf32>
    %cst_3 = arith.constant 3.200000e+01 : f32
    %5 = vector.broadcast %cst_3 : f32 to vector<8x1xf32>
    %6 = arith.divf %4, %5 : vector<8x1xf32>
    %7 = vector.broadcast %6 : vector<8x1xf32> to vector<8x32xf32>
    %8 = arith.subf %2, %7 : vector<8x32xf32>
    %9 = arith.mulf %8, %8 : vector<8x32xf32>
    %cst_4 = arith.constant dense<0.000000e+00> : vector<8xf32>
    %10 = vector.multi_reduction <add>, %9, %cst_4 [1] : vector<8x32xf32> to vector<8xf32>
    %11 = vector.shape_cast %10 : vector<8xf32> to vector<8x1xf32>
    %cst_5 = arith.constant 3.200000e+01 : f32
    %12 = vector.broadcast %cst_5 : f32 to vector<8x1xf32>
    %13 = arith.divf %11, %12 : vector<8x1xf32>
    %14 = vector.broadcast %6 : vector<8x1xf32> to vector<8x32xf32>
    %15 = arith.subf %2, %14 : vector<8x32xf32>
    %cst_6 = arith.constant 9.99999974E-6 : f32
    %16 = vector.broadcast %cst_6 : f32 to vector<8x1xf32>
    %17 = arith.addf %13, %16 : vector<8x1xf32>
    %18 = math.rsqrt %17 : vector<8x1xf32>
    %19 = vector.broadcast %18 : vector<8x1xf32> to vector<8x32xf32>
    %20 = arith.mulf %15, %19 : vector<8x32xf32>
    %c0_7 = arith.constant 0 : index
    %c0_8 = arith.constant 0 : index
    %21 = vector.load %arg3[%c0_7, %c0_8] : memref<1x32xf32, #tpu.memory_space<vmem>>, vector<1x32xf32>
    %22 = vector.broadcast %21 : vector<1x32xf32> to vector<8x32xf32>
    %23 = arith.mulf %20, %22 : vector<8x32xf32>
    %c0_9 = arith.constant 0 : index
    %c0_10 = arith.constant 0 : index
    %24 = vector.load %arg4[%c0_9, %c0_10] : memref<1x32xf32, #tpu.memory_space<vmem>>, vector<1x32xf32>
    %25 = vector.broadcast %24 : vector<1x32xf32> to vector<8x32xf32>
    %26 = arith.addf %23, %25 : vector<8x32xf32>
    %c0_11 = arith.constant 0 : index
    %c0_12 = arith.constant 0 : index
    %27 = vector.load %arg5[%c0_11, %c0_12] : memref<8x32xf32, #tpu.memory_space<vmem>>, vector<8x32xf32>
    tpu.vector_store %arg5[%c0_11, %c0_12], %26 {strides = array<i32>} : memref<8x32xf32, #tpu.memory_space<vmem>>, vector<8x32xf32>,
    return
  }
  func.func @transform_0(%arg0: i32) -> (i32, i32) {
    %c0_i32 = arith.constant 0 : i32
    %c0_i32_0 = arith.constant 0 : i32
    return %arg0, %c0_i32 : i32, i32
  }
  func.func @transform_1(%arg0: i32) -> (i32, i32) {
    %c0_i32 = arith.constant 0 : i32
    %c0_i32_0 = arith.constant 0 : i32
    return %arg0, %c0_i32 : i32, i32
  }
  func.func @transform_2(%arg0: i32) -> (i32, i32) {
    %c0_i32 = arith.constant 0 : i32
    %c0_i32_0 = arith.constant 0 : i32
    %c0_i32_1 = arith.constant 0 : i32
    return %c0_i32, %c0_i32_0 : i32, i32
  }
  func.func @transform_3(%arg0: i32) -> (i32, i32) {
    %c0_i32 = arith.constant 0 : i32
    %c0_i32_0 = arith.constant 0 : i32
    %c0_i32_1 = arith.constant 0 : i32
    return %c0_i32, %c0_i32_0 : i32, i32
  }
  func.func @transform_4(%arg0: i32) -> (i32, i32) {
    %c0_i32 = arith.constant 0 : i32
    %c0_i32_0 = arith.constant 0 : i32
    return %arg0, %c0_i32 : i32, i32
  }
}

module attributes {stable_mosaic.version = 11 : i64} {
  func.func @_dense_kernel(%arg0: i32, %arg1: i32, %arg2: i32, %arg3: memref<8x128xbf16, #tpu.memory_space<vmem>>, %arg4: memref<128x128xbf16, #tpu.memory_space<vmem>>, %arg5: memref<1x128xf32, #tpu.memory_space<vmem>>, %arg6: memref<8x128xf32, #tpu.memory_space<vmem>>, %arg7: memref<8x128xf32, #tpu.memory_space<vmem>>) attributes {dimension_semantics = [#tpu.dimension_semantics<parallel>, #tpu.dimension_semantics<parallel>, #tpu.dimension_semantics<arbitrary>], iteration_bounds = array<i64: 1, 1, 1>, scalar_prefetch = 0 : i64, scratch_operands = 1 : i64, tpu.core_type = #tpu.core_type<tc>, window_params = [{transform_indices = @transform_0, window_bounds = array<i64: 8, 128>}, {transform_indices = @transform_1, window_bounds = array<i64: 128, 128>}, {transform_indices = @transform_2, window_bounds = array<i64: 1, 128>}, {transform_indices = @transform_3, window_bounds = array<i64: 8, 128>}]} {
    %c0_i32 = arith.constant 0 : i32
    %0 = arith.cmpi eq, %arg2, %c0_i32 : i32
    %1 = arith.extui %0 : i1 to i32
    %c0_i32_0 = arith.constant 0 : i32
    %2 = arith.cmpi ne, %1, %c0_i32_0 : i32
    scf.if %2 {
      %cst_10 = arith.constant 0.000000e+00 : f32
      %12 = vector.broadcast %cst_10 : f32 to vector<8x128xf32>
      %c0_11 = arith.constant 0 : index
      %c0_12 = arith.constant 0 : index
      %13 = vector.load %arg7[%c0_11, %c0_12] : memref<8x128xf32, #tpu.memory_space<vmem>>, vector<8x128xf32>
      tpu.vector_store %arg7[%c0_11, %c0_12], %12 {strides = array<i32>} : memref<8x128xf32, #tpu.memory_space<vmem>>, vector<8x128xf32>,
    } else {
    }
    %c0 = arith.constant 0 : index
    %c0_1 = arith.constant 0 : index
    %3 = vector.load %arg7[%c0, %c0_1] : memref<8x128xf32, #tpu.memory_space<vmem>>, vector<8x128xf32>
    %c0_2 = arith.constant 0 : index
    %c0_3 = arith.constant 0 : index
    %4 = vector.load %arg3[%c0_2, %c0_3] : memref<8x128xbf16, #tpu.memory_space<vmem>>, vector<8x128xbf16>
    %c0_4 = arith.constant 0 : index
    %c0_5 = arith.constant 0 : index
    %5 = vector.load %arg4[%c0_4, %c0_5] : memref<128x128xbf16, #tpu.memory_space<vmem>>, vector<128x128xbf16>
    %cst = arith.constant dense<0.000000e+00> : vector<8x128xf32>
    %6 = tpu.matmul %4, %5, %cst {dimension_numbers = #tpu.dot_dimension_numbers<[1], [0], [0], [1], [0, 0, 1, 1], [], []>} : vector<8x128xbf16>, vector<128x128xbf16>, vector<8x128xf32> -> vector<8x128xf32>
    %7 = arith.addf %3, %6 : vector<8x128xf32>
    %c0_6 = arith.constant 0 : index
    %c0_7 = arith.constant 0 : index
    %8 = vector.load %arg7[%c0_6, %c0_7] : memref<8x128xf32, #tpu.memory_space<vmem>>, vector<8x128xf32>
    tpu.vector_store %arg7[%c0_6, %c0_7], %7 {strides = array<i32>} : memref<8x128xf32, #tpu.memory_space<vmem>>, vector<8x128xf32>,
    %c0_i32_8 = arith.constant 0 : i32
    %9 = arith.cmpi eq, %arg2, %c0_i32_8 : i32
    %10 = arith.extui %9 : i1 to i32
    %c0_i32_9 = arith.constant 0 : i32
    %11 = arith.cmpi ne, %10, %c0_i32_9 : i32
    scf.if %11 {
      %c0_10 = arith.constant 0 : index
      %c0_11 = arith.constant 0 : index
      %12 = vector.load %arg7[%c0_10, %c0_11] : memref<8x128xf32, #tpu.memory_space<vmem>>, vector<8x128xf32>
      %c0_12 = arith.constant 0 : index
      %c0_13 = arith.constant 0 : index
      %13 = vector.load %arg5[%c0_12, %c0_13] : memref<1x128xf32, #tpu.memory_space<vmem>>, vector<1x128xf32>
      %14 = vector.broadcast %13 : vector<1x128xf32> to vector<8x128xf32>
      %15 = arith.addf %12, %14 : vector<8x128xf32>
      %cst_14 = arith.constant 0.000000e+00 : f32
      %16 = vector.broadcast %cst_14 : f32 to vector<8x128xf32>
      %17 = arith.maximumf %15, %16 : vector<8x128xf32>
      %c0_15 = arith.constant 0 : index
      %c0_16 = arith.constant 0 : index
      %18 = vector.load %arg6[%c0_15, %c0_16] : memref<8x128xf32, #tpu.memory_space<vmem>>, vector<8x128xf32>
      tpu.vector_store %arg6[%c0_15, %c0_16], %17 {strides = array<i32>} : memref<8x128xf32, #tpu.memory_space<vmem>>, vector<8x128xf32>,
    } else {
    }
    return
  }
  func.func @transform_0(%arg0: i32, %arg1: i32, %arg2: i32) -> (i32, i32) {
    %c0_i32 = arith.constant 0 : i32
    return %arg0, %arg2 : i32, i32
  }
  func.func @transform_1(%arg0: i32, %arg1: i32, %arg2: i32) -> (i32, i32) {
    %c0_i32 = arith.constant 0 : i32
    return %arg2, %arg1 : i32, i32
  }
  func.func @transform_2(%arg0: i32, %arg1: i32, %arg2: i32) -> (i32, i32) {
    %c0_i32 = arith.constant 0 : i32
    %c0_i32_0 = arith.constant 0 : i32
    return %c0_i32, %arg1 : i32, i32
  }
  func.func @transform_3(%arg0: i32, %arg1: i32, %arg2: i32) -> (i32, i32) {
    %c0_i32 = arith.constant 0 : i32
    return %arg0, %arg1 : i32, i32
  }
}

module attributes {stable_mosaic.version = 11 : i64} {
  func.func @_dense_kernel(%arg0: i32, %arg1: i32, %arg2: i32, %arg3: memref<16x128xbf16, #tpu.memory_space<vmem>>, %arg4: memref<128x128xbf16, #tpu.memory_space<vmem>>, %arg5: memref<1x128xf32, #tpu.memory_space<vmem>>, %arg6: memref<16x128xf32, #tpu.memory_space<vmem>>, %arg7: memref<16x128xf32, #tpu.memory_space<vmem>>) attributes {dimension_semantics = [#tpu.dimension_semantics<parallel>, #tpu.dimension_semantics<parallel>, #tpu.dimension_semantics<arbitrary>], iteration_bounds = array<i64: 1, 1, 1>, scalar_prefetch = 0 : i64, scratch_operands = 1 : i64, tpu.core_type = #tpu.core_type<tc>, window_params = [{transform_indices = @transform_0, window_bounds = array<i64: 16, 128>}, {transform_indices = @transform_1, window_bounds = array<i64: 128, 128>}, {transform_indices = @transform_2, window_bounds = array<i64: 1, 128>}, {transform_indices = @transform_3, window_bounds = array<i64: 16, 128>}]} {
    %c0_i32 = arith.constant 0 : i32
    %0 = arith.cmpi eq, %arg2, %c0_i32 : i32
    %1 = arith.extui %0 : i1 to i32
    %c0_i32_0 = arith.constant 0 : i32
    %2 = arith.cmpi ne, %1, %c0_i32_0 : i32
    scf.if %2 {
      %cst_10 = arith.constant 0.000000e+00 : f32
      %12 = vector.broadcast %cst_10 : f32 to vector<16x128xf32>
      %c0_11 = arith.constant 0 : index
      %c0_12 = arith.constant 0 : index
      %13 = vector.load %arg7[%c0_11, %c0_12] : memref<16x128xf32, #tpu.memory_space<vmem>>, vector<16x128xf32>
      tpu.vector_store %arg7[%c0_11, %c0_12], %12 {strides = array<i32>} : memref<16x128xf32, #tpu.memory_space<vmem>>, vector<16x128xf32>,
    } else {
    }
    %c0 = arith.constant 0 : index
    %c0_1 = arith.constant 0 : index
    %3 = vector.load %arg7[%c0, %c0_1] : memref<16x128xf32, #tpu.memory_space<vmem>>, vector<16x128xf32>
    %c0_2 = arith.constant 0 : index
    %c0_3 = arith.constant 0 : index
    %4 = vector.load %arg3[%c0_2, %c0_3] : memref<16x128xbf16, #tpu.memory_space<vmem>>, vector<16x128xbf16>
    %c0_4 = arith.constant 0 : index
    %c0_5 = arith.constant 0 : index
    %5 = vector.load %arg4[%c0_4, %c0_5] : memref<128x128xbf16, #tpu.memory_space<vmem>>, vector<128x128xbf16>
    %cst = arith.constant dense<0.000000e+00> : vector<16x128xf32>
    %6 = tpu.matmul %4, %5, %cst {dimension_numbers = #tpu.dot_dimension_numbers<[1], [0], [0], [1], [0, 0, 1, 1], [], []>} : vector<16x128xbf16>, vector<128x128xbf16>, vector<16x128xf32> -> vector<16x128xf32>
    %7 = arith.addf %3, %6 : vector<16x128xf32>
    %c0_6 = arith.constant 0 : index
    %c0_7 = arith.constant 0 : index
    %8 = vector.load %arg7[%c0_6, %c0_7] : memref<16x128xf32, #tpu.memory_space<vmem>>, vector<16x128xf32>
    tpu.vector_store %arg7[%c0_6, %c0_7], %7 {strides = array<i32>} : memref<16x128xf32, #tpu.memory_space<vmem>>, vector<16x128xf32>,
    %c0_i32_8 = arith.constant 0 : i32
    %9 = arith.cmpi eq, %arg2, %c0_i32_8 : i32
    %10 = arith.extui %9 : i1 to i32
    %c0_i32_9 = arith.constant 0 : i32
    %11 = arith.cmpi ne, %10, %c0_i32_9 : i32
    scf.if %11 {
      %c0_10 = arith.constant 0 : index
      %c0_11 = arith.constant 0 : index
      %12 = vector.load %arg7[%c0_10, %c0_11] : memref<16x128xf32, #tpu.memory_space<vmem>>, vector<16x128xf32>
      %c0_12 = arith.constant 0 : index
      %c0_13 = arith.constant 0 : index
      %13 = vector.load %arg5[%c0_12, %c0_13] : memref<1x128xf32, #tpu.memory_space<vmem>>, vector<1x128xf32>
      %14 = vector.broadcast %13 : vector<1x128xf32> to vector<16x128xf32>
      %15 = arith.addf %12, %14 : vector<16x128xf32>
      %cst_14 = arith.constant 0.000000e+00 : f32
      %16 = vector.broadcast %cst_14 : f32 to vector<16x128xf32>
      %17 = arith.maximumf %15, %16 : vector<16x128xf32>
      %c0_15 = arith.constant 0 : index
      %c0_16 = arith.constant 0 : index
      %18 = vector.load %arg6[%c0_15, %c0_16] : memref<16x128xf32, #tpu.memory_space<vmem>>, vector<16x128xf32>
      tpu.vector_store %arg6[%c0_15, %c0_16], %17 {strides = array<i32>} : memref<16x128xf32, #tpu.memory_space<vmem>>, vector<16x128xf32>,
    } else {
    }
    return
  }
  func.func @transform_0(%arg0: i32, %arg1: i32, %arg2: i32) -> (i32, i32) {
    %c0_i32 = arith.constant 0 : i32
    return %arg0, %arg2 : i32, i32
  }
  func.func @transform_1(%arg0: i32, %arg1: i32, %arg2: i32) -> (i32, i32) {
    %c0_i32 = arith.constant 0 : i32
    return %arg2, %arg1 : i32, i32
  }
  func.func @transform_2(%arg0: i32, %arg1: i32, %arg2: i32) -> (i32, i32) {
    %c0_i32 = arith.constant 0 : i32
    %c0_i32_0 = arith.constant 0 : i32
    return %c0_i32, %arg1 : i32, i32
  }
  func.func @transform_3(%arg0: i32, %arg1: i32, %arg2: i32) -> (i32, i32) {
    %c0_i32 = arith.constant 0 : i32
    return %arg0, %arg1 : i32, i32
  }
}

module attributes {stable_mosaic.version = 11 : i64} {
  func.func @_attn_kernel(%arg0: i32, %arg1: memref<1x4x8x8xbf16, #tpu.memory_space<vmem>>, %arg2: memref<1x4x3x8xbf16, #tpu.memory_space<vmem>>, %arg3: memref<1x4x3x8xbf16, #tpu.memory_space<vmem>>, %arg4: memref<1x8x32xf32, #tpu.memory_space<vmem>>) attributes {dimension_semantics = [#tpu.dimension_semantics<parallel>], iteration_bounds = array<i64: 2>, scalar_prefetch = 0 : i64, scratch_operands = 0 : i64, tpu.core_type = #tpu.core_type<tc>, window_params = [{transform_indices = @transform_0, window_bounds = array<i64: 1, 4, 8, 8>}, {transform_indices = @transform_1, window_bounds = array<i64: 1, 4, 3, 8>}, {transform_indices = @transform_2, window_bounds = array<i64: 1, 4, 3, 8>}, {transform_indices = @transform_3, window_bounds = array<i64: 1, 8, 32>}]} {
    %c0 = arith.constant 0 : index
    %c0_0 = arith.constant 0 : index
    %c0_1 = arith.constant 0 : index
    %c0_2 = arith.constant 0 : index
    %0 = vector.load %arg1[%c0, %c0_0, %c0_1, %c0_2] : memref<1x4x8x8xbf16, #tpu.memory_space<vmem>>, vector<1x4x8x8xbf16>
    %1 = vector.shape_cast %0 : vector<1x4x8x8xbf16> to vector<4x8x8xbf16>
    %c0_3 = arith.constant 0 : index
    %c0_4 = arith.constant 0 : index
    %c0_5 = arith.constant 0 : index
    %c0_6 = arith.constant 0 : index
    %2 = vector.load %arg2[%c0_3, %c0_4, %c0_5, %c0_6] : memref<1x4x3x8xbf16, #tpu.memory_space<vmem>>, vector<1x4x3x8xbf16>
    %3 = vector.shape_cast %2 : vector<1x4x3x8xbf16> to vector<4x3x8xbf16>
    %c0_7 = arith.constant 0 : index
    %c0_8 = arith.constant 0 : index
    %c0_9 = arith.constant 0 : index
    %c0_10 = arith.constant 0 : index
    %4 = vector.load %arg3[%c0_7, %c0_8, %c0_9, %c0_10] : memref<1x4x3x8xbf16, #tpu.memory_space<vmem>>, vector<1x4x3x8xbf16>
    %5 = vector.shape_cast %4 : vector<1x4x3x8xbf16> to vector<4x3x8xbf16>
    "tpu.trace_start"() <{level = 10 : i32, message = "hqd,hkd->hqk"}> : () -> ()
    %cst = arith.constant dense<0.000000e+00> : vector<4x8x3xf32>
    %6 = tpu.matmul %1, %3, %cst {dimension_numbers = #tpu.dot_dimension_numbers<[2], [2], [1], [1], [0, 0, 0, 1, 1, 1], [0], [0]>} : vector<4x8x8xbf16>, vector<4x3x8xbf16>, vector<4x8x3xf32> -> vector<4x8x3xf32>
    "tpu.trace_stop"() : () -> ()
    %cst_11 = arith.constant 0.353553385 : f32
    %7 = vector.broadcast %cst_11 : f32 to vector<4x8x3xf32>
    %8 = arith.mulf %6, %7 : vector<4x8x3xf32>
    %cst_12 = arith.constant dense<0xFF800000> : vector<4x8xf32>
    %9 = vector.multi_reduction <maximumf>, %8, %cst_12 [2] : vector<4x8x3xf32> to vector<4x8xf32>
    %10 = vector.shape_cast %9 : vector<4x8xf32> to vector<4x8x1xf32>
    %11 = vector.broadcast %10 : vector<4x8x1xf32> to vector<4x8x3xf32>
    %12 = arith.subf %8, %11 : vector<4x8x3xf32>
    %13 = math.exp %12 : vector<4x8x3xf32>
    %cst_13 = arith.constant dense<0.000000e+00> : vector<4x8xf32>
    %14 = vector.multi_reduction <add>, %13, %cst_13 [2] : vector<4x8x3xf32> to vector<4x8xf32>
    %15 = vector.shape_cast %14 : vector<4x8xf32> to vector<4x8x1xf32>
    %16 = arith.truncf %13 : vector<4x8x3xf32> to vector<4x8x3xbf16>
    "tpu.trace_start"() <{level = 10 : i32, message = "hqk,hkd->hqd"}> : () -> ()
    %cst_14 = arith.constant dense<0.000000e+00> : vector<4x8x8xf32>
    %17 = tpu.matmul %16, %5, %cst_14 {dimension_numbers = #tpu.dot_dimension_numbers<[2], [1], [1], [2], [0, 0, 0, 1, 1, 2], [0], [0]>} : vector<4x8x3xbf16>, vector<4x3x8xbf16>, vector<4x8x8xf32> -> vector<4x8x8xf32>
    "tpu.trace_stop"() : () -> ()
    %18 = tpu.reciprocal %15 {approx = true} : vector<4x8x1xf32> -> vector<4x8x1xf32>
    %19 = vector.broadcast %18 : vector<4x8x1xf32> to vector<4x8x8xf32>
    %20 = arith.mulf %17, %19 : vector<4x8x8xf32>
    %21 = vector.extract_strided_slice %20 {offsets = [0, 0, 0], sizes = [1, 8, 8], strides = [1, 1, 1]} : vector<4x8x8xf32> to vector<1x8x8xf32>
    %22 = vector.shape_cast %21 : vector<1x8x8xf32> to vector<8x8xf32>
    %23 = vector.extract_strided_slice %20 {offsets = [1, 0, 0], sizes = [1, 8, 8], strides = [1, 1, 1]} : vector<4x8x8xf32> to vector<1x8x8xf32>
    %24 = vector.shape_cast %23 : vector<1x8x8xf32> to vector<8x8xf32>
    %25 = vector.extract_strided_slice %20 {offsets = [2, 0, 0], sizes = [1, 8, 8], strides = [1, 1, 1]} : vector<4x8x8xf32> to vector<1x8x8xf32>
    %26 = vector.shape_cast %25 : vector<1x8x8xf32> to vector<8x8xf32>
    %27 = vector.extract_strided_slice %20 {offsets = [3, 0, 0], sizes = [1, 8, 8], strides = [1, 1, 1]} : vector<4x8x8xf32> to vector<1x8x8xf32>
    %28 = vector.shape_cast %27 : vector<1x8x8xf32> to vector<8x8xf32>
    %29 = tpu.concatenate %22, %24, %26, %28 in 1 : vector<8x8xf32>, vector<8x8xf32>, vector<8x8xf32>, vector<8x8xf32> -> vector<8x32xf32>
    %c0_15 = arith.constant 0 : index
    %c0_16 = arith.constant 0 : index
    %c0_17 = arith.constant 0 : index
    %30 = vector.load %arg4[%c0_15, %c0_16, %c0_17] : memref<1x8x32xf32, #tpu.memory_space<vmem>>, vector<1x8x32xf32>
    %31 = vector.shape_cast %30 : vector<1x8x32xf32> to vector<8x32xf32>
    %32 = vector.shape_cast %29 : vector<8x32xf32> to vector<1x8x32xf32>
    tpu.vector_store %arg4[%c0_15, %c0_16, %c0_17], %32 {strides = array<i32>} : memref<1x8x32xf32, #tpu.memory_space<vmem>>, vector<1x8x32xf32>,
    return
  }
  func.func @transform_0(%arg0: i32) -> (i32, i32, i32, i32) {
    %c0_i32 = arith.constant 0 : i32
    %c0_i32_0 = arith.constant 0 : i32
    %c0_i32_1 = arith.constant 0 : i32
    %c0_i32_2 = arith.constant 0 : i32
    return %arg0, %c0_i32, %c0_i32_0, %c0_i32_1 : i32, i32, i32, i32
  }
  func.func @transform_1(%arg0: i32) -> (i32, i32, i32, i32) {
    %c0_i32 = arith.constant 0 : i32
    %c0_i32_0 = arith.constant 0 : i32
    %c0_i32_1 = arith.constant 0 : i32
    %c0_i32_2 = arith.constant 0 : i32
    return %arg0, %c0_i32, %c0_i32_0, %c0_i32_1 : i32, i32, i32, i32
  }
  func.func @transform_2(%arg0: i32) -> (i32, i32, i32, i32) {
    %c0_i32 = arith.constant 0 : i32
    %c0_i32_0 = arith.constant 0 : i32
    %c0_i32_1 = arith.constant 0 : i32
    %c0_i32_2 = arith.constant 0 : i32
    return %arg0, %c0_i32, %c0_i32_0, %c0_i32_1 : i32, i32, i32, i32
  }
  func.func @transform_3(%arg0: i32) -> (i32, i32, i32) {
    %c0_i32 = arith.constant 0 : i32
    %c0_i32_0 = arith.constant 0 : i32
    %c0_i32_1 = arith.constant 0 : i32
    return %arg0, %c0_i32, %c0_i32_0 : i32, i32, i32
  }
}

module attributes {stable_mosaic.version = 11 : i64} {
  func.func @_dense_kernel(%arg0: i32, %arg1: i32, %arg2: i32, %arg3: memref<16x128xbf16, #tpu.memory_space<vmem>>, %arg4: memref<128x128xbf16, #tpu.memory_space<vmem>>, %arg5: memref<1x128xf32, #tpu.memory_space<vmem>>, %arg6: memref<16x128xf32, #tpu.memory_space<vmem>>, %arg7: memref<16x128xf32, #tpu.memory_space<vmem>>) attributes {dimension_semantics = [#tpu.dimension_semantics<parallel>, #tpu.dimension_semantics<parallel>, #tpu.dimension_semantics<arbitrary>], iteration_bounds = array<i64: 1, 1, 1>, scalar_prefetch = 0 : i64, scratch_operands = 1 : i64, tpu.core_type = #tpu.core_type<tc>, window_params = [{transform_indices = @transform_0, window_bounds = array<i64: 16, 128>}, {transform_indices = @transform_1, window_bounds = array<i64: 128, 128>}, {transform_indices = @transform_2, window_bounds = array<i64: 1, 128>}, {transform_indices = @transform_3, window_bounds = array<i64: 16, 128>}]} {
    %c0_i32 = arith.constant 0 : i32
    %0 = arith.cmpi eq, %arg2, %c0_i32 : i32
    %1 = arith.extui %0 : i1 to i32
    %c0_i32_0 = arith.constant 0 : i32
    %2 = arith.cmpi ne, %1, %c0_i32_0 : i32
    scf.if %2 {
      %cst_10 = arith.constant 0.000000e+00 : f32
      %12 = vector.broadcast %cst_10 : f32 to vector<16x128xf32>
      %c0_11 = arith.constant 0 : index
      %c0_12 = arith.constant 0 : index
      %13 = vector.load %arg7[%c0_11, %c0_12] : memref<16x128xf32, #tpu.memory_space<vmem>>, vector<16x128xf32>
      tpu.vector_store %arg7[%c0_11, %c0_12], %12 {strides = array<i32>} : memref<16x128xf32, #tpu.memory_space<vmem>>, vector<16x128xf32>,
    } else {
    }
    %c0 = arith.constant 0 : index
    %c0_1 = arith.constant 0 : index
    %3 = vector.load %arg7[%c0, %c0_1] : memref<16x128xf32, #tpu.memory_space<vmem>>, vector<16x128xf32>
    %c0_2 = arith.constant 0 : index
    %c0_3 = arith.constant 0 : index
    %4 = vector.load %arg3[%c0_2, %c0_3] : memref<16x128xbf16, #tpu.memory_space<vmem>>, vector<16x128xbf16>
    %c0_4 = arith.constant 0 : index
    %c0_5 = arith.constant 0 : index
    %5 = vector.load %arg4[%c0_4, %c0_5] : memref<128x128xbf16, #tpu.memory_space<vmem>>, vector<128x128xbf16>
    %cst = arith.constant dense<0.000000e+00> : vector<16x128xf32>
    %6 = tpu.matmul %4, %5, %cst {dimension_numbers = #tpu.dot_dimension_numbers<[1], [0], [0], [1], [0, 0, 1, 1], [], []>} : vector<16x128xbf16>, vector<128x128xbf16>, vector<16x128xf32> -> vector<16x128xf32>
    %7 = arith.addf %3, %6 : vector<16x128xf32>
    %c0_6 = arith.constant 0 : index
    %c0_7 = arith.constant 0 : index
    %8 = vector.load %arg7[%c0_6, %c0_7] : memref<16x128xf32, #tpu.memory_space<vmem>>, vector<16x128xf32>
    tpu.vector_store %arg7[%c0_6, %c0_7], %7 {strides = array<i32>} : memref<16x128xf32, #tpu.memory_space<vmem>>, vector<16x128xf32>,
    %c0_i32_8 = arith.constant 0 : i32
    %9 = arith.cmpi eq, %arg2, %c0_i32_8 : i32
    %10 = arith.extui %9 : i1 to i32
    %c0_i32_9 = arith.constant 0 : i32
    %11 = arith.cmpi ne, %10, %c0_i32_9 : i32
    scf.if %11 {
      %c0_10 = arith.constant 0 : index
      %c0_11 = arith.constant 0 : index
      %12 = vector.load %arg7[%c0_10, %c0_11] : memref<16x128xf32, #tpu.memory_space<vmem>>, vector<16x128xf32>
      %c0_12 = arith.constant 0 : index
      %c0_13 = arith.constant 0 : index
      %13 = vector.load %arg5[%c0_12, %c0_13] : memref<1x128xf32, #tpu.memory_space<vmem>>, vector<1x128xf32>
      %14 = vector.broadcast %13 : vector<1x128xf32> to vector<16x128xf32>
      %15 = arith.addf %12, %14 : vector<16x128xf32>
      %cst_14 = arith.constant dense<0xFF800000> : vector<16xf32>
      %16 = vector.multi_reduction <maximumf>, %15, %cst_14 [1] : vector<16x128xf32> to vector<16xf32>
      %17 = vector.shape_cast %16 : vector<16xf32> to vector<16x1xf32>
      %18 = vector.broadcast %17 : vector<16x1xf32> to vector<16x128xf32>
      %19 = arith.subf %15, %18 : vector<16x128xf32>
      %20 = math.exp %19 : vector<16x128xf32>
      %cst_15 = arith.constant dense<0.000000e+00> : vector<16xf32>
      %21 = vector.multi_reduction <add>, %20, %cst_15 [1] : vector<16x128xf32> to vector<16xf32>
      %22 = vector.shape_cast %21 : vector<16xf32> to vector<16x1xf32>
      %23 = math.log %22 : vector<16x1xf32>
      %24 = vector.broadcast %23 : vector<16x1xf32> to vector<16x128xf32>
      %25 = arith.subf %19, %24 : vector<16x128xf32>
      %c0_16 = arith.constant 0 : index
      %c0_17 = arith.constant 0 : index
      %26 = vector.load %arg6[%c0_16, %c0_17] : memref<16x128xf32, #tpu.memory_space<vmem>>, vector<16x128xf32>
      tpu.vector_store %arg6[%c0_16, %c0_17], %25 {strides = array<i32>} : memref<16x128xf32, #tpu.memory_space<vmem>>, vector<16x128xf32>,
    } else {
    }
    return
  }
  func.func @transform_0(%arg0: i32, %arg1: i32, %arg2: i32) -> (i32, i32) {
    %c0_i32 = arith.constant 0 : i32
    return %arg0, %arg2 : i32, i32
  }
  func.func @transform_1(%arg0: i32, %arg1: i32, %arg2: i32) -> (i32, i32) {
    %c0_i32 = arith.constant 0 : i32
    return %arg2, %arg1 : i32, i32
  }
  func.func @transform_2(%arg0: i32, %arg1: i32, %arg2: i32) -> (i32, i32) {
    %c0_i32 = arith.constant 0 : i32
    %c0_i32_0 = arith.constant 0 : i32
    return %c0_i32, %arg1 : i32, i32
  }
  func.func @transform_3(%arg0: i32, %arg1: i32, %arg2: i32) -> (i32, i32) {
    %c0_i32 = arith.constant 0 : i32
    return %arg0, %arg1 : i32, i32
  }
}

module attributes {stable_mosaic.version = 11 : i64} {
  func.func @_dense_kernel(%arg0: i32, %arg1: i32, %arg2: i32, %arg3: memref<8x128xbf16, #tpu.memory_space<vmem>>, %arg4: memref<128x128xbf16, #tpu.memory_space<vmem>>, %arg5: memref<1x128xf32, #tpu.memory_space<vmem>>, %arg6: memref<8x128xf32, #tpu.memory_space<vmem>>, %arg7: memref<8x128xf32, #tpu.memory_space<vmem>>) attributes {dimension_semantics = [#tpu.dimension_semantics<parallel>, #tpu.dimension_semantics<parallel>, #tpu.dimension_semantics<arbitrary>], iteration_bounds = array<i64: 1, 1, 1>, scalar_prefetch = 0 : i64, scratch_operands = 1 : i64, tpu.core_type = #tpu.core_type<tc>, window_params = [{transform_indices = @transform_0, window_bounds = array<i64: 8, 128>}, {transform_indices = @transform_1, window_bounds = array<i64: 128, 128>}, {transform_indices = @transform_2, window_bounds = array<i64: 1, 128>}, {transform_indices = @transform_3, window_bounds = array<i64: 8, 128>}]} {
    %c0_i32 = arith.constant 0 : i32
    %0 = arith.cmpi eq, %arg2, %c0_i32 : i32
    %1 = arith.extui %0 : i1 to i32
    %c0_i32_0 = arith.constant 0 : i32
    %2 = arith.cmpi ne, %1, %c0_i32_0 : i32
    scf.if %2 {
      %cst_10 = arith.constant 0.000000e+00 : f32
      %12 = vector.broadcast %cst_10 : f32 to vector<8x128xf32>
      %c0_11 = arith.constant 0 : index
      %c0_12 = arith.constant 0 : index
      %13 = vector.load %arg7[%c0_11, %c0_12] : memref<8x128xf32, #tpu.memory_space<vmem>>, vector<8x128xf32>
      tpu.vector_store %arg7[%c0_11, %c0_12], %12 {strides = array<i32>} : memref<8x128xf32, #tpu.memory_space<vmem>>, vector<8x128xf32>,
    } else {
    }
    %c0 = arith.constant 0 : index
    %c0_1 = arith.constant 0 : index
    %3 = vector.load %arg7[%c0, %c0_1] : memref<8x128xf32, #tpu.memory_space<vmem>>, vector<8x128xf32>
    %c0_2 = arith.constant 0 : index
    %c0_3 = arith.constant 0 : index
    %4 = vector.load %arg3[%c0_2, %c0_3] : memref<8x128xbf16, #tpu.memory_space<vmem>>, vector<8x128xbf16>
    %c0_4 = arith.constant 0 : index
    %c0_5 = arith.constant 0 : index
    %5 = vector.load %arg4[%c0_4, %c0_5] : memref<128x128xbf16, #tpu.memory_space<vmem>>, vector<128x128xbf16>
    %cst = arith.constant dense<0.000000e+00> : vector<8x128xf32>
    %6 = tpu.matmul %4, %5, %cst {dimension_numbers = #tpu.dot_dimension_numbers<[1], [0], [0], [1], [0, 0, 1, 1], [], []>} : vector<8x128xbf16>, vector<128x128xbf16>, vector<8x128xf32> -> vector<8x128xf32>
    %7 = arith.addf %3, %6 : vector<8x128xf32>
    %c0_6 = arith.constant 0 : index
    %c0_7 = arith.constant 0 : index
    %8 = vector.load %arg7[%c0_6, %c0_7] : memref<8x128xf32, #tpu.memory_space<vmem>>, vector<8x128xf32>
    tpu.vector_store %arg7[%c0_6, %c0_7], %7 {strides = array<i32>} : memref<8x128xf32, #tpu.memory_space<vmem>>, vector<8x128xf32>,
    %c0_i32_8 = arith.constant 0 : i32
    %9 = arith.cmpi eq, %arg2, %c0_i32_8 : i32
    %10 = arith.extui %9 : i1 to i32
    %c0_i32_9 = arith.constant 0 : i32
    %11 = arith.cmpi ne, %10, %c0_i32_9 : i32
    scf.if %11 {
      %c0_10 = arith.constant 0 : index
      %c0_11 = arith.constant 0 : index
      %12 = vector.load %arg7[%c0_10, %c0_11] : memref<8x128xf32, #tpu.memory_space<vmem>>, vector<8x128xf32>
      %c0_12 = arith.constant 0 : index
      %c0_13 = arith.constant 0 : index
      %13 = vector.load %arg5[%c0_12, %c0_13] : memref<1x128xf32, #tpu.memory_space<vmem>>, vector<1x128xf32>
      %14 = vector.broadcast %13 : vector<1x128xf32> to vector<8x128xf32>
      %15 = arith.addf %12, %14 : vector<8x128xf32>
      %cst_14 = arith.constant dense<0xFF800000> : vector<8xf32>
      %16 = vector.multi_reduction <maximumf>, %15, %cst_14 [1] : vector<8x128xf32> to vector<8xf32>
      %17 = vector.shape_cast %16 : vector<8xf32> to vector<8x1xf32>
      %18 = vector.broadcast %17 : vector<8x1xf32> to vector<8x128xf32>
      %19 = arith.subf %15, %18 : vector<8x128xf32>
      %20 = math.exp %19 : vector<8x128xf32>
      %cst_15 = arith.constant dense<0.000000e+00> : vector<8xf32>
      %21 = vector.multi_reduction <add>, %20, %cst_15 [1] : vector<8x128xf32> to vector<8xf32>
      %22 = vector.shape_cast %21 : vector<8xf32> to vector<8x1xf32>
      %23 = math.log %22 : vector<8x1xf32>
      %24 = vector.broadcast %23 : vector<8x1xf32> to vector<8x128xf32>
      %25 = arith.subf %19, %24 : vector<8x128xf32>
      %c0_16 = arith.constant 0 : index
      %c0_17 = arith.constant 0 : index
      %26 = vector.load %arg6[%c0_16, %c0_17] : memref<8x128xf32, #tpu.memory_space<vmem>>, vector<8x128xf32>
      tpu.vector_store %arg6[%c0_16, %c0_17], %25 {strides = array<i32>} : memref<8x128xf32, #tpu.memory_space<vmem>>, vector<8x128xf32>,
    } else {
    }
    return
  }
  func.func @transform_0(%arg0: i32, %arg1: i32, %arg2: i32) -> (i32, i32) {
    %c0_i32 = arith.constant 0 : i32
    return %arg0, %arg2 : i32, i32
  }
  func.func @transform_1(%arg0: i32, %arg1: i32, %arg2: i32) -> (i32, i32) {
    %c0_i32 = arith.constant 0 : i32
    return %arg2, %arg1 : i32, i32
  }
  func.func @transform_2(%arg0: i32, %arg1: i32, %arg2: i32) -> (i32, i32) {
    %c0_i32 = arith.constant 0 : i32
    %c0_i32_0 = arith.constant 0 : i32
    return %c0_i32, %arg1 : i32, i32
  }
  func.func @transform_3(%arg0: i32, %arg1: i32, %arg2: i32) -> (i32, i32) {
    %c0_i32 = arith.constant 0 : i32
    return %arg0, %arg1 : i32, i32
  }
}

</mosaic_0001>

<llo_original>
// kernel: early_transformer_forward.55
$region0: #{early_transformer_forward.55}
  #allocation0 [shape = 'u32[]', space=smem, size = 0x4, offset = 0x4, fixed_abs, tag = 'smem constant byte address 0x4 - core index']
  #allocation1 [shape = 'u32[144,128]{1,0:T(1,128)}', space=vmem, size = 0x12000, scoped, tag = 'internal scratch']
  %s0 = inlined_call_operand.vmem [shape: f32[16,32], index: 0, kind: input, shape index: {}]
  %s1 = inlined_call_operand.vmem [shape: f32[1,32], index: 1, kind: input, shape index: {}]
  %s2 = inlined_call_operand.vmem [shape: f32[1,32], index: 2, kind: input, shape index: {}]
  %s3 = inlined_call_operand.vmem [shape: f32[16,32], index: 3, kind: output, shape index: {}]
  %s4 = sld [smem:[#allocation0]]
  $region22: #{early_transformer_forward.55} parent=0
    _
  %s6 = ssub.s32 1, %s4
  %s7 = scalar_select 0, %s6, %s4
  // Predicated region
  $region2: #{early_transformer_forward.55} parent=0 // pred_check
    _
  $region3: #{early_transformer_forward.55} parent=0 // pred_check_branch
    %9 = sbr.rel (0) target = $region5
  $region4: #{early_transformer_forward.55} parent=0 // pred_region
    _
  $region5: #{early_transformer_forward.55} parent=0 // pred_fallthru
    _
  // Predicated region
  $region6: #{early_transformer_forward.55} parent=0 // pred_check
    _
  $region7: #{early_transformer_forward.55} parent=0 // pred_check_branch
    %11 = sbr.rel (0) target = $region9
  $region8: #{early_transformer_forward.55} parent=0 // pred_region
    _
  $region9: #{early_transformer_forward.55} parent=0 // pred_fallthru
    _
  // Predicated region
  $region10: #{early_transformer_forward.55} parent=0 // pred_check
    _
  $region11: #{early_transformer_forward.55} parent=0 // pred_check_branch
    %13 = sbr.rel (0) target = $region13
  $region12: #{early_transformer_forward.55} parent=0 // pred_region
    _
  $region13: #{early_transformer_forward.55} parent=0 // pred_fallthru
    _
  %v14 = vld [vmem:[%s0] sm:$0xff]
  %v15 = vld [vmem:[%s0 + $0x8] sm:$0xff]
  %vm16 = vcmask 261120
  %v17 = vsel %vm16, %v14, 0.0
  %18 = vadd.xlane.f32.xlu0 %v17
  %v19 = vpop.xlane.xlu0 %18
  %v20 = vsel %vm16, %v15, 0.0
  %21 = vadd.xlane.f32.xlu0 %v20
  %v22 = vpop.xlane.xlu0 %21
  %v23 = vrcp.pop 32.0
  %v24 = vmul.f32 %v19, %v23
  %v25 = vmul.f32 %v22, %v23
  %v26 = vsub.f32 %v14, %v24
  %v27 = vsub.f32 %v15, %v25
  %v28 = vmul.f32 %v26, %v26
  %v29 = vmul.f32 %v27, %v27
  %v30 = vsel %vm16, %v28, 0.0
  %31 = vadd.xlane.f32.xlu0 %v30
  %v32 = vpop.xlane.xlu0 %31
  %v33 = vsel %vm16, %v29, 0.0
  %34 = vadd.xlane.f32.xlu0 %v33
  %v35 = vpop.xlane.xlu0 %34
  %v36 = vmul.f32 %v32, %v23
  %v37 = vmul.f32 %v35, %v23
  %v38 = vadd.f32 %v36, 1e-05
  %v39 = vadd.f32 %v37, 1e-05
  %v40 = vrsqrt.pop %v38
  %v41 = vrsqrt.pop %v39
  %v42 = vmul.f32 %v26, %v40
  %v43 = vmul.f32 %v27, %v41
  %v44 = vld [vmem:[%s1] sm:$0x1]
  %v46 = vlaneseq
  %v47 = vshrl.u32 %v46, 7
  %v48 = vsub.s32 0, %v47
  %v49 = vrot.slane %v44, %v48
  %v51 = vmul.f32 %v42, %v49
  %v52 = vmul.f32 %v43, %v49
  %v53 = vld [vmem:[%s2] sm:$0x1]
  %v55 = vlaneseq
  %v56 = vshrl.u32 %v55, 7
  %v57 = vsub.s32 0, %v56
  %v58 = vrot.slane %v53, %v57
  %v60 = vadd.f32 %v51, %v58
  %v61 = vadd.f32 %v52, %v58
  %62 = vst.msk [vmem:[%s3] sm:$0xff] %vm16, %v60
  %63 = vst.msk [vmem:[%s3 + $0x8] sm:$0xff] %vm16, %v61
  // Predicated region
  $region14: #{early_transformer_forward.55} parent=0 // pred_check
    _
  $region15: #{early_transformer_forward.55} parent=0 // pred_check_branch
    %65 = sbr.rel (0) target = $region17
  $region16: #{early_transformer_forward.55} parent=0 // pred_region
    _
  $region17: #{early_transformer_forward.55} parent=0 // pred_fallthru
    _
  // Predicated region
  $region18: #{early_transformer_forward.55} parent=0 // pred_check
    _
  $region19: #{early_transformer_forward.55} parent=0 // pred_check_branch
    %67 = sbr.rel (0) target = $region21
  $region20: #{early_transformer_forward.55} parent=0 // pred_region
    _
  $region21: #{early_transformer_forward.55} parent=0 // pred_fallthru
    _

// kernel: early_transformer_forward.56
$region0: #{early_transformer_forward.56}
  #allocation0 [shape = 'u32[]', space=smem, size = 0x4, offset = 0x4, fixed_abs, tag = 'smem constant byte address 0x4 - core index']
  #allocation1 [shape = 'u32[144,128]{1,0:T(1,128)}', space=vmem, size = 0x12000, scoped, tag = 'internal scratch']
  #allocation2 [shape = 'f32[16,128]{1,0:T(8,128)}', space=vmem, size = 0x2000, scoped, tag = 'scratch operand']
  %s0 = inlined_call_operand.vmem [shape: bf16[16,128], index: 0, kind: input, shape index: {}]
  %s1 = inlined_call_operand.vmem [shape: bf16[128,128], index: 1, kind: input, shape index: {}]
  %s2 = inlined_call_operand.vmem [shape: f32[1,128], index: 2, kind: input, shape index: {}]
  %s3 = inlined_call_operand.vmem [shape: f32[16,128], index: 3, kind: output, shape index: {}]
  %s4 = sld [smem:[#allocation0]]
  $region30: #{early_transformer_forward.56} parent=0
    _
  %s6 = ssub.s32 1, %s4
  %s7 = scalar_select 0, %s6, %s4
  // Predicated region
  $region2: #{early_transformer_forward.56} parent=0 // pred_check
    _
  $region3: #{early_transformer_forward.56} parent=0 // pred_check_branch
    %9 = sbr.rel (0) target = $region5
  $region4: #{early_transformer_forward.56} parent=0 // pred_region
    _
  $region5: #{early_transformer_forward.56} parent=0 // pred_fallthru
    _
  // Predicated region
  $region6: #{early_transformer_forward.56} parent=0 // pred_check
    _
  $region7: #{early_transformer_forward.56} parent=0 // pred_check_branch
    %11 = sbr.rel (0) target = $region9
  $region8: #{early_transformer_forward.56} parent=0 // pred_region
    _
  $region9: #{early_transformer_forward.56} parent=0 // pred_fallthru
    _
  // Predicated region
  $region10: #{early_transformer_forward.56} parent=0 // pred_check
    _
  $region11: #{early_transformer_forward.56} parent=0 // pred_check_branch
    %13 = sbr.rel (0) target = $region13
  $region12: #{early_transformer_forward.56} parent=0 // pred_region
    _
  $region13: #{early_transformer_forward.56} parent=0 // pred_fallthru
    _
  %p15 = scmp.eq.s32.totalorder 0, 0
  // Predicated region
  $region14: #{early_transformer_forward.56} parent=0 // pred_check
    %p16 = pneg %p15
  $region15: #{early_transformer_forward.56} parent=0 // pred_check_branch
    %18 = sbr.rel (%p16) target = $region17
  $region16: #{early_transformer_forward.56} parent=0 // pred_region
    %19 = vst [vmem:[#allocation2] sm:$0xff] 0.0
    %20 = vst [vmem:[#allocation2 + $0x8] sm:$0xff] 0.0
  $region17: #{early_transformer_forward.56} parent=0 // pred_fallthru
    _
  %v21 = vld [vmem:[#allocation2] sm:$0xff]
  %v22 = vld [vmem:[#allocation2 + $0x8] sm:$0xff]
  %v23 = vld [vmem:[%s0] sm:$0xf]
  %v24 = vld [vmem:[%s0 + $0x4] sm:$0xf]
  %v25 = vld [vmem:[%s1] sm:$0xf]
  %v26 = vld [vmem:[%s1 + $0x4] sm:$0xf]
  %v27 = vld [vmem:[%s1 + $0x8] sm:$0xf]
  %v28 = vld [vmem:[%s1 + $0xc] sm:$0xf]
  %v29 = vld [vmem:[%s1 + $0x10] sm:$0xf]
  %v30 = vld [vmem:[%s1 + $0x14] sm:$0xf]
  %v31 = vld [vmem:[%s1 + $0x18] sm:$0xf]
  %v32 = vld [vmem:[%s1 + $0x1c] sm:$0xf]
  %v33 = vld [vmem:[%s1 + $0x20] sm:$0xf]
  %v34 = vld [vmem:[%s1 + $0x24] sm:$0xf]
  %v35 = vld [vmem:[%s1 + $0x28] sm:$0xf]
  %v36 = vld [vmem:[%s1 + $0x2c] sm:$0xf]
  %v37 = vld [vmem:[%s1 + $0x30] sm:$0xf]
  %v38 = vld [vmem:[%s1 + $0x34] sm:$0xf]
  %v39 = vld [vmem:[%s1 + $0x38] sm:$0xf]
  %v40 = vld [vmem:[%s1 + $0x3c] sm:$0xf]
  %v43 = vunpack.c.l.b16 %v23
  %v44 = vunpack.c.l.b16 %v24
  %v45 = vpack.c.b16 %v44, %v43
  %v63 = vunpack.c.l.b16 %v25
  %v64 = vunpack.c.l.b16 %v26
  %v65 = vunpack.c.l.b16 %v27
  %v66 = vunpack.c.l.b16 %v28
  %v67 = vunpack.c.l.b16 %v29
  %v68 = vunpack.c.l.b16 %v30
  %v69 = vunpack.c.l.b16 %v31
  %v70 = vunpack.c.l.b16 %v32
  %v71 = vunpack.c.l.b16 %v33
  %v72 = vunpack.c.l.b16 %v34
  %v73 = vunpack.c.l.b16 %v35
  %v74 = vunpack.c.l.b16 %v36
  %v75 = vunpack.c.l.b16 %v37
  %v76 = vunpack.c.l.b16 %v38
  %v77 = vunpack.c.l.b16 %v39
  %v78 = vunpack.c.l.b16 %v40
  %v79 = vpack.c.b16 %v64, %v63
  %v80 = vpack.c.b16 %v66, %v65
  %v81 = vpack.c.b16 %v68, %v67
  %v82 = vpack.c.b16 %v70, %v69
  %v83 = vpack.c.b16 %v72, %v71
  %v84 = vpack.c.b16 %v74, %v73
  %v85 = vpack.c.b16 %v76, %v75
  %v86 = vpack.c.b16 %v78, %v77
  %95 = vmatprep.subr.bf16.mxu0 0
  %96 = vmatpush1.bf16.msra.mxu0 %v86
  %97 = vmatprep.subr.bf16.mxu0 0
  %98 = vmatpush1.bf16.msra.mxu0 %v85
  %99 = vmatprep.subr.bf16.mxu0 0
  %100 = vmatpush1.bf16.msra.mxu0 %v84
  %101 = vmatprep.subr.bf16.mxu0 0
  %102 = vmatpush1.bf16.msra.mxu0 %v83
  %103 = vmatprep.subr.bf16.mxu0 0
  %104 = vmatpush1.bf16.msra.mxu0 %v82
  %105 = vmatprep.subr.bf16.mxu0 0
  %106 = vmatpush1.bf16.msra.mxu0 %v81
  %107 = vmatprep.subr.bf16.mxu0 0
  %108 = vmatpush1.bf16.msra.mxu0 %v80
  %109 = vmatprep.subr.bf16.mxu0 0
  %110 = vmatpush1.bf16.msra.mxu0 %v79
  %111 = vmatprep.subr.bf16.mxu0 0
  %112 = vmatpush2.bf16.msra.mxu0 0
  %113 = vmatprep.subr.bf16.mxu0 0
  %114 = vmatpush2.bf16.msra.mxu0 0
  %115 = vmatprep.subr.bf16.mxu0 0
  %116 = vmatpush2.bf16.msra.mxu0 0
  %117 = vmatprep.subr.bf16.mxu0 0
  %118 = vmatpush2.bf16.msra.mxu0 0
  %119 = vmatprep.subr.bf16.mxu0 0
  %120 = vmatpush2.bf16.msra.mxu0 0
  %121 = vmatprep.subr.bf16.mxu0 0
  %122 = vmatpush2.bf16.msra.mxu0 0
  %123 = vmatprep.subr.bf16.mxu0 0
  %124 = vmatpush2.bf16.msra.mxu0 0
  %125 = vmatprep.subr.bf16.mxu0 0
  %126 = vmatpush2.bf16.msra.mxu0 0
  %127 = vmatprep.mubr.bf16.mxu0 0
  %128 = vmatmul.mubr.bf16.gmra.mxu0 %v45
  %v129 = vpop.f32.mrf.mxu0
  %v130 = vadd.f32 0.0, %v129
  %v131 = vpop.f32.mrf.mxu0
  %v132 = vpop.f32.mrf.mxu0
  %v133 = vadd.f32 0.0, %v132
  %v134 = vpop.f32.mrf.mxu0
  %135 = vdwg.mxu0
  %v136 = vadd.f32 %v21, %v130
  %v137 = vadd.f32 %v22, %v133
  %138 = vst [vmem:[#allocation2] sm:$0xff] %v136
  %139 = vst [vmem:[#allocation2 + $0x8] sm:$0xff] %v137
  // Predicated region
  $region18: #{early_transformer_forward.56} parent=0 // pred_check
    %p140 = pneg %p15
  $region19: #{early_transformer_forward.56} parent=0 // pred_check_branch
    %142 = sbr.rel (%p140) target = $region21
  $region20: #{early_transformer_forward.56} parent=0 // pred_region
    %v143 = vld [vmem:[#allocation2] sm:$0xff]
    %v144 = vld [vmem:[#allocation2 + $0x8] sm:$0xff]
    %v145 = vld [vmem:[%s2] sm:$0x1]
    %v147 = vlaneseq
    %v148 = vshrl.u32 %v147, 7
    %v149 = vsub.s32 0, %v148
    %v150 = vrot.slane %v145, %v149
    %v152 = vadd.f32 %v143, %v150
    %v153 = vadd.f32 %v144, %v150
    %154 = vst [vmem:[%s3] sm:$0xff] %v152
    %155 = vst [vmem:[%s3 + $0x8] sm:$0xff] %v153
  $region21: #{early_transformer_forward.56} parent=0 // pred_fallthru
    _
  // Predicated region
  $region22: #{early_transformer_forward.56} parent=0 // pred_check
    _
  $region23: #{early_transformer_forward.56} parent=0 // pred_check_branch
    %157 = sbr.rel (0) target = $region25
  $region24: #{early_transformer_forward.56} parent=0 // pred_region
    _
  $region25: #{early_transformer_forward.56} parent=0 // pred_fallthru
    _
  // Predicated region
  $region26: #{early_transformer_forward.56} parent=0 // pred_check
    _
  $region27: #{early_transformer_forward.56} parent=0 // pred_check_branch
    %159 = sbr.rel (0) target = $region29
  $region28: #{early_transformer_forward.56} parent=0 // pred_region
    _
  $region29: #{early_transformer_forward.56} parent=0 // pred_fallthru
    _

// kernel: early_transformer_forward.58
$region0: #{early_transformer_forward.58}
  #allocation0 [shape = 'u32[]', space=smem, size = 0x4, offset = 0x4, fixed_abs, tag = 'smem constant byte address 0x4 - core index']
  #allocation1 [shape = 'u32[144,128]{1,0:T(1,128)}', space=vmem, size = 0x12000, scoped, tag = 'internal scratch']
  #allocation2 [shape = 'f32[16,128]{1,0:T(8,128)}', space=vmem, size = 0x2000, scoped, tag = 'scratch operand']
  %s0 = inlined_call_operand.vmem [shape: bf16[16,128], index: 0, kind: input, shape index: {}]
  %s1 = inlined_call_operand.vmem [shape: bf16[128,128], index: 1, kind: input, shape index: {}]
  %s2 = inlined_call_operand.vmem [shape: f32[1,128], index: 2, kind: input, shape index: {}]
  %s3 = inlined_call_operand.vmem [shape: f32[16,128], index: 3, kind: input, shape index: {}]
  %s4 = inlined_call_operand.vmem [shape: f32[16,128], index: 4, kind: output, shape index: {}]
  %s5 = sld [smem:[#allocation0]]
  $region34: #{early_transformer_forward.58} parent=0
    _
  %s7 = ssub.s32 1, %s5
  %s8 = scalar_select 0, %s7, %s5
  // Predicated region
  $region2: #{early_transformer_forward.58} parent=0 // pred_check
    _
  $region3: #{early_transformer_forward.58} parent=0 // pred_check_branch
    %10 = sbr.rel (0) target = $region5
  $region4: #{early_transformer_forward.58} parent=0 // pred_region
    _
  $region5: #{early_transformer_forward.58} parent=0 // pred_fallthru
    _
  // Predicated region
  $region6: #{early_transformer_forward.58} parent=0 // pred_check
    _
  $region7: #{early_transformer_forward.58} parent=0 // pred_check_branch
    %12 = sbr.rel (0) target = $region9
  $region8: #{early_transformer_forward.58} parent=0 // pred_region
    _
  $region9: #{early_transformer_forward.58} parent=0 // pred_fallthru
    _
  // Predicated region
  $region10: #{early_transformer_forward.58} parent=0 // pred_check
    _
  $region11: #{early_transformer_forward.58} parent=0 // pred_check_branch
    %14 = sbr.rel (0) target = $region13
  $region12: #{early_transformer_forward.58} parent=0 // pred_region
    _
  $region13: #{early_transformer_forward.58} parent=0 // pred_fallthru
    _
  // Predicated region
  $region14: #{early_transformer_forward.58} parent=0 // pred_check
    _
  $region15: #{early_transformer_forward.58} parent=0 // pred_check_branch
    %16 = sbr.rel (0) target = $region17
  $region16: #{early_transformer_forward.58} parent=0 // pred_region
    _
  $region17: #{early_transformer_forward.58} parent=0 // pred_fallthru
    _
  %p18 = scmp.eq.s32.totalorder 0, 0
  // Predicated region
  $region18: #{early_transformer_forward.58} parent=0 // pred_check
    %p19 = pneg %p18
  $region19: #{early_transformer_forward.58} parent=0 // pred_check_branch
    %21 = sbr.rel (%p19) target = $region21
  $region20: #{early_transformer_forward.58} parent=0 // pred_region
    %22 = vst [vmem:[#allocation2] sm:$0xff] 0.0
    %23 = vst [vmem:[#allocation2 + $0x8] sm:$0xff] 0.0
  $region21: #{early_transformer_forward.58} parent=0 // pred_fallthru
    _
  %v24 = vld [vmem:[#allocation2] sm:$0xff]
  %v25 = vld [vmem:[#allocation2 + $0x8] sm:$0xff]
  %v26 = vld [vmem:[%s0] sm:$0xf]
  %v27 = vld [vmem:[%s0 + $0x4] sm:$0xf]
  %v28 = vld [vmem:[%s1] sm:$0xf]
  %v29 = vld [vmem:[%s1 + $0x4] sm:$0xf]
  %v30 = vld [vmem:[%s1 + $0x8] sm:$0xf]
  %v31 = vld [vmem:[%s1 + $0xc] sm:$0xf]
  %v32 = vld [vmem:[%s1 + $0x10] sm:$0xf]
  %v33 = vld [vmem:[%s1 + $0x14] sm:$0xf]
  %v34 = vld [vmem:[%s1 + $0x18] sm:$0xf]
  %v35 = vld [vmem:[%s1 + $0x1c] sm:$0xf]
  %v36 = vld [vmem:[%s1 + $0x20] sm:$0xf]
  %v37 = vld [vmem:[%s1 + $0x24] sm:$0xf]
  %v38 = vld [vmem:[%s1 + $0x28] sm:$0xf]
  %v39 = vld [vmem:[%s1 + $0x2c] sm:$0xf]
  %v40 = vld [vmem:[%s1 + $0x30] sm:$0xf]
  %v41 = vld [vmem:[%s1 + $0x34] sm:$0xf]
  %v42 = vld [vmem:[%s1 + $0x38] sm:$0xf]
  %v43 = vld [vmem:[%s1 + $0x3c] sm:$0xf]
  %v46 = vunpack.c.l.b16 %v26
  %v47 = vunpack.c.l.b16 %v27
  %v48 = vpack.c.b16 %v47, %v46
  %v66 = vunpack.c.l.b16 %v28
  %v67 = vunpack.c.l.b16 %v29
  %v68 = vunpack.c.l.b16 %v30
  %v69 = vunpack.c.l.b16 %v31
  %v70 = vunpack.c.l.b16 %v32
  %v71 = vunpack.c.l.b16 %v33
  %v72 = vunpack.c.l.b16 %v34
  %v73 = vunpack.c.l.b16 %v35
  %v74 = vunpack.c.l.b16 %v36
  %v75 = vunpack.c.l.b16 %v37
  %v76 = vunpack.c.l.b16 %v38
  %v77 = vunpack.c.l.b16 %v39
  %v78 = vunpack.c.l.b16 %v40
  %v79 = vunpack.c.l.b16 %v41
  %v80 = vunpack.c.l.b16 %v42
  %v81 = vunpack.c.l.b16 %v43
  %v82 = vpack.c.b16 %v67, %v66
  %v83 = vpack.c.b16 %v69, %v68
  %v84 = vpack.c.b16 %v71, %v70
  %v85 = vpack.c.b16 %v73, %v72
  %v86 = vpack.c.b16 %v75, %v74
  %v87 = vpack.c.b16 %v77, %v76
  %v88 = vpack.c.b16 %v79, %v78
  %v89 = vpack.c.b16 %v81, %v80
  %98 = vmatprep.subr.bf16.mxu0 0
  %99 = vmatpush1.bf16.msra.mxu0 %v89
  %100 = vmatprep.subr.bf16.mxu0 0
  %101 = vmatpush1.bf16.msra.mxu0 %v88
  %102 = vmatprep.subr.bf16.mxu0 0
  %103 = vmatpush1.bf16.msra.mxu0 %v87
  %104 = vmatprep.subr.bf16.mxu0 0
  %105 = vmatpush1.bf16.msra.mxu0 %v86
  %106 = vmatprep.subr.bf16.mxu0 0
  %107 = vmatpush1.bf16.msra.mxu0 %v85
  %108 = vmatprep.subr.bf16.mxu0 0
  %109 = vmatpush1.bf16.msra.mxu0 %v84
  %110 = vmatprep.subr.bf16.mxu0 0
  %111 = vmatpush1.bf16.msra.mxu0 %v83
  %112 = vmatprep.subr.bf16.mxu0 0
  %113 = vmatpush1.bf16.msra.mxu0 %v82
  %114 = vmatprep.subr.bf16.mxu0 0
  %115 = vmatpush2.bf16.msra.mxu0 0
  %116 = vmatprep.subr.bf16.mxu0 0
  %117 = vmatpush2.bf16.msra.mxu0 0
  %118 = vmatprep.subr.bf16.mxu0 0
  %119 = vmatpush2.bf16.msra.mxu0 0
  %120 = vmatprep.subr.bf16.mxu0 0
  %121 = vmatpush2.bf16.msra.mxu0 0
  %122 = vmatprep.subr.bf16.mxu0 0
  %123 = vmatpush2.bf16.msra.mxu0 0
  %124 = vmatprep.subr.bf16.mxu0 0
  %125 = vmatpush2.bf16.msra.mxu0 0
  %126 = vmatprep.subr.bf16.mxu0 0
  %127 = vmatpush2.bf16.msra.mxu0 0
  %128 = vmatprep.subr.bf16.mxu0 0
  %129 = vmatpush2.bf16.msra.mxu0 0
  %130 = vmatprep.mubr.bf16.mxu0 0
  %131 = vmatmul.mubr.bf16.gmra.mxu0 %v48
  %v132 = vpop.f32.mrf.mxu0
  %v133 = vadd.f32 0.0, %v132
  %v134 = vpop.f32.mrf.mxu0
  %v135 = vpop.f32.mrf.mxu0
  %v136 = vadd.f32 0.0, %v135
  %v137 = vpop.f32.mrf.mxu0
  %138 = vdwg.mxu0
  %v139 = vadd.f32 %v24, %v133
  %v140 = vadd.f32 %v25, %v136
  %141 = vst [vmem:[#allocation2] sm:$0xff] %v139
  %142 = vst [vmem:[#allocation2 + $0x8] sm:$0xff] %v140
  // Predicated region
  $region22: #{early_transformer_forward.58} parent=0 // pred_check
    %p143 = pneg %p18
  $region23: #{early_transformer_forward.58} parent=0 // pred_check_branch
    %145 = sbr.rel (%p143) target = $region25
  $region24: #{early_transformer_forward.58} parent=0 // pred_region
    %v146 = vld [vmem:[#allocation2] sm:$0xff]
    %v147 = vld [vmem:[#allocation2 + $0x8] sm:$0xff]
    %v148 = vld [vmem:[%s2] sm:$0x1]
    %v150 = vlaneseq
    %v151 = vshrl.u32 %v150, 7
    %v152 = vsub.s32 0, %v151
    %v153 = vrot.slane %v148, %v152
    %v155 = vadd.f32 %v146, %v153
    %v156 = vadd.f32 %v147, %v153
    %v157 = vld [vmem:[%s3] sm:$0xff]
    %v158 = vld [vmem:[%s3 + $0x8] sm:$0xff]
    %v159 = vadd.f32 %v155, %v157
    %v160 = vadd.f32 %v156, %v158
    %161 = vst [vmem:[%s4] sm:$0xff] %v159
    %162 = vst [vmem:[%s4 + $0x8] sm:$0xff] %v160
  $region25: #{early_transformer_forward.58} parent=0 // pred_fallthru
    _
  // Predicated region
  $region26: #{early_transformer_forward.58} parent=0 // pred_check
    _
  $region27: #{early_transformer_forward.58} parent=0 // pred_check_branch
    %164 = sbr.rel (0) target = $region29
  $region28: #{early_transformer_forward.58} parent=0 // pred_region
    _
  $region29: #{early_transformer_forward.58} parent=0 // pred_fallthru
    _
  // Predicated region
  $region30: #{early_transformer_forward.58} parent=0 // pred_check
    _
  $region31: #{early_transformer_forward.58} parent=0 // pred_check_branch
    %166 = sbr.rel (0) target = $region33
  $region32: #{early_transformer_forward.58} parent=0 // pred_region
    _
  $region33: #{early_transformer_forward.58} parent=0 // pred_fallthru
    _

// kernel: early_transformer_forward.57
$region0: #{early_transformer_forward.57}
  #allocation0 [shape = 'u32[]', space=smem, size = 0x4, offset = 0x4, fixed_abs, tag = 'smem constant byte address 0x4 - core index']
  #allocation1 [shape = 'u32[144,128]{1,0:T(1,128)}', space=vmem, size = 0x12000, scoped, tag = 'internal scratch']
  %s0 = inlined_call_operand.vmem [shape: bf16[2,4,8,8], index: 0, kind: input, shape index: {}]
  %s1 = inlined_call_operand.vmem [shape: bf16[2,4,8,8], index: 1, kind: input, shape index: {}]
  %s2 = inlined_call_operand.vmem [shape: bf16[2,4,8,8], index: 2, kind: input, shape index: {}]
  %s3 = inlined_call_operand.vmem [shape: f32[2,1,8], index: 3, kind: input, shape index: {}]
  %s4 = inlined_call_operand.vmem [shape: f32[2,8,32], index: 4, kind: output, shape index: {}]
  %s5 = sld [smem:[#allocation0]]
  $region49: #{early_transformer_forward.57} parent=0
    _
  %s7 = ssub.s32 1, %s5
  %s8 = scalar_select 0, %s7, %s5
  loop: start=0, step=1, limit=4
  $region2: #{early_transformer_forward.57} parent=0 // loop_pre_header
    _
  $region3: #{early_transformer_forward.57} parent=0 // loop_header
    %s10 = sphi 0, %s14
    %p11 = scmp.ge.s32.totalorder %s10, 4
    %s20 = sphi 0, %s22
    %s23 = sphi 0, %s20
    %s24 = sphi 0, %s23
    %s40 = sphi 0, %s24
    %s46 = sphi 0, %s48
    %s49 = sphi 0, %s46
    %s50 = sphi 0, %s49
    %s66 = sphi 0, %s50
    %s72 = sphi 0, %s74
    %s75 = sphi 0, %s72
    %s76 = sphi 0, %s75
    %s92 = sphi 0, %s76
    %s98 = sphi 0, %s100
    %s101 = sphi 0, %s98
    %s102 = sphi 0, %s101
    %s118 = sphi 0, %s102
    %s124 = sphi 0, %s126
    %s127 = sphi 0, %s124
    %s128 = sphi 0, %s127
    %s144 = sphi 0, %s128
  $region4: #{early_transformer_forward.57} parent=0 // loop_header_branch
    %13 = sbr.rel (%p11) target = $region8
  $region5: #{early_transformer_forward.57} parent=0 // loop_body
    %s15 = ssub.s32 %s10, 1
    %s16 = ssub.s32 %s10, 2
    %s17 = sadd.s32 %s10, 1
    %s18 = ssub.s32 %s10, %s17
    %p19 = scmp.eq.s32.totalorder %s18, 0
    %s21 = sadd.s32 %s20, 1
    %s22 = scalar_select %p19, %s20, %s21
    %p25 = pneg %p19
    %p26 = scmp.eq.s32.totalorder %s10, 1
    %p27 = por %p25, %p26
    %p28 = scmp.ne.s32.totalorder %s20, %s23
    %p29 = scmp.eq.s32.totalorder %s10, 0
    %p30 = por %p28, %p29
    %p31 = scmp.ne.s32.totalorder %s20, %s23
    %p32 = scmp.eq.s32.totalorder %s15, 1
    %p33 = por %p31, %p32
    %p34 = scmp.ne.s32.totalorder %s23, %s24
    %p35 = scmp.eq.s32.totalorder %s15, 0
    %p36 = por %p34, %p35
    %p37 = scmp.ne.s32.totalorder %s23, %s24
    %p38 = scmp.eq.s32.totalorder %s16, 1
    %p39 = por %p37, %p38
    %p41 = scmp.ne.s32.totalorder %s24, %s40
    %p42 = scmp.eq.s32.totalorder %s16, 0
    %p43 = por %p41, %p42
    %s44 = ssub.s32 %s10, %s17
    %p45 = scmp.eq.s32.totalorder %s44, 0
    %s47 = sadd.s32 %s46, 1
    %s48 = scalar_select %p45, %s46, %s47
    %p51 = pneg %p45
    %p52 = scmp.eq.s32.totalorder %s10, 1
    %p53 = por %p51, %p52
    %p54 = scmp.ne.s32.totalorder %s46, %s49
    %p55 = scmp.eq.s32.totalorder %s10, 0
    %p56 = por %p54, %p55
    %p57 = scmp.ne.s32.totalorder %s46, %s49
    %p58 = scmp.eq.s32.totalorder %s15, 1
    %p59 = por %p57, %p58
    %p60 = scmp.ne.s32.totalorder %s49, %s50
    %p61 = scmp.eq.s32.totalorder %s15, 0
    %p62 = por %p60, %p61
    %p63 = scmp.ne.s32.totalorder %s49, %s50
    %p64 = scmp.eq.s32.totalorder %s16, 1
    %p65 = por %p63, %p64
    %p67 = scmp.ne.s32.totalorder %s50, %s66
    %p68 = scmp.eq.s32.totalorder %s16, 0
    %p69 = por %p67, %p68
    %s70 = ssub.s32 %s10, %s17
    %p71 = scmp.eq.s32.totalorder %s70, 0
    %s73 = sadd.s32 %s72, 1
    %s74 = scalar_select %p71, %s72, %s73
    %p77 = pneg %p71
    %p78 = scmp.eq.s32.totalorder %s10, 1
    %p79 = por %p77, %p78
    %p80 = scmp.ne.s32.totalorder %s72, %s75
    %p81 = scmp.eq.s32.totalorder %s10, 0
    %p82 = por %p80, %p81
    %p83 = scmp.ne.s32.totalorder %s72, %s75
    %p84 = scmp.eq.s32.totalorder %s15, 1
    %p85 = por %p83, %p84
    %p86 = scmp.ne.s32.totalorder %s75, %s76
    %p87 = scmp.eq.s32.totalorder %s15, 0
    %p88 = por %p86, %p87
    %p89 = scmp.ne.s32.totalorder %s75, %s76
    %p90 = scmp.eq.s32.totalorder %s16, 1
    %p91 = por %p89, %p90
    %p93 = scmp.ne.s32.totalorder %s76, %s92
    %p94 = scmp.eq.s32.totalorder %s16, 0
    %p95 = por %p93, %p94
    %s96 = ssub.s32 %s10, %s17
    %p97 = scmp.eq.s32.totalorder %s96, 0
    %s99 = sadd.s32 %s98, 1
    %s100 = scalar_select %p97, %s98, %s99
    %p103 = pneg %p97
    %p104 = scmp.eq.s32.totalorder %s10, 1
    %p105 = por %p103, %p104
    %p106 = scmp.ne.s32.totalorder %s98, %s101
    %p107 = scmp.eq.s32.totalorder %s10, 0
    %p108 = por %p106, %p107
    %p109 = scmp.ne.s32.totalorder %s98, %s101
    %p110 = scmp.eq.s32.totalorder %s15, 1
    %p111 = por %p109, %p110
    %p112 = scmp.ne.s32.totalorder %s101, %s102
    %p113 = scmp.eq.s32.totalorder %s15, 0
    %p114 = por %p112, %p113
    %p115 = scmp.ne.s32.totalorder %s101, %s102
    %p116 = scmp.eq.s32.totalorder %s16, 1
    %p117 = por %p115, %p116
    %p119 = scmp.ne.s32.totalorder %s102, %s118
    %p120 = scmp.eq.s32.totalorder %s16, 0
    %p121 = por %p119, %p120
    %s122 = ssub.s32 %s10, %s17
    %p123 = scmp.eq.s32.totalorder %s122, 0
    %s125 = sadd.s32 %s124, 1
    %s126 = scalar_select %p123, %s124, %s125
    %p129 = pneg %p123
    %p130 = scmp.eq.s32.totalorder %s10, 1
    %p131 = por %p129, %p130
    %p132 = scmp.ne.s32.totalorder %s124, %s127
    %p133 = scmp.eq.s32.totalorder %s10, 0
    %p134 = por %p132, %p133
    %p135 = scmp.ne.s32.totalorder %s124, %s127
    %p136 = scmp.eq.s32.totalorder %s15, 1
    %p137 = por %p135, %p136
    %p138 = scmp.ne.s32.totalorder %s127, %s128
    %p139 = scmp.eq.s32.totalorder %s15, 0
    %p140 = por %p138, %p139
    %p141 = scmp.ne.s32.totalorder %s127, %s128
    %p142 = scmp.eq.s32.totalorder %s16, 1
    %p143 = por %p141, %p142
    %p145 = scmp.ne.s32.totalorder %s128, %s144
    %p146 = scmp.eq.s32.totalorder %s16, 0
    %p147 = por %p145, %p146
    %p148 = scmp.le.s32.totalorder 1, %s10
    %p149 = scmp.lt.s32.totalorder %s10, 3
    %p150 = pnand %p148, %p149
    %p151 = pneg %p150
    // Predicated region
    $region9: #{early_transformer_forward.57} parent=5 // pred_check
      _
    $region10: #{early_transformer_forward.57} parent=5 // pred_check_branch
      %153 = sbr.rel (%p150) target = $region12
    $region11: #{early_transformer_forward.57} parent=5 // pred_region
      %s154 = ssub.s32 %s10, 1
    $region12: #{early_transformer_forward.57} parent=5 // pred_fallthru
      _
    %p155 = scmp.lt.s32.totalorder %s10, 2
    // Predicated region
    $region13: #{early_transformer_forward.57} parent=5 // pred_check
      %p156 = pneg %p155
    $region14: #{early_transformer_forward.57} parent=5 // pred_check_branch
      %158 = sbr.rel (%p156) target = $region16
    $region15: #{early_transformer_forward.57} parent=5 // pred_region
      // Predicated region
      $region17: #{early_transformer_forward.57} parent=15 // pred_check
        %p159 = pneg %p30
      $region18: #{early_transformer_forward.57} parent=15 // pred_check_branch
        %161 = sbr.rel (%p159) target = $region20
      $region19: #{early_transformer_forward.57} parent=15 // pred_region
        %p162 = scmp.lt.s32.totalorder %s10, 1
        %s163 = scalar_select %p162, %s10, 1
        %s164 = smul.addr %s163, 4
        %s165 = smul.addr %s164, 4
        %s166 = scalar_lea.vmem %s0, %s165
      $region20: #{early_transformer_forward.57} parent=15 // pred_fallthru
        _
      // Predicated region
      $region21: #{early_transformer_forward.57} parent=15 // pred_check
        %p167 = pneg %p56
      $region22: #{early_transformer_forward.57} parent=15 // pred_check_branch
        %169 = sbr.rel (%p167) target = $region24
      $region23: #{early_transformer_forward.57} parent=15 // pred_region
        %p170 = scmp.lt.s32.totalorder %s10, 1
        %s171 = scalar_select %p170, %s10, 1
        %s172 = smul.addr %s171, 4
        %s173 = smul.addr %s172, 4
        %s174 = scalar_lea.vmem %s1, %s173
      $region24: #{early_transformer_forward.57} parent=15 // pred_fallthru
        _
      // Predicated region
      $region25: #{early_transformer_forward.57} parent=15 // pred_check
        %p175 = pneg %p82
      $region26: #{early_transformer_forward.57} parent=15 // pred_check_branch
        %177 = sbr.rel (%p175) target = $region28
      $region27: #{early_transformer_forward.57} parent=15 // pred_region
        %p178 = scmp.lt.s32.totalorder %s10, 1
        %s179 = scalar_select %p178, %s10, 1
        %s180 = smul.addr %s179, 4
        %s181 = smul.addr %s180, 4
        %s182 = scalar_lea.vmem %s2, %s181
      $region28: #{early_transformer_forward.57} parent=15 // pred_fallthru
        _
      // Predicated region
      $region29: #{early_transformer_forward.57} parent=15 // pred_check
        %p183 = pneg %p108
      $region30: #{early_transformer_forward.57} parent=15 // pred_check_branch
        %185 = sbr.rel (%p183) target = $region32
      $region31: #{early_transformer_forward.57} parent=15 // pred_region
        %p186 = scmp.lt.s32.totalorder %s10, 1
        %s187 = scalar_select %p186, %s10, 1
        %s188 = scalar_lea.vmem %s3, %s187
      $region32: #{early_transformer_forward.57} parent=15 // pred_fallthru
        _
    $region16: #{early_transformer_forward.57} parent=5 // pred_fallthru
      _
    %p189 = scmp.le.s32.totalorder 1, %s10
    %p190 = scmp.lt.s32.totalorder %s10, 3
    %p191 = pnand %p189, %p190
    %p192 = pneg %p191
    // Predicated region
    $region33: #{early_transformer_forward.57} parent=5 // pred_check
      _
    $region34: #{early_transformer_forward.57} parent=5 // pred_check_branch
      %194 = sbr.rel (%p191) target = $region36
    $region35: #{early_transformer_forward.57} parent=5 // pred_region
      %s195 = ssub.s32 %s10, 1
      %p196 = scmp.lt.s32.totalorder %s15, 1
      %s197 = scalar_select %p196, %s15, 1
      %s198 = smul.addr %s197, 4
      %s199 = smul.addr %s198, 4
      %s200 = scalar_lea.vmem %s0, %s199
      %p201 = pneg %p36
      %p202 = pneg %p33
      %p203 = scmp.lt.s32.totalorder %s15, 1
      %s204 = scalar_select %p203, %s15, 1
      %s205 = smul.addr %s204, 4
      %s206 = smul.addr %s205, 4
      %s207 = scalar_lea.vmem %s1, %s206
      %p208 = pneg %p62
      %p209 = pneg %p59
      %p210 = scmp.lt.s32.totalorder %s15, 1
      %s211 = scalar_select %p210, %s15, 1
      %s212 = smul.addr %s211, 4
      %s213 = smul.addr %s212, 4
      %s214 = scalar_lea.vmem %s2, %s213
      %p215 = pneg %p88
      %p216 = pneg %p85
      %p217 = scmp.lt.s32.totalorder %s15, 1
      %s218 = scalar_select %p217, %s15, 1
      %s219 = scalar_lea.vmem %s3, %s218
      %p220 = pneg %p114
      %p221 = pneg %p111
      %p222 = pneg %p140
      %p223 = pneg %p137
      %p224 = scmp.lt.s32.totalorder %s15, 1
      %s225 = scalar_select %p224, %s15, 1
      %s226 = smul.addr %s225, 8
      %s227 = scalar_lea.vmem %s4, %s226
      %p228 = scmp.lt.s32.totalorder %s15, 1
      %s229 = scalar_select %p228, %s15, 1
      %s230 = smul.addr %s229, 4
      %s231 = smul.addr %s230, 4
      %s232 = scalar_lea.vmem %s0, %s231
      %p233 = scmp.lt.s32.totalorder %s15, 1
      %s234 = scalar_select %p233, %s15, 1
      %s235 = smul.addr %s234, 4
      %s236 = smul.addr %s235, 4
      %s237 = scalar_lea.vmem %s1, %s236
      %p238 = scmp.lt.s32.totalorder %s15, 1
      %s239 = scalar_select %p238, %s15, 1
      %s240 = smul.addr %s239, 4
      %s241 = smul.addr %s240, 4
      %s242 = scalar_lea.vmem %s2, %s241
      %p243 = scmp.lt.s32.totalorder %s15, 1
      %s244 = scalar_select %p243, %s15, 1
      %s245 = scalar_lea.vmem %s3, %s244
      %p246 = scmp.lt.s32.totalorder %s15, 1
      %s247 = scalar_select %p246, %s15, 1
      %s248 = smul.addr %s247, 8
      %s249 = scalar_lea.vmem %s4, %s248
      %v251 = vld [vmem:[%s232] sm:$0xf]
      %v252 = vld [vmem:[%s232 + $0x4] sm:$0xf]
      %v253 = vld [vmem:[%s232 + $0x8] sm:$0xf]
      %v254 = vld [vmem:[%s232 + $0xc] sm:$0xf]
      %v255 = vld [vmem:[%s237] sm:$0xf]
      %v256 = vld [vmem:[%s237 + $0x4] sm:$0xf]
      %v257 = vld [vmem:[%s237 + $0x8] sm:$0xf]
      %v258 = vld [vmem:[%s237 + $0xc] sm:$0xf]
      %v259 = vld [vmem:[%s242] sm:$0xf]
      %v260 = vld [vmem:[%s242 + $0x4] sm:$0xf]
      %v261 = vld [vmem:[%s242 + $0x8] sm:$0xf]
      %v262 = vld [vmem:[%s242 + $0xc] sm:$0xf]
      %vm263 = vcmask 64512
      %v265 = vsel %vm263, %v251, 0
      %v268 = vsel %vm263, %v255, 0
      %270 = vmatprep.subr.bf16.mxu0 0
      %271 = vmatpush1.bf16.xpose.msra.mxu0 0
      %272 = vmatprep.subr.bf16.mxu0 0
      %273 = vmatpush1.bf16.xpose.msra.mxu0 0
      %274 = vmatprep.subr.bf16.mxu0 0
      %275 = vmatpush1.bf16.xpose.msra.mxu0 0
      %276 = vmatprep.subr.bf16.mxu0 0
      %277 = vmatpush1.bf16.xpose.msra.mxu0 0
      %278 = vmatprep.subr.bf16.mxu0 0
      %279 = vmatpush1.bf16.xpose.msra.mxu0 0
      %280 = vmatprep.subr.bf16.mxu0 0
      %281 = vmatpush1.bf16.xpose.msra.mxu0 0
      %282 = vmatprep.subr.bf16.mxu0 0
      %283 = vmatpush1.bf16.xpose.msra.mxu0 0
      %284 = vmatprep.subr.bf16.mxu0 0
      %285 = vmatpush1.bf16.xpose.msra.mxu0 %v268
      %286 = vmatprep.subr.bf16.mxu0 0
      %287 = vmatpush2.bf16.xpose.msra.mxu0 0
      %288 = vmatprep.subr.bf16.mxu0 0
      %289 = vmatpush2.bf16.xpose.msra.mxu0 0
      %290 = vmatprep.subr.bf16.mxu0 0
      %291 = vmatpush2.bf16.xpose.msra.mxu0 0
      %292 = vmatprep.subr.bf16.mxu0 0
      %293 = vmatpush2.bf16.xpose.msra.mxu0 0
      %294 = vmatprep.subr.bf16.mxu0 0
      %295 = vmatpush2.bf16.xpose.msra.mxu0 0
      %296 = vmatprep.subr.bf16.mxu0 0
      %297 = vmatpush2.bf16.xpose.msra.mxu0 0
      %298 = vmatprep.subr.bf16.mxu0 0
      %299 = vmatpush2.bf16.xpose.msra.mxu0 0
      %300 = vmatprep.subr.bf16.mxu0 0
      %301 = vmatpush2.bf16.xpose.msra.mxu0 0
      %302 = vmatprep.mubr.bf16.mxu0 0
      %303 = vmatmul.mubr.bf16.gmra.mxu0 %v265
      %v304 = vpop.f32.mrf.mxu0
      %v305 = vadd.f32 0.0, %v304
      %v306 = vpop.f32.mrf.mxu0
      %v307 = vpop.f32.mrf.mxu0
      %v308 = vpop.f32.mrf.mxu0
      %309 = vdwg.mxu0
      %v311 = vsel %vm263, %v252, 0
      %v314 = vsel %vm263, %v256, 0
      %316 = vmatprep.subr.bf16.mxu0 0
      %317 = vmatpush1.bf16.xpose.msra.mxu0 0
      %318 = vmatprep.subr.bf16.mxu0 0
      %319 = vmatpush1.bf16.xpose.msra.mxu0 0
      %320 = vmatprep.subr.bf16.mxu0 0
      %321 = vmatpush1.bf16.xpose.msra.mxu0 0
      %322 = vmatprep.subr.bf16.mxu0 0
      %323 = vmatpush1.bf16.xpose.msra.mxu0 0
      %324 = vmatprep.subr.bf16.mxu0 0
      %325 = vmatpush1.bf16.xpose.msra.mxu0 0
      %326 = vmatprep.subr.bf16.mxu0 0
      %327 = vmatpush1.bf16.xpose.msra.mxu0 0
      %328 = vmatprep.subr.bf16.mxu0 0
      %329 = vmatpush1.bf16.xpose.msra.mxu0 0
      %330 = vmatprep.subr.bf16.mxu0 0
      %331 = vmatpush1.bf16.xpose.msra.mxu0 %v314
      %332 = vmatprep.subr.bf16.mxu0 0
      %333 = vmatpush2.bf16.xpose.msra.mxu0 0
      %334 = vmatprep.subr.bf16.mxu0 0
      %335 = vmatpush2.bf16.xpose.msra.mxu0 0
      %336 = vmatprep.subr.bf16.mxu0 0
      %337 = vmatpush2.bf16.xpose.msra.mxu0 0
      %338 = vmatprep.subr.bf16.mxu0 0
      %339 = vmatpush2.bf16.xpose.msra.mxu0 0
      %340 = vmatprep.subr.bf16.mxu0 0
      %341 = vmatpush2.bf16.xpose.msra.mxu0 0
      %342 = vmatprep.subr.bf16.mxu0 0
      %343 = vmatpush2.bf16.xpose.msra.mxu0 0
      %344 = vmatprep.subr.bf16.mxu0 0
      %345 = vmatpush2.bf16.xpose.msra.mxu0 0
      %346 = vmatprep.subr.bf16.mxu0 0
      %347 = vmatpush2.bf16.xpose.msra.mxu0 0
      %348 = vmatprep.mubr.bf16.mxu0 0
      %349 = vmatmul.mubr.bf16.gmra.mxu0 %v311
      %v350 = vpop.f32.mrf.mxu0
      %v351 = vadd.f32 0.0, %v350
      %v352 = vpop.f32.mrf.mxu0
      %v353 = vpop.f32.mrf.mxu0
      %v354 = vpop.f32.mrf.mxu0
      %355 = vdwg.mxu0
      %v357 = vsel %vm263, %v253, 0
      %v360 = vsel %vm263, %v257, 0
      %362 = vmatprep.subr.bf16.mxu0 0
      %363 = vmatpush1.bf16.xpose.msra.mxu0 0
      %364 = vmatprep.subr.bf16.mxu0 0
      %365 = vmatpush1.bf16.xpose.msra.mxu0 0
      %366 = vmatprep.subr.bf16.mxu0 0
      %367 = vmatpush1.bf16.xpose.msra.mxu0 0
      %368 = vmatprep.subr.bf16.mxu0 0
      %369 = vmatpush1.bf16.xpose.msra.mxu0 0
      %370 = vmatprep.subr.bf16.mxu0 0
      %371 = vmatpush1.bf16.xpose.msra.mxu0 0
      %372 = vmatprep.subr.bf16.mxu0 0
      %373 = vmatpush1.bf16.xpose.msra.mxu0 0
      %374 = vmatprep.subr.bf16.mxu0 0
      %375 = vmatpush1.bf16.xpose.msra.mxu0 0
      %376 = vmatprep.subr.bf16.mxu0 0
      %377 = vmatpush1.bf16.xpose.msra.mxu0 %v360
      %378 = vmatprep.subr.bf16.mxu0 0
      %379 = vmatpush2.bf16.xpose.msra.mxu0 0
      %380 = vmatprep.subr.bf16.mxu0 0
      %381 = vmatpush2.bf16.xpose.msra.mxu0 0
      %382 = vmatprep.subr.bf16.mxu0 0
      %383 = vmatpush2.bf16.xpose.msra.mxu0 0
      %384 = vmatprep.subr.bf16.mxu0 0
      %385 = vmatpush2.bf16.xpose.msra.mxu0 0
      %386 = vmatprep.subr.bf16.mxu0 0
      %387 = vmatpush2.bf16.xpose.msra.mxu0 0
      %388 = vmatprep.subr.bf16.mxu0 0
      %389 = vmatpush2.bf16.xpose.msra.mxu0 0
      %390 = vmatprep.subr.bf16.mxu0 0
      %391 = vmatpush2.bf16.xpose.msra.mxu0 0
      %392 = vmatprep.subr.bf16.mxu0 0
      %393 = vmatpush2.bf16.xpose.msra.mxu0 0
      %394 = vmatprep.mubr.bf16.mxu0 0
      %395 = vmatmul.mubr.bf16.gmra.mxu0 %v357
      %v396 = vpop.f32.mrf.mxu0
      %v397 = vadd.f32 0.0, %v396
      %v398 = vpop.f32.mrf.mxu0
      %v399 = vpop.f32.mrf.mxu0
      %v400 = vpop.f32.mrf.mxu0
      %401 = vdwg.mxu0
      %v403 = vsel %vm263, %v254, 0
      %v406 = vsel %vm263, %v258, 0
      %408 = vmatprep.subr.bf16.mxu0 0
      %409 = vmatpush1.bf16.xpose.msra.mxu0 0
      %410 = vmatprep.subr.bf16.mxu0 0
      %411 = vmatpush1.bf16.xpose.msra.mxu0 0
      %412 = vmatprep.subr.bf16.mxu0 0
      %413 = vmatpush1.bf16.xpose.msra.mxu0 0
      %414 = vmatprep.subr.bf16.mxu0 0
      %415 = vmatpush1.bf16.xpose.msra.mxu0 0
      %416 = vmatprep.subr.bf16.mxu0 0
      %417 = vmatpush1.bf16.xpose.msra.mxu0 0
      %418 = vmatprep.subr.bf16.mxu0 0
      %419 = vmatpush1.bf16.xpose.msra.mxu0 0
      %420 = vmatprep.subr.bf16.mxu0 0
      %421 = vmatpush1.bf16.xpose.msra.mxu0 0
      %422 = vmatprep.subr.bf16.mxu0 0
      %423 = vmatpush1.bf16.xpose.msra.mxu0 %v406
      %424 = vmatprep.subr.bf16.mxu0 0
      %425 = vmatpush2.bf16.xpose.msra.mxu0 0
      %426 = vmatprep.subr.bf16.mxu0 0
      %427 = vmatpush2.bf16.xpose.msra.mxu0 0
      %428 = vmatprep.subr.bf16.mxu0 0
      %429 = vmatpush2.bf16.xpose.msra.mxu0 0
      %430 = vmatprep.subr.bf16.mxu0 0
      %431 = vmatpush2.bf16.xpose.msra.mxu0 0
      %432 = vmatprep.subr.bf16.mxu0 0
      %433 = vmatpush2.bf16.xpose.msra.mxu0 0
      %434 = vmatprep.subr.bf16.mxu0 0
      %435 = vmatpush2.bf16.xpose.msra.mxu0 0
      %436 = vmatprep.subr.bf16.mxu0 0
      %437 = vmatpush2.bf16.xpose.msra.mxu0 0
      %438 = vmatprep.subr.bf16.mxu0 0
      %439 = vmatpush2.bf16.xpose.msra.mxu0 0
      %440 = vmatprep.mubr.bf16.mxu0 0
      %441 = vmatmul.mubr.bf16.gmra.mxu0 %v403
      %v442 = vpop.f32.mrf.mxu0
      %v443 = vadd.f32 0.0, %v442
      %v444 = vpop.f32.mrf.mxu0
      %v445 = vpop.f32.mrf.mxu0
      %v446 = vpop.f32.mrf.mxu0
      %447 = vdwg.mxu0
      %v448 = vmul.f32 %v305, 0.35355338
      %v449 = vmul.f32 %v351, 0.35355338
      %v450 = vmul.f32 %v397, 0.35355338
      %v451 = vmul.f32 %v443, 0.35355338
      %v452 = vld [vmem:[%s245] sm:$0x1]
      %v454 = vlaneseq
      %v455 = vshrl.u32 %v454, 7
      %v456 = vsub.s32 0, %v455
      %v457 = vrot.slane %v452, %v456
      %v459 = vadd.f32 %v448, %v457
      %v460 = vadd.f32 %v449, %v457
      %v461 = vadd.f32 %v450, %v457
      %v462 = vadd.f32 %v451, %v457
      %v463 = vlaneseq
      %v464 = vshrl.u32 %v463, 7
      %v465 = vlaneseq
      %v466 = vand.u32 %v465, 127
      %vm467 = vcmp.gt.s32.totalorder %v466, %v464
      %v468 = vsel %vm467, 1, 0
      %vm469 = vcmp.eq.s32.totalorder %v468, 1
      %v470 = vsel %vm469, -1e+30, %v459
      %v471 = vsel %vm469, -1e+30, %v460
      %v472 = vsel %vm469, -1e+30, %v461
      %v473 = vsel %vm469, -1e+30, %v462
      %v474 = vsel %vm263, %v470, -inf
      %475 = vmax.xlane.f32.xlu0 %v474
      %v476 = vpop.xlane.xlu0 %475
      %v477 = vsel %vm263, %v471, -inf
      %478 = vmax.xlane.f32.xlu0 %v477
      %v479 = vpop.xlane.xlu0 %478
      %v480 = vsel %vm263, %v472, -inf
      %481 = vmax.xlane.f32.xlu0 %v480
      %v482 = vpop.xlane.xlu0 %481
      %v483 = vsel %vm263, %v473, -inf
      %484 = vmax.xlane.f32.xlu0 %v483
      %v485 = vpop.xlane.xlu0 %484
      %v486 = vsub.f32 %v470, %v476
      %v487 = vsub.f32 %v471, %v479
      %v488 = vsub.f32 %v472, %v482
      %v489 = vsub.f32 %v473, %v485
      %v490 = vmul.f32 %v486, 1.442695
      %v491 = vpow.pop %v490
      %v492 = vmul.f32 %v487, 1.442695
      %v493 = vpow.pop %v492
      %v494 = vmul.f32 %v488, 1.442695
      %v495 = vpow.pop %v494
      %v496 = vmul.f32 %v489, 1.442695
      %v497 = vpow.pop %v496
      %v498 = vsel %vm263, %v491, 0.0
      %499 = vadd.xlane.f32.xlu0 %v498
      %v500 = vpop.xlane.xlu0 %499
      %v501 = vsel %vm263, %v493, 0.0
      %502 = vadd.xlane.f32.xlu0 %v501
      %v503 = vpop.xlane.xlu0 %502
      %v504 = vsel %vm263, %v495, 0.0
      %505 = vadd.xlane.f32.xlu0 %v504
      %v506 = vpop.xlane.xlu0 %505
      %v507 = vsel %vm263, %v497, 0.0
      %508 = vadd.xlane.f32.xlu0 %v507
      %v509 = vpop.xlane.xlu0 %508
      %v510 = vpack.c.bf16 %v491, %v491
      %v511 = vpack.c.bf16 %v493, %v493
      %v512 = vpack.c.bf16 %v495, %v495
      %v513 = vpack.c.bf16 %v497, %v497
      %v515 = vsel %vm263, %v510, 0
      %vm517 = vcmask 1043456
      %v519 = vsel %vm517, %v259, 0
      %521 = vmatprep.subr.bf16.mxu0 0
      %522 = vmatpush1.bf16.msra.mxu0 0
      %523 = vmatprep.subr.bf16.mxu0 0
      %524 = vmatpush1.bf16.msra.mxu0 0
      %525 = vmatprep.subr.bf16.mxu0 0
      %526 = vmatpush1.bf16.msra.mxu0 0
      %527 = vmatprep.subr.bf16.mxu0 0
      %528 = vmatpush1.bf16.msra.mxu0 0
      %529 = vmatprep.subr.bf16.mxu0 0
      %530 = vmatpush1.bf16.msra.mxu0 0
      %531 = vmatprep.subr.bf16.mxu0 0
      %532 = vmatpush1.bf16.msra.mxu0 0
      %533 = vmatprep.subr.bf16.mxu0 0
      %534 = vmatpush1.bf16.msra.mxu0 0
      %535 = vmatprep.subr.bf16.mxu0 0
      %536 = vmatpush1.bf16.msra.mxu0 %v519
      %537 = vmatprep.subr.bf16.mxu0 0
      %538 = vmatpush2.bf16.msra.mxu0 0
      %539 = vmatprep.subr.bf16.mxu0 0
      %540 = vmatpush2.bf16.msra.mxu0 0
      %541 = vmatprep.subr.bf16.mxu0 0
      %542 = vmatpush2.bf16.msra.mxu0 0
      %543 = vmatprep.subr.bf16.mxu0 0
      %544 = vmatpush2.bf16.msra.mxu0 0
      %545 = vmatprep.subr.bf16.mxu0 0
      %546 = vmatpush2.bf16.msra.mxu0 0
      %547 = vmatprep.subr.bf16.mxu0 0
      %548 = vmatpush2.bf16.msra.mxu0 0
      %549 = vmatprep.subr.bf16.mxu0 0
      %550 = vmatpush2.bf16.msra.mxu0 0
      %551 = vmatprep.subr.bf16.mxu0 0
      %552 = vmatpush2.bf16.msra.mxu0 0
      %553 = vmatprep.mubr.bf16.mxu0 0
      %554 = vmatmul.mubr.bf16.gmra.mxu0 %v515
      %v555 = vpop.f32.mrf.mxu0
      %v556 = vadd.f32 0.0, %v555
      %v557 = vpop.f32.mrf.mxu0
      %v558 = vpop.f32.mrf.mxu0
      %v559 = vpop.f32.mrf.mxu0
      %560 = vdwg.mxu0
      %v562 = vsel %vm263, %v511, 0
      %v565 = vsel %vm517, %v260, 0
      %567 = vmatprep.subr.bf16.mxu0 0
      %568 = vmatpush1.bf16.msra.mxu0 0
      %569 = vmatprep.subr.bf16.mxu0 0
      %570 = vmatpush1.bf16.msra.mxu0 0
      %571 = vmatprep.subr.bf16.mxu0 0
      %572 = vmatpush1.bf16.msra.mxu0 0
      %573 = vmatprep.subr.bf16.mxu0 0
      %574 = vmatpush1.bf16.msra.mxu0 0
      %575 = vmatprep.subr.bf16.mxu0 0
      %576 = vmatpush1.bf16.msra.mxu0 0
      %577 = vmatprep.subr.bf16.mxu0 0
      %578 = vmatpush1.bf16.msra.mxu0 0
      %579 = vmatprep.subr.bf16.mxu0 0
      %580 = vmatpush1.bf16.msra.mxu0 0
      %581 = vmatprep.subr.bf16.mxu0 0
      %582 = vmatpush1.bf16.msra.mxu0 %v565
      %583 = vmatprep.subr.bf16.mxu0 0
      %584 = vmatpush2.bf16.msra.mxu0 0
      %585 = vmatprep.subr.bf16.mxu0 0
      %586 = vmatpush2.bf16.msra.mxu0 0
      %587 = vmatprep.subr.bf16.mxu0 0
      %588 = vmatpush2.bf16.msra.mxu0 0
      %589 = vmatprep.subr.bf16.mxu0 0
      %590 = vmatpush2.bf16.msra.mxu0 0
      %591 = vmatprep.subr.bf16.mxu0 0
      %592 = vmatpush2.bf16.msra.mxu0 0
      %593 = vmatprep.subr.bf16.mxu0 0
      %594 = vmatpush2.bf16.msra.mxu0 0
      %595 = vmatprep.subr.bf16.mxu0 0
      %596 = vmatpush2.bf16.msra.mxu0 0
      %597 = vmatprep.subr.bf16.mxu0 0
      %598 = vmatpush2.bf16.msra.mxu0 0
      %599 = vmatprep.mubr.bf16.mxu0 0
      %600 = vmatmul.mubr.bf16.gmra.mxu0 %v562
      %v601 = vpop.f32.mrf.mxu0
      %v602 = vadd.f32 0.0, %v601
      %v603 = vpop.f32.mrf.mxu0
      %v604 = vpop.f32.mrf.mxu0
      %v605 = vpop.f32.mrf.mxu0
      %606 = vdwg.mxu0
      %v608 = vsel %vm263, %v512, 0
      %v611 = vsel %vm517, %v261, 0
      %613 = vmatprep.subr.bf16.mxu0 0
      %614 = vmatpush1.bf16.msra.mxu0 0
      %615 = vmatprep.subr.bf16.mxu0 0
      %616 = vmatpush1.bf16.msra.mxu0 0
      %617 = vmatprep.subr.bf16.mxu0 0
      %618 = vmatpush1.bf16.msra.mxu0 0
      %619 = vmatprep.subr.bf16.mxu0 0
      %620 = vmatpush1.bf16.msra.mxu0 0
      %621 = vmatprep.subr.bf16.mxu0 0
      %622 = vmatpush1.bf16.msra.mxu0 0
      %623 = vmatprep.subr.bf16.mxu0 0
      %624 = vmatpush1.bf16.msra.mxu0 0
      %625 = vmatprep.subr.bf16.mxu0 0
      %626 = vmatpush1.bf16.msra.mxu0 0
      %627 = vmatprep.subr.bf16.mxu0 0
      %628 = vmatpush1.bf16.msra.mxu0 %v611
      %629 = vmatprep.subr.bf16.mxu0 0
      %630 = vmatpush2.bf16.msra.mxu0 0
      %631 = vmatprep.subr.bf16.mxu0 0
      %632 = vmatpush2.bf16.msra.mxu0 0
      %633 = vmatprep.subr.bf16.mxu0 0
      %634 = vmatpush2.bf16.msra.mxu0 0
      %635 = vmatprep.subr.bf16.mxu0 0
      %636 = vmatpush2.bf16.msra.mxu0 0
      %637 = vmatprep.subr.bf16.mxu0 0
      %638 = vmatpush2.bf16.msra.mxu0 0
      %639 = vmatprep.subr.bf16.mxu0 0
      %640 = vmatpush2.bf16.msra.mxu0 0
      %641 = vmatprep.subr.bf16.mxu0 0
      %642 = vmatpush2.bf16.msra.mxu0 0
      %643 = vmatprep.subr.bf16.mxu0 0
      %644 = vmatpush2.bf16.msra.mxu0 0
      %645 = vmatprep.mubr.bf16.mxu0 0
      %646 = vmatmul.mubr.bf16.gmra.mxu0 %v608
      %v647 = vpop.f32.mrf.mxu0
      %v648 = vadd.f32 0.0, %v647
      %v649 = vpop.f32.mrf.mxu0
      %v650 = vpop.f32.mrf.mxu0
      %v651 = vpop.f32.mrf.mxu0
      %652 = vdwg.mxu0
      %v654 = vsel %vm263, %v513, 0
      %v657 = vsel %vm517, %v262, 0
      %659 = vmatprep.subr.bf16.mxu0 0
      %660 = vmatpush1.bf16.msra.mxu0 0
      %661 = vmatprep.subr.bf16.mxu0 0
      %662 = vmatpush1.bf16.msra.mxu0 0
      %663 = vmatprep.subr.bf16.mxu0 0
      %664 = vmatpush1.bf16.msra.mxu0 0
      %665 = vmatprep.subr.bf16.mxu0 0
      %666 = vmatpush1.bf16.msra.mxu0 0
      %667 = vmatprep.subr.bf16.mxu0 0
      %668 = vmatpush1.bf16.msra.mxu0 0
      %669 = vmatprep.subr.bf16.mxu0 0
      %670 = vmatpush1.bf16.msra.mxu0 0
      %671 = vmatprep.subr.bf16.mxu0 0
      %672 = vmatpush1.bf16.msra.mxu0 0
      %673 = vmatprep.subr.bf16.mxu0 0
      %674 = vmatpush1.bf16.msra.mxu0 %v657
      %675 = vmatprep.subr.bf16.mxu0 0
      %676 = vmatpush2.bf16.msra.mxu0 0
      %677 = vmatprep.subr.bf16.mxu0 0
      %678 = vmatpush2.bf16.msra.mxu0 0
      %679 = vmatprep.subr.bf16.mxu0 0
      %680 = vmatpush2.bf16.msra.mxu0 0
      %681 = vmatprep.subr.bf16.mxu0 0
      %682 = vmatpush2.bf16.msra.mxu0 0
      %683 = vmatprep.subr.bf16.mxu0 0
      %684 = vmatpush2.bf16.msra.mxu0 0
      %685 = vmatprep.subr.bf16.mxu0 0
      %686 = vmatpush2.bf16.msra.mxu0 0
      %687 = vmatprep.subr.bf16.mxu0 0
      %688 = vmatpush2.bf16.msra.mxu0 0
      %689 = vmatprep.subr.bf16.mxu0 0
      %690 = vmatpush2.bf16.msra.mxu0 0
      %691 = vmatprep.mubr.bf16.mxu0 0
      %692 = vmatmul.mubr.bf16.gmra.mxu0 %v654
      %v693 = vpop.f32.mrf.mxu0
      %v694 = vadd.f32 0.0, %v693
      %v695 = vpop.f32.mrf.mxu0
      %v696 = vpop.f32.mrf.mxu0
      %v697 = vpop.f32.mrf.mxu0
      %698 = vdwg.mxu0
      %v699 = vrcp.pop %v500
      %v700 = vrcp.pop %v503
      %v701 = vrcp.pop %v506
      %v702 = vrcp.pop %v509
      %v703 = vmul.f32 %v556, %v699
      %v704 = vmul.f32 %v602, %v700
      %v705 = vmul.f32 %v648, %v701
      %v706 = vmul.f32 %v694, %v702
      %708 = vrot.lane.b32.xlu0 %v704, 8
      %v709 = vpop.permute.xlu0 %708
      %712 = vrot.lane.b32.xlu0 %v705, 16
      %v713 = vpop.permute.xlu0 %712
      %716 = vrot.lane.b32.xlu0 %v706, 24
      %v717 = vpop.permute.xlu0 %716
      %v719 = vsel %vm263, %v703, %v709
      %vm720 = vcmask 130048
      %v721 = vsel %vm720, %v719, %v713
      %vm722 = vcmask 195584
      %v723 = vsel %vm722, %v721, %v717
      %vm724 = vcmask 261120
      %725 = vst.msk [vmem:[%s249] sm:$0xff] %vm724, %v723
      %p726 = scmp.lt.s32.totalorder %s15, 1
      %s727 = scalar_select %p726, %s15, 1
      %s728 = smul.addr %s727, 8
      %s729 = scalar_lea.vmem %s4, %s728
      // Predicated region
      $region37: #{early_transformer_forward.57} parent=35 // pred_check
        %p730 = pneg %p137
      $region38: #{early_transformer_forward.57} parent=35 // pred_check_branch
        %732 = sbr.rel (%p730) target = $region40
      $region39: #{early_transformer_forward.57} parent=35 // pred_region
        _
      $region40: #{early_transformer_forward.57} parent=35 // pred_fallthru
        _
    $region36: #{early_transformer_forward.57} parent=5 // pred_fallthru
      _
    %p733 = scmp.le.s32.totalorder 2, %s10
    // Predicated region
    $region41: #{early_transformer_forward.57} parent=5 // pred_check
      %p734 = pneg %p733
    $region42: #{early_transformer_forward.57} parent=5 // pred_check_branch
      %736 = sbr.rel (%p734) target = $region44
    $region43: #{early_transformer_forward.57} parent=5 // pred_region
      %s737 = ssub.s32 %s10, 2
      // Predicated region
      $region45: #{early_transformer_forward.57} parent=43 // pred_check
        %p738 = pneg %p143
      $region46: #{early_transformer_forward.57} parent=43 // pred_check_branch
        %740 = sbr.rel (%p738) target = $region48
      $region47: #{early_transformer_forward.57} parent=43 // pred_region
        %p741 = scmp.lt.s32.totalorder %s16, 1
        %s742 = scalar_select %p741, %s16, 1
        %s743 = smul.addr %s742, 8
        %s744 = scalar_lea.vmem %s4, %s743
      $region48: #{early_transformer_forward.57} parent=43 // pred_fallthru
        _
    $region44: #{early_transformer_forward.57} parent=5 // pred_fallthru
      _
  $region6: #{early_transformer_forward.57} parent=0 // loop_footer
    %s14 = sadd.s32 1, %s10
  $region7: #{early_transformer_forward.57} parent=0 // loop_footer_branch
    %9 = sbr.rel target = $region3
  $region8: #{early_transformer_forward.57} parent=0 // loop_exit
    _

// kernel: early_transformer_forward.47
$region0: #{early_transformer_forward.47}
  #allocation0 [shape = 'u32[]', space=smem, size = 0x4, offset = 0x4, fixed_abs, tag = 'smem constant byte address 0x4 - core index']
  #allocation1 [shape = 'u32[144,128]{1,0:T(1,128)}', space=vmem, size = 0x12000, scoped, tag = 'internal scratch']
  #allocation2 [shape = 'f32[8,128]{1,0:T(8,128)}', space=vmem, size = 0x1000, scoped, tag = 'scratch operand']
  %s0 = inlined_call_operand.vmem [shape: bf16[8,128], index: 0, kind: input, shape index: {}]
  %s1 = inlined_call_operand.vmem [shape: bf16[128,128], index: 1, kind: input, shape index: {}]
  %s2 = inlined_call_operand.vmem [shape: f32[1,128], index: 2, kind: input, shape index: {}]
  %s3 = inlined_call_operand.vmem [shape: f32[8,128], index: 3, kind: output, shape index: {}]
  %s4 = sld [smem:[#allocation0]]
  $region30: #{early_transformer_forward.47} parent=0
    _
  %s6 = ssub.s32 1, %s4
  %s7 = scalar_select 0, %s6, %s4
  // Predicated region
  $region2: #{early_transformer_forward.47} parent=0 // pred_check
    _
  $region3: #{early_transformer_forward.47} parent=0 // pred_check_branch
    %9 = sbr.rel (0) target = $region5
  $region4: #{early_transformer_forward.47} parent=0 // pred_region
    _
  $region5: #{early_transformer_forward.47} parent=0 // pred_fallthru
    _
  // Predicated region
  $region6: #{early_transformer_forward.47} parent=0 // pred_check
    _
  $region7: #{early_transformer_forward.47} parent=0 // pred_check_branch
    %11 = sbr.rel (0) target = $region9
  $region8: #{early_transformer_forward.47} parent=0 // pred_region
    _
  $region9: #{early_transformer_forward.47} parent=0 // pred_fallthru
    _
  // Predicated region
  $region10: #{early_transformer_forward.47} parent=0 // pred_check
    _
  $region11: #{early_transformer_forward.47} parent=0 // pred_check_branch
    %13 = sbr.rel (0) target = $region13
  $region12: #{early_transformer_forward.47} parent=0 // pred_region
    _
  $region13: #{early_transformer_forward.47} parent=0 // pred_fallthru
    _
  %p15 = scmp.eq.s32.totalorder 0, 0
  // Predicated region
  $region14: #{early_transformer_forward.47} parent=0 // pred_check
    %p16 = pneg %p15
  $region15: #{early_transformer_forward.47} parent=0 // pred_check_branch
    %18 = sbr.rel (%p16) target = $region17
  $region16: #{early_transformer_forward.47} parent=0 // pred_region
    %19 = vst [vmem:[#allocation2] sm:$0xff] 0.0
  $region17: #{early_transformer_forward.47} parent=0 // pred_fallthru
    _
  %v20 = vld [vmem:[#allocation2] sm:$0xff]
  %v21 = vld [vmem:[%s0] sm:$0xf]
  %v22 = vld [vmem:[%s1] sm:$0xf]
  %v23 = vld [vmem:[%s1 + $0x4] sm:$0xf]
  %v24 = vld [vmem:[%s1 + $0x8] sm:$0xf]
  %v25 = vld [vmem:[%s1 + $0xc] sm:$0xf]
  %v26 = vld [vmem:[%s1 + $0x10] sm:$0xf]
  %v27 = vld [vmem:[%s1 + $0x14] sm:$0xf]
  %v28 = vld [vmem:[%s1 + $0x18] sm:$0xf]
  %v29 = vld [vmem:[%s1 + $0x1c] sm:$0xf]
  %v30 = vld [vmem:[%s1 + $0x20] sm:$0xf]
  %v31 = vld [vmem:[%s1 + $0x24] sm:$0xf]
  %v32 = vld [vmem:[%s1 + $0x28] sm:$0xf]
  %v33 = vld [vmem:[%s1 + $0x2c] sm:$0xf]
  %v34 = vld [vmem:[%s1 + $0x30] sm:$0xf]
  %v35 = vld [vmem:[%s1 + $0x34] sm:$0xf]
  %v36 = vld [vmem:[%s1 + $0x38] sm:$0xf]
  %v37 = vld [vmem:[%s1 + $0x3c] sm:$0xf]
  %v54 = vunpack.c.l.b16 %v22
  %v55 = vunpack.c.l.b16 %v23
  %v56 = vunpack.c.l.b16 %v24
  %v57 = vunpack.c.l.b16 %v25
  %v58 = vunpack.c.l.b16 %v26
  %v59 = vunpack.c.l.b16 %v27
  %v60 = vunpack.c.l.b16 %v28
  %v61 = vunpack.c.l.b16 %v29
  %v62 = vunpack.c.l.b16 %v30
  %v63 = vunpack.c.l.b16 %v31
  %v64 = vunpack.c.l.b16 %v32
  %v65 = vunpack.c.l.b16 %v33
  %v66 = vunpack.c.l.b16 %v34
  %v67 = vunpack.c.l.b16 %v35
  %v68 = vunpack.c.l.b16 %v36
  %v69 = vunpack.c.l.b16 %v37
  %v70 = vpack.c.b16 %v55, %v54
  %v71 = vpack.c.b16 %v57, %v56
  %v72 = vpack.c.b16 %v59, %v58
  %v73 = vpack.c.b16 %v61, %v60
  %v74 = vpack.c.b16 %v63, %v62
  %v75 = vpack.c.b16 %v65, %v64
  %v76 = vpack.c.b16 %v67, %v66
  %v77 = vpack.c.b16 %v69, %v68
  %86 = vmatprep.subr.bf16.mxu0 0
  %87 = vmatpush1.bf16.msra.mxu0 %v77
  %88 = vmatprep.subr.bf16.mxu0 0
  %89 = vmatpush1.bf16.msra.mxu0 %v76
  %90 = vmatprep.subr.bf16.mxu0 0
  %91 = vmatpush1.bf16.msra.mxu0 %v75
  %92 = vmatprep.subr.bf16.mxu0 0
  %93 = vmatpush1.bf16.msra.mxu0 %v74
  %94 = vmatprep.subr.bf16.mxu0 0
  %95 = vmatpush1.bf16.msra.mxu0 %v73
  %96 = vmatprep.subr.bf16.mxu0 0
  %97 = vmatpush1.bf16.msra.mxu0 %v72
  %98 = vmatprep.subr.bf16.mxu0 0
  %99 = vmatpush1.bf16.msra.mxu0 %v71
  %100 = vmatprep.subr.bf16.mxu0 0
  %101 = vmatpush1.bf16.msra.mxu0 %v70
  %102 = vmatprep.subr.bf16.mxu0 0
  %103 = vmatpush2.bf16.msra.mxu0 0
  %104 = vmatprep.subr.bf16.mxu0 0
  %105 = vmatpush2.bf16.msra.mxu0 0
  %106 = vmatprep.subr.bf16.mxu0 0
  %107 = vmatpush2.bf16.msra.mxu0 0
  %108 = vmatprep.subr.bf16.mxu0 0
  %109 = vmatpush2.bf16.msra.mxu0 0
  %110 = vmatprep.subr.bf16.mxu0 0
  %111 = vmatpush2.bf16.msra.mxu0 0
  %112 = vmatprep.subr.bf16.mxu0 0
  %113 = vmatpush2.bf16.msra.mxu0 0
  %114 = vmatprep.subr.bf16.mxu0 0
  %115 = vmatpush2.bf16.msra.mxu0 0
  %116 = vmatprep.subr.bf16.mxu0 0
  %117 = vmatpush2.bf16.msra.mxu0 0
  %118 = vmatprep.mubr.bf16.mxu0 0
  %119 = vmatmul.mubr.bf16.gmra.mxu0 %v21
  %v120 = vpop.f32.mrf.mxu0
  %v121 = vadd.f32 0.0, %v120
  %v122 = vpop.f32.mrf.mxu0
  %v123 = vpop.f32.mrf.mxu0
  %v124 = vpop.f32.mrf.mxu0
  %125 = vdwg.mxu0
  %v126 = vadd.f32 %v20, %v121
  %127 = vst [vmem:[#allocation2] sm:$0xff] %v126
  // Predicated region
  $region18: #{early_transformer_forward.47} parent=0 // pred_check
    %p128 = pneg %p15
  $region19: #{early_transformer_forward.47} parent=0 // pred_check_branch
    %130 = sbr.rel (%p128) target = $region21
  $region20: #{early_transformer_forward.47} parent=0 // pred_region
    %v131 = vld [vmem:[#allocation2] sm:$0xff]
    %v132 = vld [vmem:[%s2] sm:$0x1]
    %v134 = vlaneseq
    %v135 = vshrl.u32 %v134, 7
    %v136 = vsub.s32 0, %v135
    %v137 = vrot.slane %v132, %v136
    %v139 = vadd.f32 %v131, %v137
    %140 = vst [vmem:[%s3] sm:$0xff] %v139
  $region21: #{early_transformer_forward.47} parent=0 // pred_fallthru
    _
  // Predicated region
  $region22: #{early_transformer_forward.47} parent=0 // pred_check
    _
  $region23: #{early_transformer_forward.47} parent=0 // pred_check_branch
    %142 = sbr.rel (0) target = $region25
  $region24: #{early_transformer_forward.47} parent=0 // pred_region
    _
  $region25: #{early_transformer_forward.47} parent=0 // pred_fallthru
    _
  // Predicated region
  $region26: #{early_transformer_forward.47} parent=0 // pred_check
    _
  $region27: #{early_transformer_forward.47} parent=0 // pred_check_branch
    %144 = sbr.rel (0) target = $region29
  $region28: #{early_transformer_forward.47} parent=0 // pred_region
    _
  $region29: #{early_transformer_forward.47} parent=0 // pred_fallthru
    _

// kernel: early_transformer_forward.51
$region0: #{early_transformer_forward.51}
  #allocation0 [shape = 'u32[]', space=smem, size = 0x4, offset = 0x4, fixed_abs, tag = 'smem constant byte address 0x4 - core index']
  #allocation1 [shape = 'u32[144,128]{1,0:T(1,128)}', space=vmem, size = 0x12000, scoped, tag = 'internal scratch']
  %s0 = inlined_call_operand.vmem [shape: f32[8,32], index: 0, kind: input, shape index: {}]
  %s1 = inlined_call_operand.vmem [shape: f32[8,32], index: 1, kind: input, shape index: {}]
  %s2 = inlined_call_operand.vmem [shape: f32[1,32], index: 2, kind: input, shape index: {}]
  %s3 = inlined_call_operand.vmem [shape: f32[1,32], index: 3, kind: input, shape index: {}]
  %s4 = inlined_call_operand.vmem [shape: f32[8,32], index: 4, kind: output, shape index: {}]
  %s5 = sld [smem:[#allocation0]]
  $region26: #{early_transformer_forward.51} parent=0
    _
  %s7 = ssub.s32 1, %s5
  %s8 = scalar_select 0, %s7, %s5
  // Predicated region
  $region2: #{early_transformer_forward.51} parent=0 // pred_check
    _
  $region3: #{early_transformer_forward.51} parent=0 // pred_check_branch
    %10 = sbr.rel (0) target = $region5
  $region4: #{early_transformer_forward.51} parent=0 // pred_region
    _
  $region5: #{early_transformer_forward.51} parent=0 // pred_fallthru
    _
  // Predicated region
  $region6: #{early_transformer_forward.51} parent=0 // pred_check
    _
  $region7: #{early_transformer_forward.51} parent=0 // pred_check_branch
    %12 = sbr.rel (0) target = $region9
  $region8: #{early_transformer_forward.51} parent=0 // pred_region
    _
  $region9: #{early_transformer_forward.51} parent=0 // pred_fallthru
    _
  // Predicated region
  $region10: #{early_transformer_forward.51} parent=0 // pred_check
    _
  $region11: #{early_transformer_forward.51} parent=0 // pred_check_branch
    %14 = sbr.rel (0) target = $region13
  $region12: #{early_transformer_forward.51} parent=0 // pred_region
    _
  $region13: #{early_transformer_forward.51} parent=0 // pred_fallthru
    _
  // Predicated region
  $region14: #{early_transformer_forward.51} parent=0 // pred_check
    _
  $region15: #{early_transformer_forward.51} parent=0 // pred_check_branch
    %16 = sbr.rel (0) target = $region17
  $region16: #{early_transformer_forward.51} parent=0 // pred_region
    _
  $region17: #{early_transformer_forward.51} parent=0 // pred_fallthru
    _
  %v17 = vld [vmem:[%s0] sm:$0xff]
  %v18 = vld [vmem:[%s1] sm:$0xff]
  %v19 = vadd.f32 %v17, %v18
  %vm20 = vcmask 261120
  %v21 = vsel %vm20, %v19, 0.0
  %22 = vadd.xlane.f32.xlu0 %v21
  %v23 = vpop.xlane.xlu0 %22
  %v24 = vrcp.pop 32.0
  %v25 = vmul.f32 %v23, %v24
  %v26 = vsub.f32 %v19, %v25
  %v27 = vmul.f32 %v26, %v26
  %v28 = vsel %vm20, %v27, 0.0
  %29 = vadd.xlane.f32.xlu0 %v28
  %v30 = vpop.xlane.xlu0 %29
  %v31 = vmul.f32 %v30, %v24
  %v32 = vadd.f32 %v31, 1e-05
  %v33 = vrsqrt.pop %v32
  %v34 = vmul.f32 %v26, %v33
  %v35 = vld [vmem:[%s2] sm:$0x1]
  %v37 = vlaneseq
  %v38 = vshrl.u32 %v37, 7
  %v39 = vsub.s32 0, %v38
  %v40 = vrot.slane %v35, %v39
  %v42 = vmul.f32 %v34, %v40
  %v43 = vld [vmem:[%s3] sm:$0x1]
  %v45 = vlaneseq
  %v46 = vshrl.u32 %v45, 7
  %v47 = vsub.s32 0, %v46
  %v48 = vrot.slane %v43, %v47
  %v50 = vadd.f32 %v42, %v48
  %51 = vst.msk [vmem:[%s4] sm:$0xff] %vm20, %v50
  // Predicated region
  $region18: #{early_transformer_forward.51} parent=0 // pred_check
    _
  $region19: #{early_transformer_forward.51} parent=0 // pred_check_branch
    %53 = sbr.rel (0) target = $region21
  $region20: #{early_transformer_forward.51} parent=0 // pred_region
    _
  $region21: #{early_transformer_forward.51} parent=0 // pred_fallthru
    _
  // Predicated region
  $region22: #{early_transformer_forward.51} parent=0 // pred_check
    _
  $region23: #{early_transformer_forward.51} parent=0 // pred_check_branch
    %55 = sbr.rel (0) target = $region25
  $region24: #{early_transformer_forward.51} parent=0 // pred_region
    _
  $region25: #{early_transformer_forward.51} parent=0 // pred_fallthru
    _

// kernel: early_transformer_forward.49
$region0: #{early_transformer_forward.49}
  #allocation0 [shape = 'u32[]', space=smem, size = 0x4, offset = 0x4, fixed_abs, tag = 'smem constant byte address 0x4 - core index']
  #allocation1 [shape = 'u32[144,128]{1,0:T(1,128)}', space=vmem, size = 0x12000, scoped, tag = 'internal scratch']
  %s0 = inlined_call_operand.vmem [shape: bf16[2,4,3,8], index: 0, kind: input, shape index: {}]
  %s1 = inlined_call_operand.vmem [shape: bf16[2,4,3,8], index: 1, kind: input, shape index: {}]
  %s2 = inlined_call_operand.vmem [shape: bf16[2,4,3,8], index: 2, kind: input, shape index: {}]
  %s3 = inlined_call_operand.vmem [shape: f32[2,3,32], index: 3, kind: output, shape index: {}]
  %s4 = sld [smem:[#allocation0]]
  $region45: #{early_transformer_forward.49} parent=0
    _
  %s6 = ssub.s32 1, %s4
  %s7 = scalar_select 0, %s6, %s4
  loop: start=0, step=1, limit=4
  $region2: #{early_transformer_forward.49} parent=0 // loop_pre_header
    _
  $region3: #{early_transformer_forward.49} parent=0 // loop_header
    %s9 = sphi 0, %s13
    %p10 = scmp.ge.s32.totalorder %s9, 4
    %s19 = sphi 0, %s21
    %s22 = sphi 0, %s19
    %s23 = sphi 0, %s22
    %s39 = sphi 0, %s23
    %s45 = sphi 0, %s47
    %s48 = sphi 0, %s45
    %s49 = sphi 0, %s48
    %s65 = sphi 0, %s49
    %s71 = sphi 0, %s73
    %s74 = sphi 0, %s71
    %s75 = sphi 0, %s74
    %s91 = sphi 0, %s75
    %s97 = sphi 0, %s99
    %s100 = sphi 0, %s97
    %s101 = sphi 0, %s100
    %s117 = sphi 0, %s101
  $region4: #{early_transformer_forward.49} parent=0 // loop_header_branch
    %12 = sbr.rel (%p10) target = $region8
  $region5: #{early_transformer_forward.49} parent=0 // loop_body
    %s14 = ssub.s32 %s9, 1
    %s15 = ssub.s32 %s9, 2
    %s16 = sadd.s32 %s9, 1
    %s17 = ssub.s32 %s9, %s16
    %p18 = scmp.eq.s32.totalorder %s17, 0
    %s20 = sadd.s32 %s19, 1
    %s21 = scalar_select %p18, %s19, %s20
    %p24 = pneg %p18
    %p25 = scmp.eq.s32.totalorder %s9, 1
    %p26 = por %p24, %p25
    %p27 = scmp.ne.s32.totalorder %s19, %s22
    %p28 = scmp.eq.s32.totalorder %s9, 0
    %p29 = por %p27, %p28
    %p30 = scmp.ne.s32.totalorder %s19, %s22
    %p31 = scmp.eq.s32.totalorder %s14, 1
    %p32 = por %p30, %p31
    %p33 = scmp.ne.s32.totalorder %s22, %s23
    %p34 = scmp.eq.s32.totalorder %s14, 0
    %p35 = por %p33, %p34
    %p36 = scmp.ne.s32.totalorder %s22, %s23
    %p37 = scmp.eq.s32.totalorder %s15, 1
    %p38 = por %p36, %p37
    %p40 = scmp.ne.s32.totalorder %s23, %s39
    %p41 = scmp.eq.s32.totalorder %s15, 0
    %p42 = por %p40, %p41
    %s43 = ssub.s32 %s9, %s16
    %p44 = scmp.eq.s32.totalorder %s43, 0
    %s46 = sadd.s32 %s45, 1
    %s47 = scalar_select %p44, %s45, %s46
    %p50 = pneg %p44
    %p51 = scmp.eq.s32.totalorder %s9, 1
    %p52 = por %p50, %p51
    %p53 = scmp.ne.s32.totalorder %s45, %s48
    %p54 = scmp.eq.s32.totalorder %s9, 0
    %p55 = por %p53, %p54
    %p56 = scmp.ne.s32.totalorder %s45, %s48
    %p57 = scmp.eq.s32.totalorder %s14, 1
    %p58 = por %p56, %p57
    %p59 = scmp.ne.s32.totalorder %s48, %s49
    %p60 = scmp.eq.s32.totalorder %s14, 0
    %p61 = por %p59, %p60
    %p62 = scmp.ne.s32.totalorder %s48, %s49
    %p63 = scmp.eq.s32.totalorder %s15, 1
    %p64 = por %p62, %p63
    %p66 = scmp.ne.s32.totalorder %s49, %s65
    %p67 = scmp.eq.s32.totalorder %s15, 0
    %p68 = por %p66, %p67
    %s69 = ssub.s32 %s9, %s16
    %p70 = scmp.eq.s32.totalorder %s69, 0
    %s72 = sadd.s32 %s71, 1
    %s73 = scalar_select %p70, %s71, %s72
    %p76 = pneg %p70
    %p77 = scmp.eq.s32.totalorder %s9, 1
    %p78 = por %p76, %p77
    %p79 = scmp.ne.s32.totalorder %s71, %s74
    %p80 = scmp.eq.s32.totalorder %s9, 0
    %p81 = por %p79, %p80
    %p82 = scmp.ne.s32.totalorder %s71, %s74
    %p83 = scmp.eq.s32.totalorder %s14, 1
    %p84 = por %p82, %p83
    %p85 = scmp.ne.s32.totalorder %s74, %s75
    %p86 = scmp.eq.s32.totalorder %s14, 0
    %p87 = por %p85, %p86
    %p88 = scmp.ne.s32.totalorder %s74, %s75
    %p89 = scmp.eq.s32.totalorder %s15, 1
    %p90 = por %p88, %p89
    %p92 = scmp.ne.s32.totalorder %s75, %s91
    %p93 = scmp.eq.s32.totalorder %s15, 0
    %p94 = por %p92, %p93
    %s95 = ssub.s32 %s9, %s16
    %p96 = scmp.eq.s32.totalorder %s95, 0
    %s98 = sadd.s32 %s97, 1
    %s99 = scalar_select %p96, %s97, %s98
    %p102 = pneg %p96
    %p103 = scmp.eq.s32.totalorder %s9, 1
    %p104 = por %p102, %p103
    %p105 = scmp.ne.s32.totalorder %s97, %s100
    %p106 = scmp.eq.s32.totalorder %s9, 0
    %p107 = por %p105, %p106
    %p108 = scmp.ne.s32.totalorder %s97, %s100
    %p109 = scmp.eq.s32.totalorder %s14, 1
    %p110 = por %p108, %p109
    %p111 = scmp.ne.s32.totalorder %s100, %s101
    %p112 = scmp.eq.s32.totalorder %s14, 0
    %p113 = por %p111, %p112
    %p114 = scmp.ne.s32.totalorder %s100, %s101
    %p115 = scmp.eq.s32.totalorder %s15, 1
    %p116 = por %p114, %p115
    %p118 = scmp.ne.s32.totalorder %s101, %s117
    %p119 = scmp.eq.s32.totalorder %s15, 0
    %p120 = por %p118, %p119
    %p121 = scmp.le.s32.totalorder 1, %s9
    %p122 = scmp.lt.s32.totalorder %s9, 3
    %p123 = pnand %p121, %p122
    %p124 = pneg %p123
    // Predicated region
    $region9: #{early_transformer_forward.49} parent=5 // pred_check
      _
    $region10: #{early_transformer_forward.49} parent=5 // pred_check_branch
      %126 = sbr.rel (%p123) target = $region12
    $region11: #{early_transformer_forward.49} parent=5 // pred_region
      %s127 = ssub.s32 %s9, 1
    $region12: #{early_transformer_forward.49} parent=5 // pred_fallthru
      _
    %p128 = scmp.lt.s32.totalorder %s9, 2
    // Predicated region
    $region13: #{early_transformer_forward.49} parent=5 // pred_check
      %p129 = pneg %p128
    $region14: #{early_transformer_forward.49} parent=5 // pred_check_branch
      %131 = sbr.rel (%p129) target = $region16
    $region15: #{early_transformer_forward.49} parent=5 // pred_region
      // Predicated region
      $region17: #{early_transformer_forward.49} parent=15 // pred_check
        %p132 = pneg %p29
      $region18: #{early_transformer_forward.49} parent=15 // pred_check_branch
        %134 = sbr.rel (%p132) target = $region20
      $region19: #{early_transformer_forward.49} parent=15 // pred_region
        %p135 = scmp.lt.s32.totalorder %s9, 1
        %s136 = scalar_select %p135, %s9, 1
        %s137 = smul.addr %s136, 4
        %s138 = smul.addr %s137, 2
        %s139 = scalar_lea.vmem %s0, %s138
      $region20: #{early_transformer_forward.49} parent=15 // pred_fallthru
        _
      // Predicated region
      $region21: #{early_transformer_forward.49} parent=15 // pred_check
        %p140 = pneg %p55
      $region22: #{early_transformer_forward.49} parent=15 // pred_check_branch
        %142 = sbr.rel (%p140) target = $region24
      $region23: #{early_transformer_forward.49} parent=15 // pred_region
        %p143 = scmp.lt.s32.totalorder %s9, 1
        %s144 = scalar_select %p143, %s9, 1
        %s145 = smul.addr %s144, 4
        %s146 = smul.addr %s145, 2
        %s147 = scalar_lea.vmem %s1, %s146
      $region24: #{early_transformer_forward.49} parent=15 // pred_fallthru
        _
      // Predicated region
      $region25: #{early_transformer_forward.49} parent=15 // pred_check
        %p148 = pneg %p81
      $region26: #{early_transformer_forward.49} parent=15 // pred_check_branch
        %150 = sbr.rel (%p148) target = $region28
      $region27: #{early_transformer_forward.49} parent=15 // pred_region
        %p151 = scmp.lt.s32.totalorder %s9, 1
        %s152 = scalar_select %p151, %s9, 1
        %s153 = smul.addr %s152, 4
        %s154 = smul.addr %s153, 2
        %s155 = scalar_lea.vmem %s2, %s154
      $region28: #{early_transformer_forward.49} parent=15 // pred_fallthru
        _
    $region16: #{early_transformer_forward.49} parent=5 // pred_fallthru
      _
    %p156 = scmp.le.s32.totalorder 1, %s9
    %p157 = scmp.lt.s32.totalorder %s9, 3
    %p158 = pnand %p156, %p157
    %p159 = pneg %p158
    // Predicated region
    $region29: #{early_transformer_forward.49} parent=5 // pred_check
      _
    $region30: #{early_transformer_forward.49} parent=5 // pred_check_branch
      %161 = sbr.rel (%p158) target = $region32
    $region31: #{early_transformer_forward.49} parent=5 // pred_region
      %s162 = ssub.s32 %s9, 1
      %p163 = scmp.lt.s32.totalorder %s14, 1
      %s164 = scalar_select %p163, %s14, 1
      %s165 = smul.addr %s164, 4
      %s166 = smul.addr %s165, 2
      %s167 = scalar_lea.vmem %s0, %s166
      %p168 = pneg %p35
      %p169 = pneg %p32
      %p170 = scmp.lt.s32.totalorder %s14, 1
      %s171 = scalar_select %p170, %s14, 1
      %s172 = smul.addr %s171, 4
      %s173 = smul.addr %s172, 2
      %s174 = scalar_lea.vmem %s1, %s173
      %p175 = pneg %p61
      %p176 = pneg %p58
      %p177 = scmp.lt.s32.totalorder %s14, 1
      %s178 = scalar_select %p177, %s14, 1
      %s179 = smul.addr %s178, 4
      %s180 = smul.addr %s179, 2
      %s181 = scalar_lea.vmem %s2, %s180
      %p182 = pneg %p87
      %p183 = pneg %p84
      %p184 = pneg %p113
      %p185 = pneg %p110
      %p186 = scmp.lt.s32.totalorder %s14, 1
      %s187 = scalar_select %p186, %s14, 1
      %s188 = smul.addr %s187, 4
      %s189 = scalar_lea.vmem %s3, %s188
      %p190 = scmp.lt.s32.totalorder %s14, 1
      %s191 = scalar_select %p190, %s14, 1
      %s192 = smul.addr %s191, 4
      %s193 = smul.addr %s192, 2
      %s194 = scalar_lea.vmem %s0, %s193
      %p195 = scmp.lt.s32.totalorder %s14, 1
      %s196 = scalar_select %p195, %s14, 1
      %s197 = smul.addr %s196, 4
      %s198 = smul.addr %s197, 2
      %s199 = scalar_lea.vmem %s1, %s198
      %p200 = scmp.lt.s32.totalorder %s14, 1
      %s201 = scalar_select %p200, %s14, 1
      %s202 = smul.addr %s201, 4
      %s203 = smul.addr %s202, 2
      %s204 = scalar_lea.vmem %s2, %s203
      %p205 = scmp.lt.s32.totalorder %s14, 1
      %s206 = scalar_select %p205, %s14, 1
      %s207 = smul.addr %s206, 4
      %s208 = scalar_lea.vmem %s3, %s207
      %v210 = vld [vmem:[%s194] sm:$0x3]
      %v211 = vld [vmem:[%s194 + $0x2] sm:$0x3]
      %v212 = vld [vmem:[%s194 + $0x4] sm:$0x3]
      %v213 = vld [vmem:[%s194 + $0x6] sm:$0x3]
      %v214 = vld [vmem:[%s199] sm:$0x3]
      %v215 = vld [vmem:[%s199 + $0x2] sm:$0x3]
      %v216 = vld [vmem:[%s199 + $0x4] sm:$0x3]
      %v217 = vld [vmem:[%s199 + $0x6] sm:$0x3]
      %v218 = vld [vmem:[%s204] sm:$0x3]
      %v219 = vld [vmem:[%s204 + $0x2] sm:$0x3]
      %v220 = vld [vmem:[%s204 + $0x4] sm:$0x3]
      %v221 = vld [vmem:[%s204 + $0x6] sm:$0x3]
      %vm222 = vcmask 64512
      %v224 = vsel %vm222, %v210, 0
      %v227 = vsel %vm222, %v214, 0
      %229 = vmatprep.subr.bf16.mxu0 0
      %230 = vmatpush1.bf16.xpose.msra.mxu0 0
      %231 = vmatprep.subr.bf16.mxu0 0
      %232 = vmatpush1.bf16.xpose.msra.mxu0 0
      %233 = vmatprep.subr.bf16.mxu0 0
      %234 = vmatpush1.bf16.xpose.msra.mxu0 0
      %235 = vmatprep.subr.bf16.mxu0 0
      %236 = vmatpush1.bf16.xpose.msra.mxu0 0
      %237 = vmatprep.subr.bf16.mxu0 0
      %238 = vmatpush1.bf16.xpose.msra.mxu0 0
      %239 = vmatprep.subr.bf16.mxu0 0
      %240 = vmatpush1.bf16.xpose.msra.mxu0 0
      %241 = vmatprep.subr.bf16.mxu0 0
      %242 = vmatpush1.bf16.xpose.msra.mxu0 0
      %243 = vmatprep.subr.bf16.mxu0 0
      %244 = vmatpush1.bf16.xpose.msra.mxu0 %v227
      %245 = vmatprep.subr.bf16.mxu0 0
      %246 = vmatpush2.bf16.xpose.msra.mxu0 0
      %247 = vmatprep.subr.bf16.mxu0 0
      %248 = vmatpush2.bf16.xpose.msra.mxu0 0
      %249 = vmatprep.subr.bf16.mxu0 0
      %250 = vmatpush2.bf16.xpose.msra.mxu0 0
      %251 = vmatprep.subr.bf16.mxu0 0
      %252 = vmatpush2.bf16.xpose.msra.mxu0 0
      %253 = vmatprep.subr.bf16.mxu0 0
      %254 = vmatpush2.bf16.xpose.msra.mxu0 0
      %255 = vmatprep.subr.bf16.mxu0 0
      %256 = vmatpush2.bf16.xpose.msra.mxu0 0
      %257 = vmatprep.subr.bf16.mxu0 0
      %258 = vmatpush2.bf16.xpose.msra.mxu0 0
      %259 = vmatprep.subr.bf16.mxu0 0
      %260 = vmatpush2.bf16.xpose.msra.mxu0 0
      %261 = vmatprep.mubr.bf16.mxu0 0
      %262 = vmatmul.mubr.bf16.gmra.mxu0 %v224
      %v263 = vpop.f32.mrf.mxu0
      %v264 = vadd.f32 0.0, %v263
      %v265 = vpop.f32.mrf.mxu0
      %v266 = vpop.f32.mrf.mxu0
      %v267 = vpop.f32.mrf.mxu0
      %268 = vdwg.mxu0
      %v270 = vsel %vm222, %v211, 0
      %v273 = vsel %vm222, %v215, 0
      %275 = vmatprep.subr.bf16.mxu0 0
      %276 = vmatpush1.bf16.xpose.msra.mxu0 0
      %277 = vmatprep.subr.bf16.mxu0 0
      %278 = vmatpush1.bf16.xpose.msra.mxu0 0
      %279 = vmatprep.subr.bf16.mxu0 0
      %280 = vmatpush1.bf16.xpose.msra.mxu0 0
      %281 = vmatprep.subr.bf16.mxu0 0
      %282 = vmatpush1.bf16.xpose.msra.mxu0 0
      %283 = vmatprep.subr.bf16.mxu0 0
      %284 = vmatpush1.bf16.xpose.msra.mxu0 0
      %285 = vmatprep.subr.bf16.mxu0 0
      %286 = vmatpush1.bf16.xpose.msra.mxu0 0
      %287 = vmatprep.subr.bf16.mxu0 0
      %288 = vmatpush1.bf16.xpose.msra.mxu0 0
      %289 = vmatprep.subr.bf16.mxu0 0
      %290 = vmatpush1.bf16.xpose.msra.mxu0 %v273
      %291 = vmatprep.subr.bf16.mxu0 0
      %292 = vmatpush2.bf16.xpose.msra.mxu0 0
      %293 = vmatprep.subr.bf16.mxu0 0
      %294 = vmatpush2.bf16.xpose.msra.mxu0 0
      %295 = vmatprep.subr.bf16.mxu0 0
      %296 = vmatpush2.bf16.xpose.msra.mxu0 0
      %297 = vmatprep.subr.bf16.mxu0 0
      %298 = vmatpush2.bf16.xpose.msra.mxu0 0
      %299 = vmatprep.subr.bf16.mxu0 0
      %300 = vmatpush2.bf16.xpose.msra.mxu0 0
      %301 = vmatprep.subr.bf16.mxu0 0
      %302 = vmatpush2.bf16.xpose.msra.mxu0 0
      %303 = vmatprep.subr.bf16.mxu0 0
      %304 = vmatpush2.bf16.xpose.msra.mxu0 0
      %305 = vmatprep.subr.bf16.mxu0 0
      %306 = vmatpush2.bf16.xpose.msra.mxu0 0
      %307 = vmatprep.mubr.bf16.mxu0 0
      %308 = vmatmul.mubr.bf16.gmra.mxu0 %v270
      %v309 = vpop.f32.mrf.mxu0
      %v310 = vadd.f32 0.0, %v309
      %v311 = vpop.f32.mrf.mxu0
      %v312 = vpop.f32.mrf.mxu0
      %v313 = vpop.f32.mrf.mxu0
      %314 = vdwg.mxu0
      %v316 = vsel %vm222, %v212, 0
      %v319 = vsel %vm222, %v216, 0
      %321 = vmatprep.subr.bf16.mxu0 0
      %322 = vmatpush1.bf16.xpose.msra.mxu0 0
      %323 = vmatprep.subr.bf16.mxu0 0
      %324 = vmatpush1.bf16.xpose.msra.mxu0 0
      %325 = vmatprep.subr.bf16.mxu0 0
      %326 = vmatpush1.bf16.xpose.msra.mxu0 0
      %327 = vmatprep.subr.bf16.mxu0 0
      %328 = vmatpush1.bf16.xpose.msra.mxu0 0
      %329 = vmatprep.subr.bf16.mxu0 0
      %330 = vmatpush1.bf16.xpose.msra.mxu0 0
      %331 = vmatprep.subr.bf16.mxu0 0
      %332 = vmatpush1.bf16.xpose.msra.mxu0 0
      %333 = vmatprep.subr.bf16.mxu0 0
      %334 = vmatpush1.bf16.xpose.msra.mxu0 0
      %335 = vmatprep.subr.bf16.mxu0 0
      %336 = vmatpush1.bf16.xpose.msra.mxu0 %v319
      %337 = vmatprep.subr.bf16.mxu0 0
      %338 = vmatpush2.bf16.xpose.msra.mxu0 0
      %339 = vmatprep.subr.bf16.mxu0 0
      %340 = vmatpush2.bf16.xpose.msra.mxu0 0
      %341 = vmatprep.subr.bf16.mxu0 0
      %342 = vmatpush2.bf16.xpose.msra.mxu0 0
      %343 = vmatprep.subr.bf16.mxu0 0
      %344 = vmatpush2.bf16.xpose.msra.mxu0 0
      %345 = vmatprep.subr.bf16.mxu0 0
      %346 = vmatpush2.bf16.xpose.msra.mxu0 0
      %347 = vmatprep.subr.bf16.mxu0 0
      %348 = vmatpush2.bf16.xpose.msra.mxu0 0
      %349 = vmatprep.subr.bf16.mxu0 0
      %350 = vmatpush2.bf16.xpose.msra.mxu0 0
      %351 = vmatprep.subr.bf16.mxu0 0
      %352 = vmatpush2.bf16.xpose.msra.mxu0 0
      %353 = vmatprep.mubr.bf16.mxu0 0
      %354 = vmatmul.mubr.bf16.gmra.mxu0 %v316
      %v355 = vpop.f32.mrf.mxu0
      %v356 = vadd.f32 0.0, %v355
      %v357 = vpop.f32.mrf.mxu0
      %v358 = vpop.f32.mrf.mxu0
      %v359 = vpop.f32.mrf.mxu0
      %360 = vdwg.mxu0
      %v362 = vsel %vm222, %v213, 0
      %v365 = vsel %vm222, %v217, 0
      %367 = vmatprep.subr.bf16.mxu0 0
      %368 = vmatpush1.bf16.xpose.msra.mxu0 0
      %369 = vmatprep.subr.bf16.mxu0 0
      %370 = vmatpush1.bf16.xpose.msra.mxu0 0
      %371 = vmatprep.subr.bf16.mxu0 0
      %372 = vmatpush1.bf16.xpose.msra.mxu0 0
      %373 = vmatprep.subr.bf16.mxu0 0
      %374 = vmatpush1.bf16.xpose.msra.mxu0 0
      %375 = vmatprep.subr.bf16.mxu0 0
      %376 = vmatpush1.bf16.xpose.msra.mxu0 0
      %377 = vmatprep.subr.bf16.mxu0 0
      %378 = vmatpush1.bf16.xpose.msra.mxu0 0
      %379 = vmatprep.subr.bf16.mxu0 0
      %380 = vmatpush1.bf16.xpose.msra.mxu0 0
      %381 = vmatprep.subr.bf16.mxu0 0
      %382 = vmatpush1.bf16.xpose.msra.mxu0 %v365
      %383 = vmatprep.subr.bf16.mxu0 0
      %384 = vmatpush2.bf16.xpose.msra.mxu0 0
      %385 = vmatprep.subr.bf16.mxu0 0
      %386 = vmatpush2.bf16.xpose.msra.mxu0 0
      %387 = vmatprep.subr.bf16.mxu0 0
      %388 = vmatpush2.bf16.xpose.msra.mxu0 0
      %389 = vmatprep.subr.bf16.mxu0 0
      %390 = vmatpush2.bf16.xpose.msra.mxu0 0
      %391 = vmatprep.subr.bf16.mxu0 0
      %392 = vmatpush2.bf16.xpose.msra.mxu0 0
      %393 = vmatprep.subr.bf16.mxu0 0
      %394 = vmatpush2.bf16.xpose.msra.mxu0 0
      %395 = vmatprep.subr.bf16.mxu0 0
      %396 = vmatpush2.bf16.xpose.msra.mxu0 0
      %397 = vmatprep.subr.bf16.mxu0 0
      %398 = vmatpush2.bf16.xpose.msra.mxu0 0
      %399 = vmatprep.mubr.bf16.mxu0 0
      %400 = vmatmul.mubr.bf16.gmra.mxu0 %v362
      %v401 = vpop.f32.mrf.mxu0
      %v402 = vadd.f32 0.0, %v401
      %v403 = vpop.f32.mrf.mxu0
      %v404 = vpop.f32.mrf.mxu0
      %v405 = vpop.f32.mrf.mxu0
      %406 = vdwg.mxu0
      %v407 = vmul.f32 %v264, 0.35355338
      %v408 = vmul.f32 %v310, 0.35355338
      %v409 = vmul.f32 %v356, 0.35355338
      %v410 = vmul.f32 %v402, 0.35355338
      %vm411 = vcmask 18432
      %v412 = vsel %vm411, %v407, -inf
      %413 = vmax.xlane.f32.xlu0 %v412
      %v414 = vpop.xlane.xlu0 %413
      %v415 = vsel %vm411, %v408, -inf
      %416 = vmax.xlane.f32.xlu0 %v415
      %v417 = vpop.xlane.xlu0 %416
      %v418 = vsel %vm411, %v409, -inf
      %419 = vmax.xlane.f32.xlu0 %v418
      %v420 = vpop.xlane.xlu0 %419
      %v421 = vsel %vm411, %v410, -inf
      %422 = vmax.xlane.f32.xlu0 %v421
      %v423 = vpop.xlane.xlu0 %422
      %v424 = vsub.f32 %v407, %v414
      %v425 = vsub.f32 %v408, %v417
      %v426 = vsub.f32 %v409, %v420
      %v427 = vsub.f32 %v410, %v423
      %v428 = vmul.f32 %v424, 1.442695
      %v429 = vpow.pop %v428
      %v430 = vmul.f32 %v425, 1.442695
      %v431 = vpow.pop %v430
      %v432 = vmul.f32 %v426, 1.442695
      %v433 = vpow.pop %v432
      %v434 = vmul.f32 %v427, 1.442695
      %v435 = vpow.pop %v434
      %v436 = vsel %vm411, %v429, 0.0
      %437 = vadd.xlane.f32.xlu0 %v436
      %v438 = vpop.xlane.xlu0 %437
      %v439 = vsel %vm411, %v431, 0.0
      %440 = vadd.xlane.f32.xlu0 %v439
      %v441 = vpop.xlane.xlu0 %440
      %v442 = vsel %vm411, %v433, 0.0
      %443 = vadd.xlane.f32.xlu0 %v442
      %v444 = vpop.xlane.xlu0 %443
      %v445 = vsel %vm411, %v435, 0.0
      %446 = vadd.xlane.f32.xlu0 %v445
      %v447 = vpop.xlane.xlu0 %446
      %v448 = vpack.c.bf16 %v429, %v429
      %v449 = vpack.c.bf16 %v431, %v431
      %v450 = vpack.c.bf16 %v433, %v433
      %v451 = vpack.c.bf16 %v435, %v435
      %vm452 = vcmask 23552
      %v454 = vsel %vm452, %v448, 0
      %vm456 = vcmask 1040384
      %vm457 = vcmask 1041408
      %v458 = vsel %vm456, 4294967295, 65535
      %v459 = vsel %vm457, %v458, 0
      %v461 = vand.u32 %v218, %v459
      %463 = vmatprep.subr.bf16.mxu0 0
      %464 = vmatpush1.bf16.msra.mxu0 0
      %465 = vmatprep.subr.bf16.mxu0 0
      %466 = vmatpush1.bf16.msra.mxu0 0
      %467 = vmatprep.subr.bf16.mxu0 0
      %468 = vmatpush1.bf16.msra.mxu0 0
      %469 = vmatprep.subr.bf16.mxu0 0
      %470 = vmatpush1.bf16.msra.mxu0 0
      %471 = vmatprep.subr.bf16.mxu0 0
      %472 = vmatpush1.bf16.msra.mxu0 0
      %473 = vmatprep.subr.bf16.mxu0 0
      %474 = vmatpush1.bf16.msra.mxu0 0
      %475 = vmatprep.subr.bf16.mxu0 0
      %476 = vmatpush1.bf16.msra.mxu0 0
      %477 = vmatprep.subr.bf16.mxu0 0
      %478 = vmatpush1.bf16.msra.mxu0 %v461
      %479 = vmatprep.subr.bf16.mxu0 0
      %480 = vmatpush2.bf16.msra.mxu0 0
      %481 = vmatprep.subr.bf16.mxu0 0
      %482 = vmatpush2.bf16.msra.mxu0 0
      %483 = vmatprep.subr.bf16.mxu0 0
      %484 = vmatpush2.bf16.msra.mxu0 0
      %485 = vmatprep.subr.bf16.mxu0 0
      %486 = vmatpush2.bf16.msra.mxu0 0
      %487 = vmatprep.subr.bf16.mxu0 0
      %488 = vmatpush2.bf16.msra.mxu0 0
      %489 = vmatprep.subr.bf16.mxu0 0
      %490 = vmatpush2.bf16.msra.mxu0 0
      %491 = vmatprep.subr.bf16.mxu0 0
      %492 = vmatpush2.bf16.msra.mxu0 0
      %493 = vmatprep.subr.bf16.mxu0 0
      %494 = vmatpush2.bf16.msra.mxu0 0
      %495 = vmatprep.mubr.bf16.mxu0 0
      %496 = vmatmul.mubr.bf16.gmra.mxu0 %v454
      %v497 = vpop.f32.mrf.mxu0
      %v498 = vadd.f32 0.0, %v497
      %v499 = vpop.f32.mrf.mxu0
      %v500 = vpop.f32.mrf.mxu0
      %v501 = vpop.f32.mrf.mxu0
      %502 = vdwg.mxu0
      %v504 = vsel %vm452, %v449, 0
      %v507 = vand.u32 %v219, %v459
      %509 = vmatprep.subr.bf16.mxu0 0
      %510 = vmatpush1.bf16.msra.mxu0 0
      %511 = vmatprep.subr.bf16.mxu0 0
      %512 = vmatpush1.bf16.msra.mxu0 0
      %513 = vmatprep.subr.bf16.mxu0 0
      %514 = vmatpush1.bf16.msra.mxu0 0
      %515 = vmatprep.subr.bf16.mxu0 0
      %516 = vmatpush1.bf16.msra.mxu0 0
      %517 = vmatprep.subr.bf16.mxu0 0
      %518 = vmatpush1.bf16.msra.mxu0 0
      %519 = vmatprep.subr.bf16.mxu0 0
      %520 = vmatpush1.bf16.msra.mxu0 0
      %521 = vmatprep.subr.bf16.mxu0 0
      %522 = vmatpush1.bf16.msra.mxu0 0
      %523 = vmatprep.subr.bf16.mxu0 0
      %524 = vmatpush1.bf16.msra.mxu0 %v507
      %525 = vmatprep.subr.bf16.mxu0 0
      %526 = vmatpush2.bf16.msra.mxu0 0
      %527 = vmatprep.subr.bf16.mxu0 0
      %528 = vmatpush2.bf16.msra.mxu0 0
      %529 = vmatprep.subr.bf16.mxu0 0
      %530 = vmatpush2.bf16.msra.mxu0 0
      %531 = vmatprep.subr.bf16.mxu0 0
      %532 = vmatpush2.bf16.msra.mxu0 0
      %533 = vmatprep.subr.bf16.mxu0 0
      %534 = vmatpush2.bf16.msra.mxu0 0
      %535 = vmatprep.subr.bf16.mxu0 0
      %536 = vmatpush2.bf16.msra.mxu0 0
      %537 = vmatprep.subr.bf16.mxu0 0
      %538 = vmatpush2.bf16.msra.mxu0 0
      %539 = vmatprep.subr.bf16.mxu0 0
      %540 = vmatpush2.bf16.msra.mxu0 0
      %541 = vmatprep.mubr.bf16.mxu0 0
      %542 = vmatmul.mubr.bf16.gmra.mxu0 %v504
      %v543 = vpop.f32.mrf.mxu0
      %v544 = vadd.f32 0.0, %v543
      %v545 = vpop.f32.mrf.mxu0
      %v546 = vpop.f32.mrf.mxu0
      %v547 = vpop.f32.mrf.mxu0
      %548 = vdwg.mxu0
      %v550 = vsel %vm452, %v450, 0
      %v553 = vand.u32 %v220, %v459
      %555 = vmatprep.subr.bf16.mxu0 0
      %556 = vmatpush1.bf16.msra.mxu0 0
      %557 = vmatprep.subr.bf16.mxu0 0
      %558 = vmatpush1.bf16.msra.mxu0 0
      %559 = vmatprep.subr.bf16.mxu0 0
      %560 = vmatpush1.bf16.msra.mxu0 0
      %561 = vmatprep.subr.bf16.mxu0 0
      %562 = vmatpush1.bf16.msra.mxu0 0
      %563 = vmatprep.subr.bf16.mxu0 0
      %564 = vmatpush1.bf16.msra.mxu0 0
      %565 = vmatprep.subr.bf16.mxu0 0
      %566 = vmatpush1.bf16.msra.mxu0 0
      %567 = vmatprep.subr.bf16.mxu0 0
      %568 = vmatpush1.bf16.msra.mxu0 0
      %569 = vmatprep.subr.bf16.mxu0 0
      %570 = vmatpush1.bf16.msra.mxu0 %v553
      %571 = vmatprep.subr.bf16.mxu0 0
      %572 = vmatpush2.bf16.msra.mxu0 0
      %573 = vmatprep.subr.bf16.mxu0 0
      %574 = vmatpush2.bf16.msra.mxu0 0
      %575 = vmatprep.subr.bf16.mxu0 0
      %576 = vmatpush2.bf16.msra.mxu0 0
      %577 = vmatprep.subr.bf16.mxu0 0
      %578 = vmatpush2.bf16.msra.mxu0 0
      %579 = vmatprep.subr.bf16.mxu0 0
      %580 = vmatpush2.bf16.msra.mxu0 0
      %581 = vmatprep.subr.bf16.mxu0 0
      %582 = vmatpush2.bf16.msra.mxu0 0
      %583 = vmatprep.subr.bf16.mxu0 0
      %584 = vmatpush2.bf16.msra.mxu0 0
      %585 = vmatprep.subr.bf16.mxu0 0
      %586 = vmatpush2.bf16.msra.mxu0 0
      %587 = vmatprep.mubr.bf16.mxu0 0
      %588 = vmatmul.mubr.bf16.gmra.mxu0 %v550
      %v589 = vpop.f32.mrf.mxu0
      %v590 = vadd.f32 0.0, %v589
      %v591 = vpop.f32.mrf.mxu0
      %v592 = vpop.f32.mrf.mxu0
      %v593 = vpop.f32.mrf.mxu0
      %594 = vdwg.mxu0
      %v596 = vsel %vm452, %v451, 0
      %v599 = vand.u32 %v221, %v459
      %601 = vmatprep.subr.bf16.mxu0 0
      %602 = vmatpush1.bf16.msra.mxu0 0
      %603 = vmatprep.subr.bf16.mxu0 0
      %604 = vmatpush1.bf16.msra.mxu0 0
      %605 = vmatprep.subr.bf16.mxu0 0
      %606 = vmatpush1.bf16.msra.mxu0 0
      %607 = vmatprep.subr.bf16.mxu0 0
      %608 = vmatpush1.bf16.msra.mxu0 0
      %609 = vmatprep.subr.bf16.mxu0 0
      %610 = vmatpush1.bf16.msra.mxu0 0
      %611 = vmatprep.subr.bf16.mxu0 0
      %612 = vmatpush1.bf16.msra.mxu0 0
      %613 = vmatprep.subr.bf16.mxu0 0
      %614 = vmatpush1.bf16.msra.mxu0 0
      %615 = vmatprep.subr.bf16.mxu0 0
      %616 = vmatpush1.bf16.msra.mxu0 %v599
      %617 = vmatprep.subr.bf16.mxu0 0
      %618 = vmatpush2.bf16.msra.mxu0 0
      %619 = vmatprep.subr.bf16.mxu0 0
      %620 = vmatpush2.bf16.msra.mxu0 0
      %621 = vmatprep.subr.bf16.mxu0 0
      %622 = vmatpush2.bf16.msra.mxu0 0
      %623 = vmatprep.subr.bf16.mxu0 0
      %624 = vmatpush2.bf16.msra.mxu0 0
      %625 = vmatprep.subr.bf16.mxu0 0
      %626 = vmatpush2.bf16.msra.mxu0 0
      %627 = vmatprep.subr.bf16.mxu0 0
      %628 = vmatpush2.bf16.msra.mxu0 0
      %629 = vmatprep.subr.bf16.mxu0 0
      %630 = vmatpush2.bf16.msra.mxu0 0
      %631 = vmatprep.subr.bf16.mxu0 0
      %632 = vmatpush2.bf16.msra.mxu0 0
      %633 = vmatprep.mubr.bf16.mxu0 0
      %634 = vmatmul.mubr.bf16.gmra.mxu0 %v596
      %v635 = vpop.f32.mrf.mxu0
      %v636 = vadd.f32 0.0, %v635
      %v637 = vpop.f32.mrf.mxu0
      %v638 = vpop.f32.mrf.mxu0
      %v639 = vpop.f32.mrf.mxu0
      %640 = vdwg.mxu0
      %v641 = vrcp.pop %v438
      %v642 = vrcp.pop %v441
      %v643 = vrcp.pop %v444
      %v644 = vrcp.pop %v447
      %v645 = vmul.f32 %v498, %v641
      %v646 = vmul.f32 %v544, %v642
      %v647 = vmul.f32 %v590, %v643
      %v648 = vmul.f32 %v636, %v644
      %650 = vrot.lane.b32.xlu0 %v646, 8
      %v651 = vpop.permute.xlu0 %650
      %654 = vrot.lane.b32.xlu0 %v647, 16
      %v655 = vpop.permute.xlu0 %654
      %658 = vrot.lane.b32.xlu0 %v648, 24
      %v659 = vpop.permute.xlu0 %658
      %v661 = vsel %vm222, %v645, %v651
      %vm662 = vcmask 130048
      %v663 = vsel %vm662, %v661, %v655
      %vm664 = vcmask 195584
      %v665 = vsel %vm664, %v663, %v659
      %vm666 = vcmask 256000
      %667 = vst.msk [vmem:[%s208] sm:$0x7] %vm666, %v665
      %p668 = scmp.lt.s32.totalorder %s14, 1
      %s669 = scalar_select %p668, %s14, 1
      %s670 = smul.addr %s669, 4
      %s671 = scalar_lea.vmem %s3, %s670
      // Predicated region
      $region33: #{early_transformer_forward.49} parent=31 // pred_check
        %p672 = pneg %p110
      $region34: #{early_transformer_forward.49} parent=31 // pred_check_branch
        %674 = sbr.rel (%p672) target = $region36
      $region35: #{early_transformer_forward.49} parent=31 // pred_region
        _
      $region36: #{early_transformer_forward.49} parent=31 // pred_fallthru
        _
    $region32: #{early_transformer_forward.49} parent=5 // pred_fallthru
      _
    %p675 = scmp.le.s32.totalorder 2, %s9
    // Predicated region
    $region37: #{early_transformer_forward.49} parent=5 // pred_check
      %p676 = pneg %p675
    $region38: #{early_transformer_forward.49} parent=5 // pred_check_branch
      %678 = sbr.rel (%p676) target = $region40
    $region39: #{early_transformer_forward.49} parent=5 // pred_region
      %s679 = ssub.s32 %s9, 2
      // Predicated region
      $region41: #{early_transformer_forward.49} parent=39 // pred_check
        %p680 = pneg %p116
      $region42: #{early_transformer_forward.49} parent=39 // pred_check_branch
        %682 = sbr.rel (%p680) target = $region44
      $region43: #{early_transformer_forward.49} parent=39 // pred_region
        %p683 = scmp.lt.s32.totalorder %s15, 1
        %s684 = scalar_select %p683, %s15, 1
        %s685 = smul.addr %s684, 4
        %s686 = scalar_lea.vmem %s3, %s685
      $region44: #{early_transformer_forward.49} parent=39 // pred_fallthru
        _
    $region40: #{early_transformer_forward.49} parent=5 // pred_fallthru
      _
  $region6: #{early_transformer_forward.49} parent=0 // loop_footer
    %s13 = sadd.s32 1, %s9
  $region7: #{early_transformer_forward.49} parent=0 // loop_footer_branch
    %8 = sbr.rel target = $region3
  $region8: #{early_transformer_forward.49} parent=0 // loop_exit
    _

// kernel: early_transformer_forward.52
$region0: #{early_transformer_forward.52}
  #allocation0 [shape = 'u32[]', space=smem, size = 0x4, offset = 0x4, fixed_abs, tag = 'smem constant byte address 0x4 - core index']
  #allocation1 [shape = 'u32[144,128]{1,0:T(1,128)}', space=vmem, size = 0x12000, scoped, tag = 'internal scratch']
  #allocation2 [shape = 'f32[8,128]{1,0:T(8,128)}', space=vmem, size = 0x1000, scoped, tag = 'scratch operand']
  %s0 = inlined_call_operand.vmem [shape: bf16[8,128], index: 0, kind: input, shape index: {}]
  %s1 = inlined_call_operand.vmem [shape: bf16[128,128], index: 1, kind: input, shape index: {}]
  %s2 = inlined_call_operand.vmem [shape: f32[1,128], index: 2, kind: input, shape index: {}]
  %s3 = inlined_call_operand.vmem [shape: f32[8,128], index: 3, kind: output, shape index: {}]
  %s4 = sld [smem:[#allocation0]]
  $region30: #{early_transformer_forward.52} parent=0
    _
  %s6 = ssub.s32 1, %s4
  %s7 = scalar_select 0, %s6, %s4
  // Predicated region
  $region2: #{early_transformer_forward.52} parent=0 // pred_check
    _
  $region3: #{early_transformer_forward.52} parent=0 // pred_check_branch
    %9 = sbr.rel (0) target = $region5
  $region4: #{early_transformer_forward.52} parent=0 // pred_region
    _
  $region5: #{early_transformer_forward.52} parent=0 // pred_fallthru
    _
  // Predicated region
  $region6: #{early_transformer_forward.52} parent=0 // pred_check
    _
  $region7: #{early_transformer_forward.52} parent=0 // pred_check_branch
    %11 = sbr.rel (0) target = $region9
  $region8: #{early_transformer_forward.52} parent=0 // pred_region
    _
  $region9: #{early_transformer_forward.52} parent=0 // pred_fallthru
    _
  // Predicated region
  $region10: #{early_transformer_forward.52} parent=0 // pred_check
    _
  $region11: #{early_transformer_forward.52} parent=0 // pred_check_branch
    %13 = sbr.rel (0) target = $region13
  $region12: #{early_transformer_forward.52} parent=0 // pred_region
    _
  $region13: #{early_transformer_forward.52} parent=0 // pred_fallthru
    _
  %p15 = scmp.eq.s32.totalorder 0, 0
  // Predicated region
  $region14: #{early_transformer_forward.52} parent=0 // pred_check
    %p16 = pneg %p15
  $region15: #{early_transformer_forward.52} parent=0 // pred_check_branch
    %18 = sbr.rel (%p16) target = $region17
  $region16: #{early_transformer_forward.52} parent=0 // pred_region
    %19 = vst [vmem:[#allocation2] sm:$0xff] 0.0
  $region17: #{early_transformer_forward.52} parent=0 // pred_fallthru
    _
  %v20 = vld [vmem:[#allocation2] sm:$0xff]
  %v21 = vld [vmem:[%s0] sm:$0xf]
  %v22 = vld [vmem:[%s1] sm:$0xf]
  %v23 = vld [vmem:[%s1 + $0x4] sm:$0xf]
  %v24 = vld [vmem:[%s1 + $0x8] sm:$0xf]
  %v25 = vld [vmem:[%s1 + $0xc] sm:$0xf]
  %v26 = vld [vmem:[%s1 + $0x10] sm:$0xf]
  %v27 = vld [vmem:[%s1 + $0x14] sm:$0xf]
  %v28 = vld [vmem:[%s1 + $0x18] sm:$0xf]
  %v29 = vld [vmem:[%s1 + $0x1c] sm:$0xf]
  %v30 = vld [vmem:[%s1 + $0x20] sm:$0xf]
  %v31 = vld [vmem:[%s1 + $0x24] sm:$0xf]
  %v32 = vld [vmem:[%s1 + $0x28] sm:$0xf]
  %v33 = vld [vmem:[%s1 + $0x2c] sm:$0xf]
  %v34 = vld [vmem:[%s1 + $0x30] sm:$0xf]
  %v35 = vld [vmem:[%s1 + $0x34] sm:$0xf]
  %v36 = vld [vmem:[%s1 + $0x38] sm:$0xf]
  %v37 = vld [vmem:[%s1 + $0x3c] sm:$0xf]
  %v54 = vunpack.c.l.b16 %v22
  %v55 = vunpack.c.l.b16 %v23
  %v56 = vunpack.c.l.b16 %v24
  %v57 = vunpack.c.l.b16 %v25
  %v58 = vunpack.c.l.b16 %v26
  %v59 = vunpack.c.l.b16 %v27
  %v60 = vunpack.c.l.b16 %v28
  %v61 = vunpack.c.l.b16 %v29
  %v62 = vunpack.c.l.b16 %v30
  %v63 = vunpack.c.l.b16 %v31
  %v64 = vunpack.c.l.b16 %v32
  %v65 = vunpack.c.l.b16 %v33
  %v66 = vunpack.c.l.b16 %v34
  %v67 = vunpack.c.l.b16 %v35
  %v68 = vunpack.c.l.b16 %v36
  %v69 = vunpack.c.l.b16 %v37
  %v70 = vpack.c.b16 %v55, %v54
  %v71 = vpack.c.b16 %v57, %v56
  %v72 = vpack.c.b16 %v59, %v58
  %v73 = vpack.c.b16 %v61, %v60
  %v74 = vpack.c.b16 %v63, %v62
  %v75 = vpack.c.b16 %v65, %v64
  %v76 = vpack.c.b16 %v67, %v66
  %v77 = vpack.c.b16 %v69, %v68
  %86 = vmatprep.subr.bf16.mxu0 0
  %87 = vmatpush1.bf16.msra.mxu0 %v77
  %88 = vmatprep.subr.bf16.mxu0 0
  %89 = vmatpush1.bf16.msra.mxu0 %v76
  %90 = vmatprep.subr.bf16.mxu0 0
  %91 = vmatpush1.bf16.msra.mxu0 %v75
  %92 = vmatprep.subr.bf16.mxu0 0
  %93 = vmatpush1.bf16.msra.mxu0 %v74
  %94 = vmatprep.subr.bf16.mxu0 0
  %95 = vmatpush1.bf16.msra.mxu0 %v73
  %96 = vmatprep.subr.bf16.mxu0 0
  %97 = vmatpush1.bf16.msra.mxu0 %v72
  %98 = vmatprep.subr.bf16.mxu0 0
  %99 = vmatpush1.bf16.msra.mxu0 %v71
  %100 = vmatprep.subr.bf16.mxu0 0
  %101 = vmatpush1.bf16.msra.mxu0 %v70
  %102 = vmatprep.subr.bf16.mxu0 0
  %103 = vmatpush2.bf16.msra.mxu0 0
  %104 = vmatprep.subr.bf16.mxu0 0
  %105 = vmatpush2.bf16.msra.mxu0 0
  %106 = vmatprep.subr.bf16.mxu0 0
  %107 = vmatpush2.bf16.msra.mxu0 0
  %108 = vmatprep.subr.bf16.mxu0 0
  %109 = vmatpush2.bf16.msra.mxu0 0
  %110 = vmatprep.subr.bf16.mxu0 0
  %111 = vmatpush2.bf16.msra.mxu0 0
  %112 = vmatprep.subr.bf16.mxu0 0
  %113 = vmatpush2.bf16.msra.mxu0 0
  %114 = vmatprep.subr.bf16.mxu0 0
  %115 = vmatpush2.bf16.msra.mxu0 0
  %116 = vmatprep.subr.bf16.mxu0 0
  %117 = vmatpush2.bf16.msra.mxu0 0
  %118 = vmatprep.mubr.bf16.mxu0 0
  %119 = vmatmul.mubr.bf16.gmra.mxu0 %v21
  %v120 = vpop.f32.mrf.mxu0
  %v121 = vadd.f32 0.0, %v120
  %v122 = vpop.f32.mrf.mxu0
  %v123 = vpop.f32.mrf.mxu0
  %v124 = vpop.f32.mrf.mxu0
  %125 = vdwg.mxu0
  %v126 = vadd.f32 %v20, %v121
  %127 = vst [vmem:[#allocation2] sm:$0xff] %v126
  // Predicated region
  $region18: #{early_transformer_forward.52} parent=0 // pred_check
    %p128 = pneg %p15
  $region19: #{early_transformer_forward.52} parent=0 // pred_check_branch
    %130 = sbr.rel (%p128) target = $region21
  $region20: #{early_transformer_forward.52} parent=0 // pred_region
    %v131 = vld [vmem:[#allocation2] sm:$0xff]
    %v132 = vld [vmem:[%s2] sm:$0x1]
    %v134 = vlaneseq
    %v135 = vshrl.u32 %v134, 7
    %v136 = vsub.s32 0, %v135
    %v137 = vrot.slane %v132, %v136
    %v139 = vadd.f32 %v131, %v137
    %v140 = vmax.f32 %v139, 0.0
    %141 = vst [vmem:[%s3] sm:$0xff] %v140
  $region21: #{early_transformer_forward.52} parent=0 // pred_fallthru
    _
  // Predicated region
  $region22: #{early_transformer_forward.52} parent=0 // pred_check
    _
  $region23: #{early_transformer_forward.52} parent=0 // pred_check_branch
    %143 = sbr.rel (0) target = $region25
  $region24: #{early_transformer_forward.52} parent=0 // pred_region
    _
  $region25: #{early_transformer_forward.52} parent=0 // pred_fallthru
    _
  // Predicated region
  $region26: #{early_transformer_forward.52} parent=0 // pred_check
    _
  $region27: #{early_transformer_forward.52} parent=0 // pred_check_branch
    %145 = sbr.rel (0) target = $region29
  $region28: #{early_transformer_forward.52} parent=0 // pred_region
    _
  $region29: #{early_transformer_forward.52} parent=0 // pred_fallthru
    _

// kernel: early_transformer_forward.65
$region0: #{early_transformer_forward.65}
  #allocation0 [shape = 'u32[]', space=smem, size = 0x4, offset = 0x4, fixed_abs, tag = 'smem constant byte address 0x4 - core index']
  #allocation1 [shape = 'u32[144,128]{1,0:T(1,128)}', space=vmem, size = 0x12000, scoped, tag = 'internal scratch']
  #allocation2 [shape = 'f32[16,128]{1,0:T(8,128)}', space=vmem, size = 0x2000, scoped, tag = 'scratch operand']
  %s0 = inlined_call_operand.vmem [shape: bf16[16,128], index: 0, kind: input, shape index: {}]
  %s1 = inlined_call_operand.vmem [shape: bf16[128,128], index: 1, kind: input, shape index: {}]
  %s2 = inlined_call_operand.vmem [shape: f32[1,128], index: 2, kind: input, shape index: {}]
  %s3 = inlined_call_operand.vmem [shape: f32[16,128], index: 3, kind: output, shape index: {}]
  %s4 = sld [smem:[#allocation0]]
  $region30: #{early_transformer_forward.65} parent=0
    _
  %s6 = ssub.s32 1, %s4
  %s7 = scalar_select 0, %s6, %s4
  // Predicated region
  $region2: #{early_transformer_forward.65} parent=0 // pred_check
    _
  $region3: #{early_transformer_forward.65} parent=0 // pred_check_branch
    %9 = sbr.rel (0) target = $region5
  $region4: #{early_transformer_forward.65} parent=0 // pred_region
    _
  $region5: #{early_transformer_forward.65} parent=0 // pred_fallthru
    _
  // Predicated region
  $region6: #{early_transformer_forward.65} parent=0 // pred_check
    _
  $region7: #{early_transformer_forward.65} parent=0 // pred_check_branch
    %11 = sbr.rel (0) target = $region9
  $region8: #{early_transformer_forward.65} parent=0 // pred_region
    _
  $region9: #{early_transformer_forward.65} parent=0 // pred_fallthru
    _
  // Predicated region
  $region10: #{early_transformer_forward.65} parent=0 // pred_check
    _
  $region11: #{early_transformer_forward.65} parent=0 // pred_check_branch
    %13 = sbr.rel (0) target = $region13
  $region12: #{early_transformer_forward.65} parent=0 // pred_region
    _
  $region13: #{early_transformer_forward.65} parent=0 // pred_fallthru
    _
  %p15 = scmp.eq.s32.totalorder 0, 0
  // Predicated region
  $region14: #{early_transformer_forward.65} parent=0 // pred_check
    %p16 = pneg %p15
  $region15: #{early_transformer_forward.65} parent=0 // pred_check_branch
    %18 = sbr.rel (%p16) target = $region17
  $region16: #{early_transformer_forward.65} parent=0 // pred_region
    %19 = vst [vmem:[#allocation2] sm:$0xff] 0.0
    %20 = vst [vmem:[#allocation2 + $0x8] sm:$0xff] 0.0
  $region17: #{early_transformer_forward.65} parent=0 // pred_fallthru
    _
  %v21 = vld [vmem:[#allocation2] sm:$0xff]
  %v22 = vld [vmem:[#allocation2 + $0x8] sm:$0xff]
  %v23 = vld [vmem:[%s0] sm:$0xf]
  %v24 = vld [vmem:[%s0 + $0x4] sm:$0xf]
  %v25 = vld [vmem:[%s1] sm:$0xf]
  %v26 = vld [vmem:[%s1 + $0x4] sm:$0xf]
  %v27 = vld [vmem:[%s1 + $0x8] sm:$0xf]
  %v28 = vld [vmem:[%s1 + $0xc] sm:$0xf]
  %v29 = vld [vmem:[%s1 + $0x10] sm:$0xf]
  %v30 = vld [vmem:[%s1 + $0x14] sm:$0xf]
  %v31 = vld [vmem:[%s1 + $0x18] sm:$0xf]
  %v32 = vld [vmem:[%s1 + $0x1c] sm:$0xf]
  %v33 = vld [vmem:[%s1 + $0x20] sm:$0xf]
  %v34 = vld [vmem:[%s1 + $0x24] sm:$0xf]
  %v35 = vld [vmem:[%s1 + $0x28] sm:$0xf]
  %v36 = vld [vmem:[%s1 + $0x2c] sm:$0xf]
  %v37 = vld [vmem:[%s1 + $0x30] sm:$0xf]
  %v38 = vld [vmem:[%s1 + $0x34] sm:$0xf]
  %v39 = vld [vmem:[%s1 + $0x38] sm:$0xf]
  %v40 = vld [vmem:[%s1 + $0x3c] sm:$0xf]
  %v43 = vunpack.c.l.b16 %v23
  %v44 = vunpack.c.l.b16 %v24
  %v45 = vpack.c.b16 %v44, %v43
  %v63 = vunpack.c.l.b16 %v25
  %v64 = vunpack.c.l.b16 %v26
  %v65 = vunpack.c.l.b16 %v27
  %v66 = vunpack.c.l.b16 %v28
  %v67 = vunpack.c.l.b16 %v29
  %v68 = vunpack.c.l.b16 %v30
  %v69 = vunpack.c.l.b16 %v31
  %v70 = vunpack.c.l.b16 %v32
  %v71 = vunpack.c.l.b16 %v33
  %v72 = vunpack.c.l.b16 %v34
  %v73 = vunpack.c.l.b16 %v35
  %v74 = vunpack.c.l.b16 %v36
  %v75 = vunpack.c.l.b16 %v37
  %v76 = vunpack.c.l.b16 %v38
  %v77 = vunpack.c.l.b16 %v39
  %v78 = vunpack.c.l.b16 %v40
  %v79 = vpack.c.b16 %v64, %v63
  %v80 = vpack.c.b16 %v66, %v65
  %v81 = vpack.c.b16 %v68, %v67
  %v82 = vpack.c.b16 %v70, %v69
  %v83 = vpack.c.b16 %v72, %v71
  %v84 = vpack.c.b16 %v74, %v73
  %v85 = vpack.c.b16 %v76, %v75
  %v86 = vpack.c.b16 %v78, %v77
  %95 = vmatprep.subr.bf16.mxu0 0
  %96 = vmatpush1.bf16.msra.mxu0 %v86
  %97 = vmatprep.subr.bf16.mxu0 0
  %98 = vmatpush1.bf16.msra.mxu0 %v85
  %99 = vmatprep.subr.bf16.mxu0 0
  %100 = vmatpush1.bf16.msra.mxu0 %v84
  %101 = vmatprep.subr.bf16.mxu0 0
  %102 = vmatpush1.bf16.msra.mxu0 %v83
  %103 = vmatprep.subr.bf16.mxu0 0
  %104 = vmatpush1.bf16.msra.mxu0 %v82
  %105 = vmatprep.subr.bf16.mxu0 0
  %106 = vmatpush1.bf16.msra.mxu0 %v81
  %107 = vmatprep.subr.bf16.mxu0 0
  %108 = vmatpush1.bf16.msra.mxu0 %v80
  %109 = vmatprep.subr.bf16.mxu0 0
  %110 = vmatpush1.bf16.msra.mxu0 %v79
  %111 = vmatprep.subr.bf16.mxu0 0
  %112 = vmatpush2.bf16.msra.mxu0 0
  %113 = vmatprep.subr.bf16.mxu0 0
  %114 = vmatpush2.bf16.msra.mxu0 0
  %115 = vmatprep.subr.bf16.mxu0 0
  %116 = vmatpush2.bf16.msra.mxu0 0
  %117 = vmatprep.subr.bf16.mxu0 0
  %118 = vmatpush2.bf16.msra.mxu0 0
  %119 = vmatprep.subr.bf16.mxu0 0
  %120 = vmatpush2.bf16.msra.mxu0 0
  %121 = vmatprep.subr.bf16.mxu0 0
  %122 = vmatpush2.bf16.msra.mxu0 0
  %123 = vmatprep.subr.bf16.mxu0 0
  %124 = vmatpush2.bf16.msra.mxu0 0
  %125 = vmatprep.subr.bf16.mxu0 0
  %126 = vmatpush2.bf16.msra.mxu0 0
  %127 = vmatprep.mubr.bf16.mxu0 0
  %128 = vmatmul.mubr.bf16.gmra.mxu0 %v45
  %v129 = vpop.f32.mrf.mxu0
  %v130 = vadd.f32 0.0, %v129
  %v131 = vpop.f32.mrf.mxu0
  %v132 = vpop.f32.mrf.mxu0
  %v133 = vadd.f32 0.0, %v132
  %v134 = vpop.f32.mrf.mxu0
  %135 = vdwg.mxu0
  %v136 = vadd.f32 %v21, %v130
  %v137 = vadd.f32 %v22, %v133
  %138 = vst [vmem:[#allocation2] sm:$0xff] %v136
  %139 = vst [vmem:[#allocation2 + $0x8] sm:$0xff] %v137
  // Predicated region
  $region18: #{early_transformer_forward.65} parent=0 // pred_check
    %p140 = pneg %p15
  $region19: #{early_transformer_forward.65} parent=0 // pred_check_branch
    %142 = sbr.rel (%p140) target = $region21
  $region20: #{early_transformer_forward.65} parent=0 // pred_region
    %v143 = vld [vmem:[#allocation2] sm:$0xff]
    %v144 = vld [vmem:[#allocation2 + $0x8] sm:$0xff]
    %v145 = vld [vmem:[%s2] sm:$0x1]
    %v147 = vlaneseq
    %v148 = vshrl.u32 %v147, 7
    %v149 = vsub.s32 0, %v148
    %v150 = vrot.slane %v145, %v149
    %v152 = vadd.f32 %v143, %v150
    %v153 = vadd.f32 %v144, %v150
    %v154 = vmax.f32 %v152, 0.0
    %v155 = vmax.f32 %v153, 0.0
    %156 = vst [vmem:[%s3] sm:$0xff] %v154
    %157 = vst [vmem:[%s3 + $0x8] sm:$0xff] %v155
  $region21: #{early_transformer_forward.65} parent=0 // pred_fallthru
    _
  // Predicated region
  $region22: #{early_transformer_forward.65} parent=0 // pred_check
    _
  $region23: #{early_transformer_forward.65} parent=0 // pred_check_branch
    %159 = sbr.rel (0) target = $region25
  $region24: #{early_transformer_forward.65} parent=0 // pred_region
    _
  $region25: #{early_transformer_forward.65} parent=0 // pred_fallthru
    _
  // Predicated region
  $region26: #{early_transformer_forward.65} parent=0 // pred_check
    _
  $region27: #{early_transformer_forward.65} parent=0 // pred_check_branch
    %161 = sbr.rel (0) target = $region29
  $region28: #{early_transformer_forward.65} parent=0 // pred_region
    _
  $region29: #{early_transformer_forward.65} parent=0 // pred_fallthru
    _

// kernel: early_transformer_forward.62
$region0: #{early_transformer_forward.62}
  #allocation0 [shape = 'u32[]', space=smem, size = 0x4, offset = 0x4, fixed_abs, tag = 'smem constant byte address 0x4 - core index']
  #allocation1 [shape = 'u32[144,128]{1,0:T(1,128)}', space=vmem, size = 0x12000, scoped, tag = 'internal scratch']
  %s0 = inlined_call_operand.vmem [shape: bf16[2,4,8,8], index: 0, kind: input, shape index: {}]
  %s1 = inlined_call_operand.vmem [shape: bf16[2,4,3,8], index: 1, kind: input, shape index: {}]
  %s2 = inlined_call_operand.vmem [shape: bf16[2,4,3,8], index: 2, kind: input, shape index: {}]
  %s3 = inlined_call_operand.vmem [shape: f32[2,8,32], index: 3, kind: output, shape index: {}]
  %s4 = sld [smem:[#allocation0]]
  $region45: #{early_transformer_forward.62} parent=0
    _
  %s6 = ssub.s32 1, %s4
  %s7 = scalar_select 0, %s6, %s4
  loop: start=0, step=1, limit=4
  $region2: #{early_transformer_forward.62} parent=0 // loop_pre_header
    _
  $region3: #{early_transformer_forward.62} parent=0 // loop_header
    %s9 = sphi 0, %s13
    %p10 = scmp.ge.s32.totalorder %s9, 4
    %s19 = sphi 0, %s21
    %s22 = sphi 0, %s19
    %s23 = sphi 0, %s22
    %s39 = sphi 0, %s23
    %s45 = sphi 0, %s47
    %s48 = sphi 0, %s45
    %s49 = sphi 0, %s48
    %s65 = sphi 0, %s49
    %s71 = sphi 0, %s73
    %s74 = sphi 0, %s71
    %s75 = sphi 0, %s74
    %s91 = sphi 0, %s75
    %s97 = sphi 0, %s99
    %s100 = sphi 0, %s97
    %s101 = sphi 0, %s100
    %s117 = sphi 0, %s101
  $region4: #{early_transformer_forward.62} parent=0 // loop_header_branch
    %12 = sbr.rel (%p10) target = $region8
  $region5: #{early_transformer_forward.62} parent=0 // loop_body
    %s14 = ssub.s32 %s9, 1
    %s15 = ssub.s32 %s9, 2
    %s16 = sadd.s32 %s9, 1
    %s17 = ssub.s32 %s9, %s16
    %p18 = scmp.eq.s32.totalorder %s17, 0
    %s20 = sadd.s32 %s19, 1
    %s21 = scalar_select %p18, %s19, %s20
    %p24 = pneg %p18
    %p25 = scmp.eq.s32.totalorder %s9, 1
    %p26 = por %p24, %p25
    %p27 = scmp.ne.s32.totalorder %s19, %s22
    %p28 = scmp.eq.s32.totalorder %s9, 0
    %p29 = por %p27, %p28
    %p30 = scmp.ne.s32.totalorder %s19, %s22
    %p31 = scmp.eq.s32.totalorder %s14, 1
    %p32 = por %p30, %p31
    %p33 = scmp.ne.s32.totalorder %s22, %s23
    %p34 = scmp.eq.s32.totalorder %s14, 0
    %p35 = por %p33, %p34
    %p36 = scmp.ne.s32.totalorder %s22, %s23
    %p37 = scmp.eq.s32.totalorder %s15, 1
    %p38 = por %p36, %p37
    %p40 = scmp.ne.s32.totalorder %s23, %s39
    %p41 = scmp.eq.s32.totalorder %s15, 0
    %p42 = por %p40, %p41
    %s43 = ssub.s32 %s9, %s16
    %p44 = scmp.eq.s32.totalorder %s43, 0
    %s46 = sadd.s32 %s45, 1
    %s47 = scalar_select %p44, %s45, %s46
    %p50 = pneg %p44
    %p51 = scmp.eq.s32.totalorder %s9, 1
    %p52 = por %p50, %p51
    %p53 = scmp.ne.s32.totalorder %s45, %s48
    %p54 = scmp.eq.s32.totalorder %s9, 0
    %p55 = por %p53, %p54
    %p56 = scmp.ne.s32.totalorder %s45, %s48
    %p57 = scmp.eq.s32.totalorder %s14, 1
    %p58 = por %p56, %p57
    %p59 = scmp.ne.s32.totalorder %s48, %s49
    %p60 = scmp.eq.s32.totalorder %s14, 0
    %p61 = por %p59, %p60
    %p62 = scmp.ne.s32.totalorder %s48, %s49
    %p63 = scmp.eq.s32.totalorder %s15, 1
    %p64 = por %p62, %p63
    %p66 = scmp.ne.s32.totalorder %s49, %s65
    %p67 = scmp.eq.s32.totalorder %s15, 0
    %p68 = por %p66, %p67
    %s69 = ssub.s32 %s9, %s16
    %p70 = scmp.eq.s32.totalorder %s69, 0
    %s72 = sadd.s32 %s71, 1
    %s73 = scalar_select %p70, %s71, %s72
    %p76 = pneg %p70
    %p77 = scmp.eq.s32.totalorder %s9, 1
    %p78 = por %p76, %p77
    %p79 = scmp.ne.s32.totalorder %s71, %s74
    %p80 = scmp.eq.s32.totalorder %s9, 0
    %p81 = por %p79, %p80
    %p82 = scmp.ne.s32.totalorder %s71, %s74
    %p83 = scmp.eq.s32.totalorder %s14, 1
    %p84 = por %p82, %p83
    %p85 = scmp.ne.s32.totalorder %s74, %s75
    %p86 = scmp.eq.s32.totalorder %s14, 0
    %p87 = por %p85, %p86
    %p88 = scmp.ne.s32.totalorder %s74, %s75
    %p89 = scmp.eq.s32.totalorder %s15, 1
    %p90 = por %p88, %p89
    %p92 = scmp.ne.s32.totalorder %s75, %s91
    %p93 = scmp.eq.s32.totalorder %s15, 0
    %p94 = por %p92, %p93
    %s95 = ssub.s32 %s9, %s16
    %p96 = scmp.eq.s32.totalorder %s95, 0
    %s98 = sadd.s32 %s97, 1
    %s99 = scalar_select %p96, %s97, %s98
    %p102 = pneg %p96
    %p103 = scmp.eq.s32.totalorder %s9, 1
    %p104 = por %p102, %p103
    %p105 = scmp.ne.s32.totalorder %s97, %s100
    %p106 = scmp.eq.s32.totalorder %s9, 0
    %p107 = por %p105, %p106
    %p108 = scmp.ne.s32.totalorder %s97, %s100
    %p109 = scmp.eq.s32.totalorder %s14, 1
    %p110 = por %p108, %p109
    %p111 = scmp.ne.s32.totalorder %s100, %s101
    %p112 = scmp.eq.s32.totalorder %s14, 0
    %p113 = por %p111, %p112
    %p114 = scmp.ne.s32.totalorder %s100, %s101
    %p115 = scmp.eq.s32.totalorder %s15, 1
    %p116 = por %p114, %p115
    %p118 = scmp.ne.s32.totalorder %s101, %s117
    %p119 = scmp.eq.s32.totalorder %s15, 0
    %p120 = por %p118, %p119
    %p121 = scmp.le.s32.totalorder 1, %s9
    %p122 = scmp.lt.s32.totalorder %s9, 3
    %p123 = pnand %p121, %p122
    %p124 = pneg %p123
    // Predicated region
    $region9: #{early_transformer_forward.62} parent=5 // pred_check
      _
    $region10: #{early_transformer_forward.62} parent=5 // pred_check_branch
      %126 = sbr.rel (%p123) target = $region12
    $region11: #{early_transformer_forward.62} parent=5 // pred_region
      %s127 = ssub.s32 %s9, 1
    $region12: #{early_transformer_forward.62} parent=5 // pred_fallthru
      _
    %p128 = scmp.lt.s32.totalorder %s9, 2
    // Predicated region
    $region13: #{early_transformer_forward.62} parent=5 // pred_check
      %p129 = pneg %p128
    $region14: #{early_transformer_forward.62} parent=5 // pred_check_branch
      %131 = sbr.rel (%p129) target = $region16
    $region15: #{early_transformer_forward.62} parent=5 // pred_region
      // Predicated region
      $region17: #{early_transformer_forward.62} parent=15 // pred_check
        %p132 = pneg %p29
      $region18: #{early_transformer_forward.62} parent=15 // pred_check_branch
        %134 = sbr.rel (%p132) target = $region20
      $region19: #{early_transformer_forward.62} parent=15 // pred_region
        %p135 = scmp.lt.s32.totalorder %s9, 1
        %s136 = scalar_select %p135, %s9, 1
        %s137 = smul.addr %s136, 4
        %s138 = smul.addr %s137, 4
        %s139 = scalar_lea.vmem %s0, %s138
      $region20: #{early_transformer_forward.62} parent=15 // pred_fallthru
        _
      // Predicated region
      $region21: #{early_transformer_forward.62} parent=15 // pred_check
        %p140 = pneg %p55
      $region22: #{early_transformer_forward.62} parent=15 // pred_check_branch
        %142 = sbr.rel (%p140) target = $region24
      $region23: #{early_transformer_forward.62} parent=15 // pred_region
        %p143 = scmp.lt.s32.totalorder %s9, 1
        %s144 = scalar_select %p143, %s9, 1
        %s145 = smul.addr %s144, 4
        %s146 = smul.addr %s145, 2
        %s147 = scalar_lea.vmem %s1, %s146
      $region24: #{early_transformer_forward.62} parent=15 // pred_fallthru
        _
      // Predicated region
      $region25: #{early_transformer_forward.62} parent=15 // pred_check
        %p148 = pneg %p81
      $region26: #{early_transformer_forward.62} parent=15 // pred_check_branch
        %150 = sbr.rel (%p148) target = $region28
      $region27: #{early_transformer_forward.62} parent=15 // pred_region
        %p151 = scmp.lt.s32.totalorder %s9, 1
        %s152 = scalar_select %p151, %s9, 1
        %s153 = smul.addr %s152, 4
        %s154 = smul.addr %s153, 2
        %s155 = scalar_lea.vmem %s2, %s154
      $region28: #{early_transformer_forward.62} parent=15 // pred_fallthru
        _
    $region16: #{early_transformer_forward.62} parent=5 // pred_fallthru
      _
    %p156 = scmp.le.s32.totalorder 1, %s9
    %p157 = scmp.lt.s32.totalorder %s9, 3
    %p158 = pnand %p156, %p157
    %p159 = pneg %p158
    // Predicated region
    $region29: #{early_transformer_forward.62} parent=5 // pred_check
      _
    $region30: #{early_transformer_forward.62} parent=5 // pred_check_branch
      %161 = sbr.rel (%p158) target = $region32
    $region31: #{early_transformer_forward.62} parent=5 // pred_region
      %s162 = ssub.s32 %s9, 1
      %p163 = scmp.lt.s32.totalorder %s14, 1
      %s164 = scalar_select %p163, %s14, 1
      %s165 = smul.addr %s164, 4
      %s166 = smul.addr %s165, 4
      %s167 = scalar_lea.vmem %s0, %s166
      %p168 = pneg %p35
      %p169 = pneg %p32
      %p170 = scmp.lt.s32.totalorder %s14, 1
      %s171 = scalar_select %p170, %s14, 1
      %s172 = smul.addr %s171, 4
      %s173 = smul.addr %s172, 2
      %s174 = scalar_lea.vmem %s1, %s173
      %p175 = pneg %p61
      %p176 = pneg %p58
      %p177 = scmp.lt.s32.totalorder %s14, 1
      %s178 = scalar_select %p177, %s14, 1
      %s179 = smul.addr %s178, 4
      %s180 = smul.addr %s179, 2
      %s181 = scalar_lea.vmem %s2, %s180
      %p182 = pneg %p87
      %p183 = pneg %p84
      %p184 = pneg %p113
      %p185 = pneg %p110
      %p186 = scmp.lt.s32.totalorder %s14, 1
      %s187 = scalar_select %p186, %s14, 1
      %s188 = smul.addr %s187, 8
      %s189 = scalar_lea.vmem %s3, %s188
      %p190 = scmp.lt.s32.totalorder %s14, 1
      %s191 = scalar_select %p190, %s14, 1
      %s192 = smul.addr %s191, 4
      %s193 = smul.addr %s192, 4
      %s194 = scalar_lea.vmem %s0, %s193
      %p195 = scmp.lt.s32.totalorder %s14, 1
      %s196 = scalar_select %p195, %s14, 1
      %s197 = smul.addr %s196, 4
      %s198 = smul.addr %s197, 2
      %s199 = scalar_lea.vmem %s1, %s198
      %p200 = scmp.lt.s32.totalorder %s14, 1
      %s201 = scalar_select %p200, %s14, 1
      %s202 = smul.addr %s201, 4
      %s203 = smul.addr %s202, 2
      %s204 = scalar_lea.vmem %s2, %s203
      %p205 = scmp.lt.s32.totalorder %s14, 1
      %s206 = scalar_select %p205, %s14, 1
      %s207 = smul.addr %s206, 8
      %s208 = scalar_lea.vmem %s3, %s207
      %v210 = vld [vmem:[%s194] sm:$0xf]
      %v211 = vld [vmem:[%s194 + $0x4] sm:$0xf]
      %v212 = vld [vmem:[%s194 + $0x8] sm:$0xf]
      %v213 = vld [vmem:[%s194 + $0xc] sm:$0xf]
      %v214 = vld [vmem:[%s199] sm:$0x3]
      %v215 = vld [vmem:[%s199 + $0x2] sm:$0x3]
      %v216 = vld [vmem:[%s199 + $0x4] sm:$0x3]
      %v217 = vld [vmem:[%s199 + $0x6] sm:$0x3]
      %v218 = vld [vmem:[%s204] sm:$0x3]
      %v219 = vld [vmem:[%s204 + $0x2] sm:$0x3]
      %v220 = vld [vmem:[%s204 + $0x4] sm:$0x3]
      %v221 = vld [vmem:[%s204 + $0x6] sm:$0x3]
      %vm222 = vcmask 64512
      %v224 = vsel %vm222, %v210, 0
      %v227 = vsel %vm222, %v214, 0
      %229 = vmatprep.subr.bf16.mxu0 0
      %230 = vmatpush1.bf16.xpose.msra.mxu0 0
      %231 = vmatprep.subr.bf16.mxu0 0
      %232 = vmatpush1.bf16.xpose.msra.mxu0 0
      %233 = vmatprep.subr.bf16.mxu0 0
      %234 = vmatpush1.bf16.xpose.msra.mxu0 0
      %235 = vmatprep.subr.bf16.mxu0 0
      %236 = vmatpush1.bf16.xpose.msra.mxu0 0
      %237 = vmatprep.subr.bf16.mxu0 0
      %238 = vmatpush1.bf16.xpose.msra.mxu0 0
      %239 = vmatprep.subr.bf16.mxu0 0
      %240 = vmatpush1.bf16.xpose.msra.mxu0 0
      %241 = vmatprep.subr.bf16.mxu0 0
      %242 = vmatpush1.bf16.xpose.msra.mxu0 0
      %243 = vmatprep.subr.bf16.mxu0 0
      %244 = vmatpush1.bf16.xpose.msra.mxu0 %v227
      %245 = vmatprep.subr.bf16.mxu0 0
      %246 = vmatpush2.bf16.xpose.msra.mxu0 0
      %247 = vmatprep.subr.bf16.mxu0 0
      %248 = vmatpush2.bf16.xpose.msra.mxu0 0
      %249 = vmatprep.subr.bf16.mxu0 0
      %250 = vmatpush2.bf16.xpose.msra.mxu0 0
      %251 = vmatprep.subr.bf16.mxu0 0
      %252 = vmatpush2.bf16.xpose.msra.mxu0 0
      %253 = vmatprep.subr.bf16.mxu0 0
      %254 = vmatpush2.bf16.xpose.msra.mxu0 0
      %255 = vmatprep.subr.bf16.mxu0 0
      %256 = vmatpush2.bf16.xpose.msra.mxu0 0
      %257 = vmatprep.subr.bf16.mxu0 0
      %258 = vmatpush2.bf16.xpose.msra.mxu0 0
      %259 = vmatprep.subr.bf16.mxu0 0
      %260 = vmatpush2.bf16.xpose.msra.mxu0 0
      %261 = vmatprep.mubr.bf16.mxu0 0
      %262 = vmatmul.mubr.bf16.gmra.mxu0 %v224
      %v263 = vpop.f32.mrf.mxu0
      %v264 = vadd.f32 0.0, %v263
      %v265 = vpop.f32.mrf.mxu0
      %v266 = vpop.f32.mrf.mxu0
      %v267 = vpop.f32.mrf.mxu0
      %268 = vdwg.mxu0
      %v270 = vsel %vm222, %v211, 0
      %v273 = vsel %vm222, %v215, 0
      %275 = vmatprep.subr.bf16.mxu0 0
      %276 = vmatpush1.bf16.xpose.msra.mxu0 0
      %277 = vmatprep.subr.bf16.mxu0 0
      %278 = vmatpush1.bf16.xpose.msra.mxu0 0
      %279 = vmatprep.subr.bf16.mxu0 0
      %280 = vmatpush1.bf16.xpose.msra.mxu0 0
      %281 = vmatprep.subr.bf16.mxu0 0
      %282 = vmatpush1.bf16.xpose.msra.mxu0 0
      %283 = vmatprep.subr.bf16.mxu0 0
      %284 = vmatpush1.bf16.xpose.msra.mxu0 0
      %285 = vmatprep.subr.bf16.mxu0 0
      %286 = vmatpush1.bf16.xpose.msra.mxu0 0
      %287 = vmatprep.subr.bf16.mxu0 0
      %288 = vmatpush1.bf16.xpose.msra.mxu0 0
      %289 = vmatprep.subr.bf16.mxu0 0
      %290 = vmatpush1.bf16.xpose.msra.mxu0 %v273
      %291 = vmatprep.subr.bf16.mxu0 0
      %292 = vmatpush2.bf16.xpose.msra.mxu0 0
      %293 = vmatprep.subr.bf16.mxu0 0
      %294 = vmatpush2.bf16.xpose.msra.mxu0 0
      %295 = vmatprep.subr.bf16.mxu0 0
      %296 = vmatpush2.bf16.xpose.msra.mxu0 0
      %297 = vmatprep.subr.bf16.mxu0 0
      %298 = vmatpush2.bf16.xpose.msra.mxu0 0
      %299 = vmatprep.subr.bf16.mxu0 0
      %300 = vmatpush2.bf16.xpose.msra.mxu0 0
      %301 = vmatprep.subr.bf16.mxu0 0
      %302 = vmatpush2.bf16.xpose.msra.mxu0 0
      %303 = vmatprep.subr.bf16.mxu0 0
      %304 = vmatpush2.bf16.xpose.msra.mxu0 0
      %305 = vmatprep.subr.bf16.mxu0 0
      %306 = vmatpush2.bf16.xpose.msra.mxu0 0
      %307 = vmatprep.mubr.bf16.mxu0 0
      %308 = vmatmul.mubr.bf16.gmra.mxu0 %v270
      %v309 = vpop.f32.mrf.mxu0
      %v310 = vadd.f32 0.0, %v309
      %v311 = vpop.f32.mrf.mxu0
      %v312 = vpop.f32.mrf.mxu0
      %v313 = vpop.f32.mrf.mxu0
      %314 = vdwg.mxu0
      %v316 = vsel %vm222, %v212, 0
      %v319 = vsel %vm222, %v216, 0
      %321 = vmatprep.subr.bf16.mxu0 0
      %322 = vmatpush1.bf16.xpose.msra.mxu0 0
      %323 = vmatprep.subr.bf16.mxu0 0
      %324 = vmatpush1.bf16.xpose.msra.mxu0 0
      %325 = vmatprep.subr.bf16.mxu0 0
      %326 = vmatpush1.bf16.xpose.msra.mxu0 0
      %327 = vmatprep.subr.bf16.mxu0 0
      %328 = vmatpush1.bf16.xpose.msra.mxu0 0
      %329 = vmatprep.subr.bf16.mxu0 0
      %330 = vmatpush1.bf16.xpose.msra.mxu0 0
      %331 = vmatprep.subr.bf16.mxu0 0
      %332 = vmatpush1.bf16.xpose.msra.mxu0 0
      %333 = vmatprep.subr.bf16.mxu0 0
      %334 = vmatpush1.bf16.xpose.msra.mxu0 0
      %335 = vmatprep.subr.bf16.mxu0 0
      %336 = vmatpush1.bf16.xpose.msra.mxu0 %v319
      %337 = vmatprep.subr.bf16.mxu0 0
      %338 = vmatpush2.bf16.xpose.msra.mxu0 0
      %339 = vmatprep.subr.bf16.mxu0 0
      %340 = vmatpush2.bf16.xpose.msra.mxu0 0
      %341 = vmatprep.subr.bf16.mxu0 0
      %342 = vmatpush2.bf16.xpose.msra.mxu0 0
      %343 = vmatprep.subr.bf16.mxu0 0
      %344 = vmatpush2.bf16.xpose.msra.mxu0 0
      %345 = vmatprep.subr.bf16.mxu0 0
      %346 = vmatpush2.bf16.xpose.msra.mxu0 0
      %347 = vmatprep.subr.bf16.mxu0 0
      %348 = vmatpush2.bf16.xpose.msra.mxu0 0
      %349 = vmatprep.subr.bf16.mxu0 0
      %350 = vmatpush2.bf16.xpose.msra.mxu0 0
      %351 = vmatprep.subr.bf16.mxu0 0
      %352 = vmatpush2.bf16.xpose.msra.mxu0 0
      %353 = vmatprep.mubr.bf16.mxu0 0
      %354 = vmatmul.mubr.bf16.gmra.mxu0 %v316
      %v355 = vpop.f32.mrf.mxu0
      %v356 = vadd.f32 0.0, %v355
      %v357 = vpop.f32.mrf.mxu0
      %v358 = vpop.f32.mrf.mxu0
      %v359 = vpop.f32.mrf.mxu0
      %360 = vdwg.mxu0
      %v362 = vsel %vm222, %v213, 0
      %v365 = vsel %vm222, %v217, 0
      %367 = vmatprep.subr.bf16.mxu0 0
      %368 = vmatpush1.bf16.xpose.msra.mxu0 0
      %369 = vmatprep.subr.bf16.mxu0 0
      %370 = vmatpush1.bf16.xpose.msra.mxu0 0
      %371 = vmatprep.subr.bf16.mxu0 0
      %372 = vmatpush1.bf16.xpose.msra.mxu0 0
      %373 = vmatprep.subr.bf16.mxu0 0
      %374 = vmatpush1.bf16.xpose.msra.mxu0 0
      %375 = vmatprep.subr.bf16.mxu0 0
      %376 = vmatpush1.bf16.xpose.msra.mxu0 0
      %377 = vmatprep.subr.bf16.mxu0 0
      %378 = vmatpush1.bf16.xpose.msra.mxu0 0
      %379 = vmatprep.subr.bf16.mxu0 0
      %380 = vmatpush1.bf16.xpose.msra.mxu0 0
      %381 = vmatprep.subr.bf16.mxu0 0
      %382 = vmatpush1.bf16.xpose.msra.mxu0 %v365
      %383 = vmatprep.subr.bf16.mxu0 0
      %384 = vmatpush2.bf16.xpose.msra.mxu0 0
      %385 = vmatprep.subr.bf16.mxu0 0
      %386 = vmatpush2.bf16.xpose.msra.mxu0 0
      %387 = vmatprep.subr.bf16.mxu0 0
      %388 = vmatpush2.bf16.xpose.msra.mxu0 0
      %389 = vmatprep.subr.bf16.mxu0 0
      %390 = vmatpush2.bf16.xpose.msra.mxu0 0
      %391 = vmatprep.subr.bf16.mxu0 0
      %392 = vmatpush2.bf16.xpose.msra.mxu0 0
      %393 = vmatprep.subr.bf16.mxu0 0
      %394 = vmatpush2.bf16.xpose.msra.mxu0 0
      %395 = vmatprep.subr.bf16.mxu0 0
      %396 = vmatpush2.bf16.xpose.msra.mxu0 0
      %397 = vmatprep.subr.bf16.mxu0 0
      %398 = vmatpush2.bf16.xpose.msra.mxu0 0
      %399 = vmatprep.mubr.bf16.mxu0 0
      %400 = vmatmul.mubr.bf16.gmra.mxu0 %v362
      %v401 = vpop.f32.mrf.mxu0
      %v402 = vadd.f32 0.0, %v401
      %v403 = vpop.f32.mrf.mxu0
      %v404 = vpop.f32.mrf.mxu0
      %v405 = vpop.f32.mrf.mxu0
      %406 = vdwg.mxu0
      %v407 = vmul.f32 %v264, 0.35355338
      %v408 = vmul.f32 %v310, 0.35355338
      %v409 = vmul.f32 %v356, 0.35355338
      %v410 = vmul.f32 %v402, 0.35355338
      %vm411 = vcmask 23552
      %v412 = vsel %vm411, %v407, -inf
      %413 = vmax.xlane.f32.xlu0 %v412
      %v414 = vpop.xlane.xlu0 %413
      %v415 = vsel %vm411, %v408, -inf
      %416 = vmax.xlane.f32.xlu0 %v415
      %v417 = vpop.xlane.xlu0 %416
      %v418 = vsel %vm411, %v409, -inf
      %419 = vmax.xlane.f32.xlu0 %v418
      %v420 = vpop.xlane.xlu0 %419
      %v421 = vsel %vm411, %v410, -inf
      %422 = vmax.xlane.f32.xlu0 %v421
      %v423 = vpop.xlane.xlu0 %422
      %v424 = vsub.f32 %v407, %v414
      %v425 = vsub.f32 %v408, %v417
      %v426 = vsub.f32 %v409, %v420
      %v427 = vsub.f32 %v410, %v423
      %v428 = vmul.f32 %v424, 1.442695
      %v429 = vpow.pop %v428
      %v430 = vmul.f32 %v425, 1.442695
      %v431 = vpow.pop %v430
      %v432 = vmul.f32 %v426, 1.442695
      %v433 = vpow.pop %v432
      %v434 = vmul.f32 %v427, 1.442695
      %v435 = vpow.pop %v434
      %v436 = vsel %vm411, %v429, 0.0
      %437 = vadd.xlane.f32.xlu0 %v436
      %v438 = vpop.xlane.xlu0 %437
      %v439 = vsel %vm411, %v431, 0.0
      %440 = vadd.xlane.f32.xlu0 %v439
      %v441 = vpop.xlane.xlu0 %440
      %v442 = vsel %vm411, %v433, 0.0
      %443 = vadd.xlane.f32.xlu0 %v442
      %v444 = vpop.xlane.xlu0 %443
      %v445 = vsel %vm411, %v435, 0.0
      %446 = vadd.xlane.f32.xlu0 %v445
      %v447 = vpop.xlane.xlu0 %446
      %v448 = vpack.c.bf16 %v429, %v429
      %v449 = vpack.c.bf16 %v431, %v431
      %v450 = vpack.c.bf16 %v433, %v433
      %v451 = vpack.c.bf16 %v435, %v435
      %v453 = vsel %vm411, %v448, 0
      %vm455 = vcmask 1040384
      %vm456 = vcmask 1041408
      %v457 = vsel %vm455, 4294967295, 65535
      %v458 = vsel %vm456, %v457, 0
      %v460 = vand.u32 %v218, %v458
      %462 = vmatprep.subr.bf16.mxu0 0
      %463 = vmatpush1.bf16.msra.mxu0 0
      %464 = vmatprep.subr.bf16.mxu0 0
      %465 = vmatpush1.bf16.msra.mxu0 0
      %466 = vmatprep.subr.bf16.mxu0 0
      %467 = vmatpush1.bf16.msra.mxu0 0
      %468 = vmatprep.subr.bf16.mxu0 0
      %469 = vmatpush1.bf16.msra.mxu0 0
      %470 = vmatprep.subr.bf16.mxu0 0
      %471 = vmatpush1.bf16.msra.mxu0 0
      %472 = vmatprep.subr.bf16.mxu0 0
      %473 = vmatpush1.bf16.msra.mxu0 0
      %474 = vmatprep.subr.bf16.mxu0 0
      %475 = vmatpush1.bf16.msra.mxu0 0
      %476 = vmatprep.subr.bf16.mxu0 0
      %477 = vmatpush1.bf16.msra.mxu0 %v460
      %478 = vmatprep.subr.bf16.mxu0 0
      %479 = vmatpush2.bf16.msra.mxu0 0
      %480 = vmatprep.subr.bf16.mxu0 0
      %481 = vmatpush2.bf16.msra.mxu0 0
      %482 = vmatprep.subr.bf16.mxu0 0
      %483 = vmatpush2.bf16.msra.mxu0 0
      %484 = vmatprep.subr.bf16.mxu0 0
      %485 = vmatpush2.bf16.msra.mxu0 0
      %486 = vmatprep.subr.bf16.mxu0 0
      %487 = vmatpush2.bf16.msra.mxu0 0
      %488 = vmatprep.subr.bf16.mxu0 0
      %489 = vmatpush2.bf16.msra.mxu0 0
      %490 = vmatprep.subr.bf16.mxu0 0
      %491 = vmatpush2.bf16.msra.mxu0 0
      %492 = vmatprep.subr.bf16.mxu0 0
      %493 = vmatpush2.bf16.msra.mxu0 0
      %494 = vmatprep.mubr.bf16.mxu0 0
      %495 = vmatmul.mubr.bf16.gmra.mxu0 %v453
      %v496 = vpop.f32.mrf.mxu0
      %v497 = vadd.f32 0.0, %v496
      %v498 = vpop.f32.mrf.mxu0
      %v499 = vpop.f32.mrf.mxu0
      %v500 = vpop.f32.mrf.mxu0
      %501 = vdwg.mxu0
      %v503 = vsel %vm411, %v449, 0
      %v506 = vand.u32 %v219, %v458
      %508 = vmatprep.subr.bf16.mxu0 0
      %509 = vmatpush1.bf16.msra.mxu0 0
      %510 = vmatprep.subr.bf16.mxu0 0
      %511 = vmatpush1.bf16.msra.mxu0 0
      %512 = vmatprep.subr.bf16.mxu0 0
      %513 = vmatpush1.bf16.msra.mxu0 0
      %514 = vmatprep.subr.bf16.mxu0 0
      %515 = vmatpush1.bf16.msra.mxu0 0
      %516 = vmatprep.subr.bf16.mxu0 0
      %517 = vmatpush1.bf16.msra.mxu0 0
      %518 = vmatprep.subr.bf16.mxu0 0
      %519 = vmatpush1.bf16.msra.mxu0 0
      %520 = vmatprep.subr.bf16.mxu0 0
      %521 = vmatpush1.bf16.msra.mxu0 0
      %522 = vmatprep.subr.bf16.mxu0 0
      %523 = vmatpush1.bf16.msra.mxu0 %v506
      %524 = vmatprep.subr.bf16.mxu0 0
      %525 = vmatpush2.bf16.msra.mxu0 0
      %526 = vmatprep.subr.bf16.mxu0 0
      %527 = vmatpush2.bf16.msra.mxu0 0
      %528 = vmatprep.subr.bf16.mxu0 0
      %529 = vmatpush2.bf16.msra.mxu0 0
      %530 = vmatprep.subr.bf16.mxu0 0
      %531 = vmatpush2.bf16.msra.mxu0 0
      %532 = vmatprep.subr.bf16.mxu0 0
      %533 = vmatpush2.bf16.msra.mxu0 0
      %534 = vmatprep.subr.bf16.mxu0 0
      %535 = vmatpush2.bf16.msra.mxu0 0
      %536 = vmatprep.subr.bf16.mxu0 0
      %537 = vmatpush2.bf16.msra.mxu0 0
      %538 = vmatprep.subr.bf16.mxu0 0
      %539 = vmatpush2.bf16.msra.mxu0 0
      %540 = vmatprep.mubr.bf16.mxu0 0
      %541 = vmatmul.mubr.bf16.gmra.mxu0 %v503
      %v542 = vpop.f32.mrf.mxu0
      %v543 = vadd.f32 0.0, %v542
      %v544 = vpop.f32.mrf.mxu0
      %v545 = vpop.f32.mrf.mxu0
      %v546 = vpop.f32.mrf.mxu0
      %547 = vdwg.mxu0
      %v549 = vsel %vm411, %v450, 0
      %v552 = vand.u32 %v220, %v458
      %554 = vmatprep.subr.bf16.mxu0 0
      %555 = vmatpush1.bf16.msra.mxu0 0
      %556 = vmatprep.subr.bf16.mxu0 0
      %557 = vmatpush1.bf16.msra.mxu0 0
      %558 = vmatprep.subr.bf16.mxu0 0
      %559 = vmatpush1.bf16.msra.mxu0 0
      %560 = vmatprep.subr.bf16.mxu0 0
      %561 = vmatpush1.bf16.msra.mxu0 0
      %562 = vmatprep.subr.bf16.mxu0 0
      %563 = vmatpush1.bf16.msra.mxu0 0
      %564 = vmatprep.subr.bf16.mxu0 0
      %565 = vmatpush1.bf16.msra.mxu0 0
      %566 = vmatprep.subr.bf16.mxu0 0
      %567 = vmatpush1.bf16.msra.mxu0 0
      %568 = vmatprep.subr.bf16.mxu0 0
      %569 = vmatpush1.bf16.msra.mxu0 %v552
      %570 = vmatprep.subr.bf16.mxu0 0
      %571 = vmatpush2.bf16.msra.mxu0 0
      %572 = vmatprep.subr.bf16.mxu0 0
      %573 = vmatpush2.bf16.msra.mxu0 0
      %574 = vmatprep.subr.bf16.mxu0 0
      %575 = vmatpush2.bf16.msra.mxu0 0
      %576 = vmatprep.subr.bf16.mxu0 0
      %577 = vmatpush2.bf16.msra.mxu0 0
      %578 = vmatprep.subr.bf16.mxu0 0
      %579 = vmatpush2.bf16.msra.mxu0 0
      %580 = vmatprep.subr.bf16.mxu0 0
      %581 = vmatpush2.bf16.msra.mxu0 0
      %582 = vmatprep.subr.bf16.mxu0 0
      %583 = vmatpush2.bf16.msra.mxu0 0
      %584 = vmatprep.subr.bf16.mxu0 0
      %585 = vmatpush2.bf16.msra.mxu0 0
      %586 = vmatprep.mubr.bf16.mxu0 0
      %587 = vmatmul.mubr.bf16.gmra.mxu0 %v549
      %v588 = vpop.f32.mrf.mxu0
      %v589 = vadd.f32 0.0, %v588
      %v590 = vpop.f32.mrf.mxu0
      %v591 = vpop.f32.mrf.mxu0
      %v592 = vpop.f32.mrf.mxu0
      %593 = vdwg.mxu0
      %v595 = vsel %vm411, %v451, 0
      %v598 = vand.u32 %v221, %v458
      %600 = vmatprep.subr.bf16.mxu0 0
      %601 = vmatpush1.bf16.msra.mxu0 0
      %602 = vmatprep.subr.bf16.mxu0 0
      %603 = vmatpush1.bf16.msra.mxu0 0
      %604 = vmatprep.subr.bf16.mxu0 0
      %605 = vmatpush1.bf16.msra.mxu0 0
      %606 = vmatprep.subr.bf16.mxu0 0
      %607 = vmatpush1.bf16.msra.mxu0 0
      %608 = vmatprep.subr.bf16.mxu0 0
      %609 = vmatpush1.bf16.msra.mxu0 0
      %610 = vmatprep.subr.bf16.mxu0 0
      %611 = vmatpush1.bf16.msra.mxu0 0
      %612 = vmatprep.subr.bf16.mxu0 0
      %613 = vmatpush1.bf16.msra.mxu0 0
      %614 = vmatprep.subr.bf16.mxu0 0
      %615 = vmatpush1.bf16.msra.mxu0 %v598
      %616 = vmatprep.subr.bf16.mxu0 0
      %617 = vmatpush2.bf16.msra.mxu0 0
      %618 = vmatprep.subr.bf16.mxu0 0
      %619 = vmatpush2.bf16.msra.mxu0 0
      %620 = vmatprep.subr.bf16.mxu0 0
      %621 = vmatpush2.bf16.msra.mxu0 0
      %622 = vmatprep.subr.bf16.mxu0 0
      %623 = vmatpush2.bf16.msra.mxu0 0
      %624 = vmatprep.subr.bf16.mxu0 0
      %625 = vmatpush2.bf16.msra.mxu0 0
      %626 = vmatprep.subr.bf16.mxu0 0
      %627 = vmatpush2.bf16.msra.mxu0 0
      %628 = vmatprep.subr.bf16.mxu0 0
      %629 = vmatpush2.bf16.msra.mxu0 0
      %630 = vmatprep.subr.bf16.mxu0 0
      %631 = vmatpush2.bf16.msra.mxu0 0
      %632 = vmatprep.mubr.bf16.mxu0 0
      %633 = vmatmul.mubr.bf16.gmra.mxu0 %v595
      %v634 = vpop.f32.mrf.mxu0
      %v635 = vadd.f32 0.0, %v634
      %v636 = vpop.f32.mrf.mxu0
      %v637 = vpop.f32.mrf.mxu0
      %v638 = vpop.f32.mrf.mxu0
      %639 = vdwg.mxu0
      %v640 = vrcp.pop %v438
      %v641 = vrcp.pop %v441
      %v642 = vrcp.pop %v444
      %v643 = vrcp.pop %v447
      %v644 = vmul.f32 %v497, %v640
      %v645 = vmul.f32 %v543, %v641
      %v646 = vmul.f32 %v589, %v642
      %v647 = vmul.f32 %v635, %v643
      %649 = vrot.lane.b32.xlu0 %v645, 8
      %v650 = vpop.permute.xlu0 %649
      %653 = vrot.lane.b32.xlu0 %v646, 16
      %v654 = vpop.permute.xlu0 %653
      %657 = vrot.lane.b32.xlu0 %v647, 24
      %v658 = vpop.permute.xlu0 %657
      %v660 = vsel %vm222, %v644, %v650
      %vm661 = vcmask 130048
      %v662 = vsel %vm661, %v660, %v654
      %vm663 = vcmask 195584
      %v664 = vsel %vm663, %v662, %v658
      %vm665 = vcmask 261120
      %666 = vst.msk [vmem:[%s208] sm:$0xff] %vm665, %v664
      %p667 = scmp.lt.s32.totalorder %s14, 1
      %s668 = scalar_select %p667, %s14, 1
      %s669 = smul.addr %s668, 8
      %s670 = scalar_lea.vmem %s3, %s669
      // Predicated region
      $region33: #{early_transformer_forward.62} parent=31 // pred_check
        %p671 = pneg %p110
      $region34: #{early_transformer_forward.62} parent=31 // pred_check_branch
        %673 = sbr.rel (%p671) target = $region36
      $region35: #{early_transformer_forward.62} parent=31 // pred_region
        _
      $region36: #{early_transformer_forward.62} parent=31 // pred_fallthru
        _
    $region32: #{early_transformer_forward.62} parent=5 // pred_fallthru
      _
    %p674 = scmp.le.s32.totalorder 2, %s9
    // Predicated region
    $region37: #{early_transformer_forward.62} parent=5 // pred_check
      %p675 = pneg %p674
    $region38: #{early_transformer_forward.62} parent=5 // pred_check_branch
      %677 = sbr.rel (%p675) target = $region40
    $region39: #{early_transformer_forward.62} parent=5 // pred_region
      %s678 = ssub.s32 %s9, 2
      // Predicated region
      $region41: #{early_transformer_forward.62} parent=39 // pred_check
        %p679 = pneg %p116
      $region42: #{early_transformer_forward.62} parent=39 // pred_check_branch
        %681 = sbr.rel (%p679) target = $region44
      $region43: #{early_transformer_forward.62} parent=39 // pred_region
        %p682 = scmp.lt.s32.totalorder %s15, 1
        %s683 = scalar_select %p682, %s15, 1
        %s684 = smul.addr %s683, 8
        %s685 = scalar_lea.vmem %s3, %s684
      $region44: #{early_transformer_forward.62} parent=39 // pred_fallthru
        _
    $region40: #{early_transformer_forward.62} parent=5 // pred_fallthru
      _
  $region6: #{early_transformer_forward.62} parent=0 // loop_footer
    %s13 = sadd.s32 1, %s9
  $region7: #{early_transformer_forward.62} parent=0 // loop_footer_branch
    %8 = sbr.rel target = $region3
  $region8: #{early_transformer_forward.62} parent=0 // loop_exit
    _

// kernel: early_transformer_forward.90
$region0: #{early_transformer_forward.90}
  #allocation0 [shape = 'u32[]', space=smem, size = 0x4, offset = 0x4, fixed_abs, tag = 'smem constant byte address 0x4 - core index']
  #allocation1 [shape = 'u32[144,128]{1,0:T(1,128)}', space=vmem, size = 0x12000, scoped, tag = 'internal scratch']
  #allocation2 [shape = 'f32[16,128]{1,0:T(8,128)}', space=vmem, size = 0x2000, scoped, tag = 'scratch operand']
  %s0 = inlined_call_operand.vmem [shape: bf16[16,128], index: 0, kind: input, shape index: {}]
  %s1 = inlined_call_operand.vmem [shape: bf16[128,128], index: 1, kind: input, shape index: {}]
  %s2 = inlined_call_operand.vmem [shape: f32[1,128], index: 2, kind: input, shape index: {}]
  %s3 = inlined_call_operand.vmem [shape: f32[16,128], index: 3, kind: output, shape index: {}]
  %s4 = sld [smem:[#allocation0]]
  $region30: #{early_transformer_forward.90} parent=0
    _
  %s6 = ssub.s32 1, %s4
  %s7 = scalar_select 0, %s6, %s4
  // Predicated region
  $region2: #{early_transformer_forward.90} parent=0 // pred_check
    _
  $region3: #{early_transformer_forward.90} parent=0 // pred_check_branch
    %9 = sbr.rel (0) target = $region5
  $region4: #{early_transformer_forward.90} parent=0 // pred_region
    _
  $region5: #{early_transformer_forward.90} parent=0 // pred_fallthru
    _
  // Predicated region
  $region6: #{early_transformer_forward.90} parent=0 // pred_check
    _
  $region7: #{early_transformer_forward.90} parent=0 // pred_check_branch
    %11 = sbr.rel (0) target = $region9
  $region8: #{early_transformer_forward.90} parent=0 // pred_region
    _
  $region9: #{early_transformer_forward.90} parent=0 // pred_fallthru
    _
  // Predicated region
  $region10: #{early_transformer_forward.90} parent=0 // pred_check
    _
  $region11: #{early_transformer_forward.90} parent=0 // pred_check_branch
    %13 = sbr.rel (0) target = $region13
  $region12: #{early_transformer_forward.90} parent=0 // pred_region
    _
  $region13: #{early_transformer_forward.90} parent=0 // pred_fallthru
    _
  %p15 = scmp.eq.s32.totalorder 0, 0
  // Predicated region
  $region14: #{early_transformer_forward.90} parent=0 // pred_check
    %p16 = pneg %p15
  $region15: #{early_transformer_forward.90} parent=0 // pred_check_branch
    %18 = sbr.rel (%p16) target = $region17
  $region16: #{early_transformer_forward.90} parent=0 // pred_region
    %19 = vst [vmem:[#allocation2] sm:$0xff] 0.0
    %20 = vst [vmem:[#allocation2 + $0x8] sm:$0xff] 0.0
  $region17: #{early_transformer_forward.90} parent=0 // pred_fallthru
    _
  %v21 = vld [vmem:[#allocation2] sm:$0xff]
  %v22 = vld [vmem:[#allocation2 + $0x8] sm:$0xff]
  %v23 = vld [vmem:[%s0] sm:$0xf]
  %v24 = vld [vmem:[%s0 + $0x4] sm:$0xf]
  %v25 = vld [vmem:[%s1] sm:$0xf]
  %v26 = vld [vmem:[%s1 + $0x4] sm:$0xf]
  %v27 = vld [vmem:[%s1 + $0x8] sm:$0xf]
  %v28 = vld [vmem:[%s1 + $0xc] sm:$0xf]
  %v29 = vld [vmem:[%s1 + $0x10] sm:$0xf]
  %v30 = vld [vmem:[%s1 + $0x14] sm:$0xf]
  %v31 = vld [vmem:[%s1 + $0x18] sm:$0xf]
  %v32 = vld [vmem:[%s1 + $0x1c] sm:$0xf]
  %v33 = vld [vmem:[%s1 + $0x20] sm:$0xf]
  %v34 = vld [vmem:[%s1 + $0x24] sm:$0xf]
  %v35 = vld [vmem:[%s1 + $0x28] sm:$0xf]
  %v36 = vld [vmem:[%s1 + $0x2c] sm:$0xf]
  %v37 = vld [vmem:[%s1 + $0x30] sm:$0xf]
  %v38 = vld [vmem:[%s1 + $0x34] sm:$0xf]
  %v39 = vld [vmem:[%s1 + $0x38] sm:$0xf]
  %v40 = vld [vmem:[%s1 + $0x3c] sm:$0xf]
  %v43 = vunpack.c.l.b16 %v23
  %v44 = vunpack.c.l.b16 %v24
  %v45 = vpack.c.b16 %v44, %v43
  %v63 = vunpack.c.l.b16 %v25
  %v64 = vunpack.c.l.b16 %v26
  %v65 = vunpack.c.l.b16 %v27
  %v66 = vunpack.c.l.b16 %v28
  %v67 = vunpack.c.l.b16 %v29
  %v68 = vunpack.c.l.b16 %v30
  %v69 = vunpack.c.l.b16 %v31
  %v70 = vunpack.c.l.b16 %v32
  %v71 = vunpack.c.l.b16 %v33
  %v72 = vunpack.c.l.b16 %v34
  %v73 = vunpack.c.l.b16 %v35
  %v74 = vunpack.c.l.b16 %v36
  %v75 = vunpack.c.l.b16 %v37
  %v76 = vunpack.c.l.b16 %v38
  %v77 = vunpack.c.l.b16 %v39
  %v78 = vunpack.c.l.b16 %v40
  %v79 = vpack.c.b16 %v64, %v63
  %v80 = vpack.c.b16 %v66, %v65
  %v81 = vpack.c.b16 %v68, %v67
  %v82 = vpack.c.b16 %v70, %v69
  %v83 = vpack.c.b16 %v72, %v71
  %v84 = vpack.c.b16 %v74, %v73
  %v85 = vpack.c.b16 %v76, %v75
  %v86 = vpack.c.b16 %v78, %v77
  %95 = vmatprep.subr.bf16.mxu0 0
  %96 = vmatpush1.bf16.msra.mxu0 %v86
  %97 = vmatprep.subr.bf16.mxu0 0
  %98 = vmatpush1.bf16.msra.mxu0 %v85
  %99 = vmatprep.subr.bf16.mxu0 0
  %100 = vmatpush1.bf16.msra.mxu0 %v84
  %101 = vmatprep.subr.bf16.mxu0 0
  %102 = vmatpush1.bf16.msra.mxu0 %v83
  %103 = vmatprep.subr.bf16.mxu0 0
  %104 = vmatpush1.bf16.msra.mxu0 %v82
  %105 = vmatprep.subr.bf16.mxu0 0
  %106 = vmatpush1.bf16.msra.mxu0 %v81
  %107 = vmatprep.subr.bf16.mxu0 0
  %108 = vmatpush1.bf16.msra.mxu0 %v80
  %109 = vmatprep.subr.bf16.mxu0 0
  %110 = vmatpush1.bf16.msra.mxu0 %v79
  %111 = vmatprep.subr.bf16.mxu0 0
  %112 = vmatpush2.bf16.msra.mxu0 0
  %113 = vmatprep.subr.bf16.mxu0 0
  %114 = vmatpush2.bf16.msra.mxu0 0
  %115 = vmatprep.subr.bf16.mxu0 0
  %116 = vmatpush2.bf16.msra.mxu0 0
  %117 = vmatprep.subr.bf16.mxu0 0
  %118 = vmatpush2.bf16.msra.mxu0 0
  %119 = vmatprep.subr.bf16.mxu0 0
  %120 = vmatpush2.bf16.msra.mxu0 0
  %121 = vmatprep.subr.bf16.mxu0 0
  %122 = vmatpush2.bf16.msra.mxu0 0
  %123 = vmatprep.subr.bf16.mxu0 0
  %124 = vmatpush2.bf16.msra.mxu0 0
  %125 = vmatprep.subr.bf16.mxu0 0
  %126 = vmatpush2.bf16.msra.mxu0 0
  %127 = vmatprep.mubr.bf16.mxu0 0
  %128 = vmatmul.mubr.bf16.gmra.mxu0 %v45
  %v129 = vpop.f32.mrf.mxu0
  %v130 = vadd.f32 0.0, %v129
  %v131 = vpop.f32.mrf.mxu0
  %v132 = vpop.f32.mrf.mxu0
  %v133 = vadd.f32 0.0, %v132
  %v134 = vpop.f32.mrf.mxu0
  %135 = vdwg.mxu0
  %v136 = vadd.f32 %v21, %v130
  %v137 = vadd.f32 %v22, %v133
  %138 = vst [vmem:[#allocation2] sm:$0xff] %v136
  %139 = vst [vmem:[#allocation2 + $0x8] sm:$0xff] %v137
  // Predicated region
  $region18: #{early_transformer_forward.90} parent=0 // pred_check
    %p140 = pneg %p15
  $region19: #{early_transformer_forward.90} parent=0 // pred_check_branch
    %142 = sbr.rel (%p140) target = $region21
  $region20: #{early_transformer_forward.90} parent=0 // pred_region
    %v143 = vld [vmem:[#allocation2] sm:$0xff]
    %v144 = vld [vmem:[#allocation2 + $0x8] sm:$0xff]
    %v145 = vld [vmem:[%s2] sm:$0x1]
    %v147 = vlaneseq
    %v148 = vshrl.u32 %v147, 7
    %v149 = vsub.s32 0, %v148
    %v150 = vrot.slane %v145, %v149
    %v152 = vadd.f32 %v143, %v150
    %v153 = vadd.f32 %v144, %v150
    %154 = vmax.xlane.f32.xlu0 %v152
    %v155 = vpop.xlane.xlu0 %154
    %156 = vmax.xlane.f32.xlu0 %v153
    %v157 = vpop.xlane.xlu0 %156
    %v158 = vsub.f32 %v152, %v155
    %v159 = vsub.f32 %v153, %v157
    %v160 = vmul.f32 %v158, 1.442695
    %v161 = vpow.pop %v160
    %v162 = vmul.f32 %v159, 1.442695
    %v163 = vpow.pop %v162
    %164 = vadd.xlane.f32.xlu0 %v161
    %v165 = vpop.xlane.xlu0 %164
    %166 = vadd.xlane.f32.xlu0 %v163
    %v167 = vpop.xlane.xlu0 %166
    %v168 = vlog2.pop %v165
    %v169 = vmul.f32 %v168, 0.6931472
    %v170 = vlog2.pop %v167
    %v171 = vmul.f32 %v170, 0.6931472
    %v172 = vsub.f32 %v158, %v169
    %v173 = vsub.f32 %v159, %v171
    %174 = vst [vmem:[%s3] sm:$0xff] %v172
    %175 = vst [vmem:[%s3 + $0x8] sm:$0xff] %v173
  $region21: #{early_transformer_forward.90} parent=0 // pred_fallthru
    _
  // Predicated region
  $region22: #{early_transformer_forward.90} parent=0 // pred_check
    _
  $region23: #{early_transformer_forward.90} parent=0 // pred_check_branch
    %177 = sbr.rel (0) target = $region25
  $region24: #{early_transformer_forward.90} parent=0 // pred_region
    _
  $region25: #{early_transformer_forward.90} parent=0 // pred_fallthru
    _
  // Predicated region
  $region26: #{early_transformer_forward.90} parent=0 // pred_check
    _
  $region27: #{early_transformer_forward.90} parent=0 // pred_check_branch
    %179 = sbr.rel (0) target = $region29
  $region28: #{early_transformer_forward.90} parent=0 // pred_region
    _
  $region29: #{early_transformer_forward.90} parent=0 // pred_fallthru
    _

// kernel: early_transformer_forward.91
$region0: #{early_transformer_forward.91}
  #allocation0 [shape = 'u32[]', space=smem, size = 0x4, offset = 0x4, fixed_abs, tag = 'smem constant byte address 0x4 - core index']
  #allocation1 [shape = 'u32[144,128]{1,0:T(1,128)}', space=vmem, size = 0x12000, scoped, tag = 'internal scratch']
  #allocation2 [shape = 'f32[8,128]{1,0:T(8,128)}', space=vmem, size = 0x1000, scoped, tag = 'scratch operand']
  %s0 = inlined_call_operand.vmem [shape: bf16[8,128], index: 0, kind: input, shape index: {}]
  %s1 = inlined_call_operand.vmem [shape: bf16[128,128], index: 1, kind: input, shape index: {}]
  %s2 = inlined_call_operand.vmem [shape: f32[1,128], index: 2, kind: input, shape index: {}]
  %s3 = inlined_call_operand.vmem [shape: f32[8,128], index: 3, kind: output, shape index: {}]
  %s4 = sld [smem:[#allocation0]]
  $region30: #{early_transformer_forward.91} parent=0
    _
  %s6 = ssub.s32 1, %s4
  %s7 = scalar_select 0, %s6, %s4
  // Predicated region
  $region2: #{early_transformer_forward.91} parent=0 // pred_check
    _
  $region3: #{early_transformer_forward.91} parent=0 // pred_check_branch
    %9 = sbr.rel (0) target = $region5
  $region4: #{early_transformer_forward.91} parent=0 // pred_region
    _
  $region5: #{early_transformer_forward.91} parent=0 // pred_fallthru
    _
  // Predicated region
  $region6: #{early_transformer_forward.91} parent=0 // pred_check
    _
  $region7: #{early_transformer_forward.91} parent=0 // pred_check_branch
    %11 = sbr.rel (0) target = $region9
  $region8: #{early_transformer_forward.91} parent=0 // pred_region
    _
  $region9: #{early_transformer_forward.91} parent=0 // pred_fallthru
    _
  // Predicated region
  $region10: #{early_transformer_forward.91} parent=0 // pred_check
    _
  $region11: #{early_transformer_forward.91} parent=0 // pred_check_branch
    %13 = sbr.rel (0) target = $region13
  $region12: #{early_transformer_forward.91} parent=0 // pred_region
    _
  $region13: #{early_transformer_forward.91} parent=0 // pred_fallthru
    _
  %p15 = scmp.eq.s32.totalorder 0, 0
  // Predicated region
  $region14: #{early_transformer_forward.91} parent=0 // pred_check
    %p16 = pneg %p15
  $region15: #{early_transformer_forward.91} parent=0 // pred_check_branch
    %18 = sbr.rel (%p16) target = $region17
  $region16: #{early_transformer_forward.91} parent=0 // pred_region
    %19 = vst [vmem:[#allocation2] sm:$0xff] 0.0
  $region17: #{early_transformer_forward.91} parent=0 // pred_fallthru
    _
  %v20 = vld [vmem:[#allocation2] sm:$0xff]
  %v21 = vld [vmem:[%s0] sm:$0xf]
  %v22 = vld [vmem:[%s1] sm:$0xf]
  %v23 = vld [vmem:[%s1 + $0x4] sm:$0xf]
  %v24 = vld [vmem:[%s1 + $0x8] sm:$0xf]
  %v25 = vld [vmem:[%s1 + $0xc] sm:$0xf]
  %v26 = vld [vmem:[%s1 + $0x10] sm:$0xf]
  %v27 = vld [vmem:[%s1 + $0x14] sm:$0xf]
  %v28 = vld [vmem:[%s1 + $0x18] sm:$0xf]
  %v29 = vld [vmem:[%s1 + $0x1c] sm:$0xf]
  %v30 = vld [vmem:[%s1 + $0x20] sm:$0xf]
  %v31 = vld [vmem:[%s1 + $0x24] sm:$0xf]
  %v32 = vld [vmem:[%s1 + $0x28] sm:$0xf]
  %v33 = vld [vmem:[%s1 + $0x2c] sm:$0xf]
  %v34 = vld [vmem:[%s1 + $0x30] sm:$0xf]
  %v35 = vld [vmem:[%s1 + $0x34] sm:$0xf]
  %v36 = vld [vmem:[%s1 + $0x38] sm:$0xf]
  %v37 = vld [vmem:[%s1 + $0x3c] sm:$0xf]
  %v54 = vunpack.c.l.b16 %v22
  %v55 = vunpack.c.l.b16 %v23
  %v56 = vunpack.c.l.b16 %v24
  %v57 = vunpack.c.l.b16 %v25
  %v58 = vunpack.c.l.b16 %v26
  %v59 = vunpack.c.l.b16 %v27
  %v60 = vunpack.c.l.b16 %v28
  %v61 = vunpack.c.l.b16 %v29
  %v62 = vunpack.c.l.b16 %v30
  %v63 = vunpack.c.l.b16 %v31
  %v64 = vunpack.c.l.b16 %v32
  %v65 = vunpack.c.l.b16 %v33
  %v66 = vunpack.c.l.b16 %v34
  %v67 = vunpack.c.l.b16 %v35
  %v68 = vunpack.c.l.b16 %v36
  %v69 = vunpack.c.l.b16 %v37
  %v70 = vpack.c.b16 %v55, %v54
  %v71 = vpack.c.b16 %v57, %v56
  %v72 = vpack.c.b16 %v59, %v58
  %v73 = vpack.c.b16 %v61, %v60
  %v74 = vpack.c.b16 %v63, %v62
  %v75 = vpack.c.b16 %v65, %v64
  %v76 = vpack.c.b16 %v67, %v66
  %v77 = vpack.c.b16 %v69, %v68
  %86 = vmatprep.subr.bf16.mxu0 0
  %87 = vmatpush1.bf16.msra.mxu0 %v77
  %88 = vmatprep.subr.bf16.mxu0 0
  %89 = vmatpush1.bf16.msra.mxu0 %v76
  %90 = vmatprep.subr.bf16.mxu0 0
  %91 = vmatpush1.bf16.msra.mxu0 %v75
  %92 = vmatprep.subr.bf16.mxu0 0
  %93 = vmatpush1.bf16.msra.mxu0 %v74
  %94 = vmatprep.subr.bf16.mxu0 0
  %95 = vmatpush1.bf16.msra.mxu0 %v73
  %96 = vmatprep.subr.bf16.mxu0 0
  %97 = vmatpush1.bf16.msra.mxu0 %v72
  %98 = vmatprep.subr.bf16.mxu0 0
  %99 = vmatpush1.bf16.msra.mxu0 %v71
  %100 = vmatprep.subr.bf16.mxu0 0
  %101 = vmatpush1.bf16.msra.mxu0 %v70
  %102 = vmatprep.subr.bf16.mxu0 0
  %103 = vmatpush2.bf16.msra.mxu0 0
  %104 = vmatprep.subr.bf16.mxu0 0
  %105 = vmatpush2.bf16.msra.mxu0 0
  %106 = vmatprep.subr.bf16.mxu0 0
  %107 = vmatpush2.bf16.msra.mxu0 0
  %108 = vmatprep.subr.bf16.mxu0 0
  %109 = vmatpush2.bf16.msra.mxu0 0
  %110 = vmatprep.subr.bf16.mxu0 0
  %111 = vmatpush2.bf16.msra.mxu0 0
  %112 = vmatprep.subr.bf16.mxu0 0
  %113 = vmatpush2.bf16.msra.mxu0 0
  %114 = vmatprep.subr.bf16.mxu0 0
  %115 = vmatpush2.bf16.msra.mxu0 0
  %116 = vmatprep.subr.bf16.mxu0 0
  %117 = vmatpush2.bf16.msra.mxu0 0
  %118 = vmatprep.mubr.bf16.mxu0 0
  %119 = vmatmul.mubr.bf16.gmra.mxu0 %v21
  %v120 = vpop.f32.mrf.mxu0
  %v121 = vadd.f32 0.0, %v120
  %v122 = vpop.f32.mrf.mxu0
  %v123 = vpop.f32.mrf.mxu0
  %v124 = vpop.f32.mrf.mxu0
  %125 = vdwg.mxu0
  %v126 = vadd.f32 %v20, %v121
  %127 = vst [vmem:[#allocation2] sm:$0xff] %v126
  // Predicated region
  $region18: #{early_transformer_forward.91} parent=0 // pred_check
    %p128 = pneg %p15
  $region19: #{early_transformer_forward.91} parent=0 // pred_check_branch
    %130 = sbr.rel (%p128) target = $region21
  $region20: #{early_transformer_forward.91} parent=0 // pred_region
    %v131 = vld [vmem:[#allocation2] sm:$0xff]
    %v132 = vld [vmem:[%s2] sm:$0x1]
    %v134 = vlaneseq
    %v135 = vshrl.u32 %v134, 7
    %v136 = vsub.s32 0, %v135
    %v137 = vrot.slane %v132, %v136
    %v139 = vadd.f32 %v131, %v137
    %140 = vmax.xlane.f32.xlu0 %v139
    %v141 = vpop.xlane.xlu0 %140
    %v142 = vsub.f32 %v139, %v141
    %v143 = vmul.f32 %v142, 1.442695
    %v144 = vpow.pop %v143
    %145 = vadd.xlane.f32.xlu0 %v144
    %v146 = vpop.xlane.xlu0 %145
    %v147 = vlog2.pop %v146
    %v148 = vmul.f32 %v147, 0.6931472
    %v149 = vsub.f32 %v142, %v148
    %150 = vst [vmem:[%s3] sm:$0xff] %v149
  $region21: #{early_transformer_forward.91} parent=0 // pred_fallthru
    _
  // Predicated region
  $region22: #{early_transformer_forward.91} parent=0 // pred_check
    _
  $region23: #{early_transformer_forward.91} parent=0 // pred_check_branch
    %152 = sbr.rel (0) target = $region25
  $region24: #{early_transformer_forward.91} parent=0 // pred_region
    _
  $region25: #{early_transformer_forward.91} parent=0 // pred_fallthru
    _
  // Predicated region
  $region26: #{early_transformer_forward.91} parent=0 // pred_check
    _
  $region27: #{early_transformer_forward.91} parent=0 // pred_check_branch
    %154 = sbr.rel (0) target = $region29
  $region28: #{early_transformer_forward.91} parent=0 // pred_region
    _
  $region29: #{early_transformer_forward.91} parent=0 // pred_fallthru
    _

</llo_original>
